<compile_context>
chip_gen: v7x
topology: tpu7x:2x2x1
jax: 0.10.0
libtpu: 0.0.40
codegen_flags: <defaults>
</compile_context>

<pallas_src>
import jax
import jax.numpy as jnp
from jax.experimental import pallas as pl
from jax.experimental.pallas import tpu as pltpu


# Rows-per-tile for the im2col matmuls.  256 keeps this small example
# multi-block so the parallel grid axis actually shards across TensorCores;
# for production inputs use ~512-1024 rows on v5e/v6e and ~512 on v7x
# (64 MiB VMEM: 2x double-buffered A tiles + out tiles must fit the scoped
# limit, or raise vmem_limit_bytes).
_TM_MAX = 256


def _round_up(x, m):
    return ((x + m - 1) // m) * m


# ---------------------------------------------------------------------------
# Pallas kernels: im2col matmul with fused BN / ReLU / residual-add epilogues
# ---------------------------------------------------------------------------

def _conv_bn_relu_kernel(a_ref, b_ref, s_ref, c_ref, o_ref):
    acc = jnp.dot(a_ref[...], b_ref[...], preferred_element_type=jnp.float32)
    acc = acc * s_ref[...] + c_ref[...]
    o_ref[...] = jnp.maximum(acc, 0.0).astype(o_ref.dtype)


def _conv_bn_kernel(a_ref, b_ref, s_ref, c_ref, o_ref):
    acc = jnp.dot(a_ref[...], b_ref[...], preferred_element_type=jnp.float32)
    o_ref[...] = (acc * s_ref[...] + c_ref[...]).astype(o_ref.dtype)


def _conv_bn_add_relu_kernel(a_ref, b_ref, s_ref, c_ref, id_ref, o_ref):
    # residual add + ReLU fused into the conv epilogue
    acc = jnp.dot(a_ref[...], b_ref[...], preferred_element_type=jnp.float32)
    acc = acc * s_ref[...] + c_ref[...] + id_ref[...].astype(jnp.float32)
    o_ref[...] = jnp.maximum(acc, 0.0).astype(o_ref.dtype)


def _matmul_bn_epilogue(a, b, scale, bias, identity=None, relu=True):
    """(M,K)@(K,N) * scale + bias [+ identity] [ReLU]; M-tiled parallel grid."""
    M, K = a.shape
    N = b.shape[1]

    # Pad rows to a multiple of 8 (sublane) / tile size; slice back afterwards.
    m_pad = _round_up(M, 8)
    tm = m_pad if m_pad <= _TM_MAX else _TM_MAX
    m_pad = _round_up(M, tm)
    if m_pad != M:
        a = jnp.pad(a, ((0, m_pad - M), (0, 0)))
        if identity is not None:
            identity = jnp.pad(identity, ((0, m_pad - M), (0, 0)))

    a_spec = pl.BlockSpec((tm, K), lambda i: (i, 0))
    b_spec = pl.BlockSpec((K, N), lambda i: (0, 0))
    v_spec = pl.BlockSpec((1, N), lambda i: (0, 0))
    o_spec = pl.BlockSpec((tm, N), lambda i: (i, 0))

    if identity is not None:
        kernel = _conv_bn_add_relu_kernel
        in_specs = [a_spec, b_spec, v_spec, v_spec,
                    pl.BlockSpec((tm, N), lambda i: (i, 0))]
        args = (a, b, scale, bias, identity)
    else:
        kernel = _conv_bn_relu_kernel if relu else _conv_bn_kernel
        in_specs = [a_spec, b_spec, v_spec, v_spec]
        args = (a, b, scale, bias)

    out = pl.pallas_call(
        kernel,
        out_shape=jax.ShapeDtypeStruct((m_pad, N), jnp.bfloat16),
        grid=(m_pad // tm,),
        in_specs=in_specs,
        out_specs=o_spec,
        compiler_params=pltpu.CompilerParams(
            dimension_semantics=("parallel",)),
    )(*args)
    return out[:M] if m_pad != M else out


# ---------------------------------------------------------------------------
# JAX glue: im2col, pooling, layer composition
# ---------------------------------------------------------------------------

def _im2col(x_nhwc, k, stride, pad):
    # TODO(synk): for production channel widths, accumulate over the k*k taps
    # inside the kernel (grid axis + VMEM accumulator) instead of the k*k-
    # expanded im2col copy through HBM.
    N, H, W, C = x_nhwc.shape
    xp = jnp.pad(x_nhwc, ((0, 0), (pad, pad), (pad, pad), (0, 0)))
    Ho = (H + 2 * pad - k) // stride + 1
    Wo = (W + 2 * pad - k) // stride + 1
    cols = []
    for i in range(k):
        for j in range(k):
            cols.append(xp[:, i:i + stride * Ho:stride, j:j + stride * Wo:stride, :])
    cols = jnp.concatenate(cols, axis=-1)       # (N, Ho, Wo, k*k*C)
    return cols.reshape(N * Ho * Wo, k * k * C), Ho, Wo


def _conv_bn(x_nhwc, w_mat, scale, bias, k, stride, pad, relu=True, identity=None):
    N = x_nhwc.shape[0]
    a, Ho, Wo = _im2col(x_nhwc, k, stride, pad)
    cout = w_mat.shape[1]
    id_flat = None
    if identity is not None:
        id_flat = identity.reshape(N * Ho * Wo, cout)
    out = _matmul_bn_epilogue(a, w_mat, scale, bias, identity=id_flat, relu=relu)
    return out.reshape(N, Ho, Wo, cout)


def _maxpool_3x3_s2(x_nhwc):
    # Running max over the 9 taps; XLA fuses this in place (no 9x patch stack).
    N, H, W, C = x_nhwc.shape
    k, stride, pad = 3, 2, 1
    xp = jnp.pad(x_nhwc, ((0, 0), (pad, pad), (pad, pad), (0, 0)),
                 constant_values=-jnp.inf)
    Ho = (H + 2 * pad - k) // stride + 1
    Wo = (W + 2 * pad - k) // stride + 1
    out = None
    for i in range(k):
        for j in range(k):
            tap = xp[:, i:i + stride * Ho:stride, j:j + stride * Wo:stride, :]
            out = tap if out is None else jnp.maximum(out, tap)
    return out


def _basic_block(x_nhwc, p, stride):
    out = _conv_bn(x_nhwc, p["w1"], p["s1"], p["b1"], k=3, stride=stride, pad=1,
                   relu=True)
    if "wd" in p:
        identity = _conv_bn(x_nhwc, p["wd"], p["sd"], p["bd"], k=1, stride=stride,
                            pad=0, relu=False)
    else:
        identity = x_nhwc
    # second conv: BN + residual add + ReLU fused into the matmul epilogue
    out = _conv_bn(out, p["w2"], p["s2"], p["b2"], k=3, stride=1, pad=1,
                   relu=True, identity=identity)
    return out


def resnet_features(x_nchw, params):
    """Equivalent of Resnet.forward: run the stripped ResNet trunk."""
    x = jnp.transpose(x_nchw, (0, 2, 3, 1)).astype(jnp.bfloat16)   # NCHW -> NHWC
    x = _conv_bn(x, params["conv1_w"], params["bn1_s"], params["bn1_b"],
                 k=7, stride=2, pad=3, relu=True)
    x = _maxpool_3x3_s2(x)
    for layer_idx, layer in enumerate(params["layers"]):
        first_stride = 1 if layer_idx == 0 else 2
        for blk_idx, blk in enumerate(layer):
            x = _basic_block(x, blk, stride=first_stride if blk_idx == 0 else 1)
    # NHWC -> NCHW, back to f32 to match the PyTorch reference interface
    return jnp.transpose(x, (0, 3, 1, 2)).astype(jnp.float32)


# ---------------------------------------------------------------------------
# Deterministic parameter construction (synthetic weights)
# ---------------------------------------------------------------------------

def _conv_weight(key, cin, cout, k):
    w = jax.random.normal(key, (cout, cin, k, k), jnp.float32)
    w = w * (1.0 / jnp.sqrt(float(cin * k * k)))
    # OIHW -> (kh*kw*cin, cout) to match the im2col tap ordering above.
    w = jnp.transpose(w, (2, 3, 1, 0)).reshape(k * k * cin, cout)
    return w.astype(jnp.bfloat16)               # bf16 MXU operands


def _bn_affine(key, c, eps=1e-5):
    k1, k2, k3, k4 = jax.random.split(key, 4)
    gamma = 1.0 + 0.1 * jax.random.normal(k1, (c,), jnp.float32)
    beta = 0.1 * jax.random.normal(k2, (c,), jnp.float32)
    mean = 0.1 * jax.random.normal(k3, (c,), jnp.float32)
    var = 1.0 + 0.1 * jnp.abs(jax.random.normal(k4, (c,), jnp.float32))
    scale = gamma / jnp.sqrt(var + eps)
    bias = beta - mean * scale
    return scale.reshape(1, c), bias.reshape(1, c)   # keep epilogue in f32


def make_params(key, base_width=8):
    keys = iter(jax.random.split(key, 128))
    params = {"conv1_w": _conv_weight(next(keys), 3, base_width, 7)}
    params["bn1_s"], params["bn1_b"] = _bn_affine(next(keys), base_width)

    widths = [base_width, 2 * base_width, 4 * base_width, 8 * base_width]
    layers = []
    cin = base_width
    for layer_idx, cout in enumerate(widths):
        blocks = []
        for blk_idx in range(2):                 # ResNet-18: 2 BasicBlocks per layer
            stride = 2 if (layer_idx > 0 and blk_idx == 0) else 1
            bcin = cin if blk_idx == 0 else cout
            blk = {"w1": _conv_weight(next(keys), bcin, cout, 3)}
            blk["s1"], blk["b1"] = _bn_affine(next(keys), cout)
            blk["w2"] = _conv_weight(next(keys), cout, cout, 3)
            blk["s2"], blk["b2"] = _bn_affine(next(keys), cout)
            if stride != 1 or bcin != cout:
                blk["wd"] = _conv_weight(next(keys), bcin, cout, 1)
                blk["sd"], blk["bd"] = _bn_affine(next(keys), cout)
            blocks.append(blk)
        layers.append(blocks)
        cin = cout
    params["layers"] = layers
    return params


# ---------------------------------------------------------------------------
if __name__ == "__main__":
    key = jax.random.PRNGKey(0)
    k_param, k_input = jax.random.split(key)

    params = make_params(k_param, base_width=8)
    # small NCHW input consistent with a ResNet trunk (3 input channels)
    x = jax.random.normal(k_input, (2, 3, 32, 32), jnp.float32)

    fwd = jax.jit(resnet_features)
    out = fwd(x, params)
    jax.block_until_ready(out)

    # stripped ResNet-18 trunk on 32x32 input -> (2, 64, 1, 1) feature map
    assert out.shape == (2, 64, 1, 1), out.shape
    assert out.dtype == jnp.float32, out.dtype
    print("KERNEL_OK")
</pallas_src>

<mosaic_0001>
module attributes {stable_mosaic.version = 11 : i64} {
  func.func @_conv_bn_relu_kernel(%arg0: i32, %arg1: memref<256x147xbf16, #tpu.memory_space<vmem>>, %arg2: memref<147x8xbf16, #tpu.memory_space<vmem>>, %arg3: memref<1x8xf32, #tpu.memory_space<vmem>>, %arg4: memref<1x8xf32, #tpu.memory_space<vmem>>, %arg5: memref<256x8xbf16, #tpu.memory_space<vmem>>) attributes {dimension_semantics = [#tpu.dimension_semantics<parallel>], iteration_bounds = array<i64: 2>, scalar_prefetch = 0 : i64, scratch_operands = 0 : i64, tpu.core_type = #tpu.core_type<tc>, window_params = [{transform_indices = @transform_0, window_bounds = array<i64: 256, 147>}, {pipeline_mode = #tpu.pipeline_mode<synchronous>, transform_indices = @transform_1, window_bounds = array<i64: 147, 8>}, {pipeline_mode = #tpu.pipeline_mode<synchronous>, transform_indices = @transform_2, window_bounds = array<i64: 1, 8>}, {pipeline_mode = #tpu.pipeline_mode<synchronous>, transform_indices = @transform_3, window_bounds = array<i64: 1, 8>}, {transform_indices = @transform_4, window_bounds = array<i64: 256, 8>}]} {
    %c0 = arith.constant 0 : index
    %c0_0 = arith.constant 0 : index
    %0 = vector.load %arg1[%c0, %c0_0] : memref<256x147xbf16, #tpu.memory_space<vmem>>, vector<256x147xbf16>
    %c0_1 = arith.constant 0 : index
    %c0_2 = arith.constant 0 : index
    %1 = vector.load %arg2[%c0_1, %c0_2] : memref<147x8xbf16, #tpu.memory_space<vmem>>, vector<147x8xbf16>
    %cst = arith.constant dense<0.000000e+00> : vector<256x8xf32>
    %2 = tpu.matmul %0, %1, %cst {dimension_numbers = #tpu.dot_dimension_numbers<[1], [0], [0], [1], [0, 0, 1, 1], [], []>} : vector<256x147xbf16>, vector<147x8xbf16>, vector<256x8xf32> -> vector<256x8xf32>
    %c0_3 = arith.constant 0 : index
    %c0_4 = arith.constant 0 : index
    %3 = vector.load %arg3[%c0_3, %c0_4] : memref<1x8xf32, #tpu.memory_space<vmem>>, vector<1x8xf32>
    %4 = vector.broadcast %3 : vector<1x8xf32> to vector<256x8xf32>
    %5 = arith.mulf %2, %4 : vector<256x8xf32>
    %c0_5 = arith.constant 0 : index
    %c0_6 = arith.constant 0 : index
    %6 = vector.load %arg4[%c0_5, %c0_6] : memref<1x8xf32, #tpu.memory_space<vmem>>, vector<1x8xf32>
    %7 = vector.broadcast %6 : vector<1x8xf32> to vector<256x8xf32>
    %8 = arith.addf %5, %7 : vector<256x8xf32>
    %cst_7 = arith.constant 0.000000e+00 : f32
    %9 = vector.broadcast %cst_7 : f32 to vector<256x8xf32>
    %10 = arith.maximumf %8, %9 : vector<256x8xf32>
    %11 = arith.truncf %10 : vector<256x8xf32> to vector<256x8xbf16>
    %c0_8 = arith.constant 0 : index
    %c0_9 = arith.constant 0 : index
    %12 = vector.load %arg5[%c0_8, %c0_9] : memref<256x8xbf16, #tpu.memory_space<vmem>>, vector<256x8xbf16>
    tpu.vector_store %arg5[%c0_8, %c0_9], %11 {strides = array<i32>} : memref<256x8xbf16, #tpu.memory_space<vmem>>, vector<256x8xbf16>,
    return
  }
  func.func @transform_0(%arg0: i32) -> (i32, i32) {
    %c0_i32 = arith.constant 0 : i32
    %c0_i32_0 = arith.constant 0 : i32
    return %arg0, %c0_i32 : i32, i32
  }
  func.func @transform_1(%arg0: i32) -> (i32, i32) {
    %c0_i32 = arith.constant 0 : i32
    %c0_i32_0 = arith.constant 0 : i32
    %c0_i32_1 = arith.constant 0 : i32
    return %c0_i32, %c0_i32_0 : i32, i32
  }
  func.func @transform_2(%arg0: i32) -> (i32, i32) {
    %c0_i32 = arith.constant 0 : i32
    %c0_i32_0 = arith.constant 0 : i32
    %c0_i32_1 = arith.constant 0 : i32
    return %c0_i32, %c0_i32_0 : i32, i32
  }
  func.func @transform_3(%arg0: i32) -> (i32, i32) {
    %c0_i32 = arith.constant 0 : i32
    %c0_i32_0 = arith.constant 0 : i32
    %c0_i32_1 = arith.constant 0 : i32
    return %c0_i32, %c0_i32_0 : i32, i32
  }
  func.func @transform_4(%arg0: i32) -> (i32, i32) {
    %c0_i32 = arith.constant 0 : i32
    %c0_i32_0 = arith.constant 0 : i32
    return %arg0, %c0_i32 : i32, i32
  }
}

module attributes {stable_mosaic.version = 11 : i64} {
  func.func @_conv_bn_relu_kernel(%arg0: i32, %arg1: memref<128x72xbf16, #tpu.memory_space<vmem>>, %arg2: memref<72x8xbf16, #tpu.memory_space<vmem>>, %arg3: memref<1x8xf32, #tpu.memory_space<vmem>>, %arg4: memref<1x8xf32, #tpu.memory_space<vmem>>, %arg5: memref<128x8xbf16, #tpu.memory_space<vmem>>) attributes {dimension_semantics = [#tpu.dimension_semantics<parallel>], iteration_bounds = array<i64: 1>, scalar_prefetch = 0 : i64, scratch_operands = 0 : i64, tpu.core_type = #tpu.core_type<tc>, window_params = [{transform_indices = @transform_0, window_bounds = array<i64: 128, 72>}, {pipeline_mode = #tpu.pipeline_mode<synchronous>, transform_indices = @transform_1, window_bounds = array<i64: 72, 8>}, {pipeline_mode = #tpu.pipeline_mode<synchronous>, transform_indices = @transform_2, window_bounds = array<i64: 1, 8>}, {pipeline_mode = #tpu.pipeline_mode<synchronous>, transform_indices = @transform_3, window_bounds = array<i64: 1, 8>}, {transform_indices = @transform_4, window_bounds = array<i64: 128, 8>}]} {
    %c0 = arith.constant 0 : index
    %c0_0 = arith.constant 0 : index
    %0 = vector.load %arg1[%c0, %c0_0] : memref<128x72xbf16, #tpu.memory_space<vmem>>, vector<128x72xbf16>
    %c0_1 = arith.constant 0 : index
    %c0_2 = arith.constant 0 : index
    %1 = vector.load %arg2[%c0_1, %c0_2] : memref<72x8xbf16, #tpu.memory_space<vmem>>, vector<72x8xbf16>
    %cst = arith.constant dense<0.000000e+00> : vector<128x8xf32>
    %2 = tpu.matmul %0, %1, %cst {dimension_numbers = #tpu.dot_dimension_numbers<[1], [0], [0], [1], [0, 0, 1, 1], [], []>} : vector<128x72xbf16>, vector<72x8xbf16>, vector<128x8xf32> -> vector<128x8xf32>
    %c0_3 = arith.constant 0 : index
    %c0_4 = arith.constant 0 : index
    %3 = vector.load %arg3[%c0_3, %c0_4] : memref<1x8xf32, #tpu.memory_space<vmem>>, vector<1x8xf32>
    %4 = vector.broadcast %3 : vector<1x8xf32> to vector<128x8xf32>
    %5 = arith.mulf %2, %4 : vector<128x8xf32>
    %c0_5 = arith.constant 0 : index
    %c0_6 = arith.constant 0 : index
    %6 = vector.load %arg4[%c0_5, %c0_6] : memref<1x8xf32, #tpu.memory_space<vmem>>, vector<1x8xf32>
    %7 = vector.broadcast %6 : vector<1x8xf32> to vector<128x8xf32>
    %8 = arith.addf %5, %7 : vector<128x8xf32>
    %cst_7 = arith.constant 0.000000e+00 : f32
    %9 = vector.broadcast %cst_7 : f32 to vector<128x8xf32>
    %10 = arith.maximumf %8, %9 : vector<128x8xf32>
    %11 = arith.truncf %10 : vector<128x8xf32> to vector<128x8xbf16>
    %c0_8 = arith.constant 0 : index
    %c0_9 = arith.constant 0 : index
    %12 = vector.load %arg5[%c0_8, %c0_9] : memref<128x8xbf16, #tpu.memory_space<vmem>>, vector<128x8xbf16>
    tpu.vector_store %arg5[%c0_8, %c0_9], %11 {strides = array<i32>} : memref<128x8xbf16, #tpu.memory_space<vmem>>, vector<128x8xbf16>,
    return
  }
  func.func @transform_0(%arg0: i32) -> (i32, i32) {
    %c0_i32 = arith.constant 0 : i32
    %c0_i32_0 = arith.constant 0 : i32
    return %arg0, %c0_i32 : i32, i32
  }
  func.func @transform_1(%arg0: i32) -> (i32, i32) {
    %c0_i32 = arith.constant 0 : i32
    %c0_i32_0 = arith.constant 0 : i32
    %c0_i32_1 = arith.constant 0 : i32
    return %c0_i32, %c0_i32_0 : i32, i32
  }
  func.func @transform_2(%arg0: i32) -> (i32, i32) {
    %c0_i32 = arith.constant 0 : i32
    %c0_i32_0 = arith.constant 0 : i32
    %c0_i32_1 = arith.constant 0 : i32
    return %c0_i32, %c0_i32_0 : i32, i32
  }
  func.func @transform_3(%arg0: i32) -> (i32, i32) {
    %c0_i32 = arith.constant 0 : i32
    %c0_i32_0 = arith.constant 0 : i32
    %c0_i32_1 = arith.constant 0 : i32
    return %c0_i32, %c0_i32_0 : i32, i32
  }
  func.func @transform_4(%arg0: i32) -> (i32, i32) {
    %c0_i32 = arith.constant 0 : i32
    %c0_i32_0 = arith.constant 0 : i32
    return %arg0, %c0_i32 : i32, i32
  }
}

module attributes {stable_mosaic.version = 11 : i64} {
  func.func @_conv_bn_add_relu_kernel(%arg0: i32, %arg1: memref<128x72xbf16, #tpu.memory_space<vmem>>, %arg2: memref<72x8xbf16, #tpu.memory_space<vmem>>, %arg3: memref<1x8xf32, #tpu.memory_space<vmem>>, %arg4: memref<1x8xf32, #tpu.memory_space<vmem>>, %arg5: memref<128x8xbf16, #tpu.memory_space<vmem>>, %arg6: memref<128x8xbf16, #tpu.memory_space<vmem>>) attributes {dimension_semantics = [#tpu.dimension_semantics<parallel>], iteration_bounds = array<i64: 1>, scalar_prefetch = 0 : i64, scratch_operands = 0 : i64, tpu.core_type = #tpu.core_type<tc>, window_params = [{transform_indices = @transform_0, window_bounds = array<i64: 128, 72>}, {pipeline_mode = #tpu.pipeline_mode<synchronous>, transform_indices = @transform_1, window_bounds = array<i64: 72, 8>}, {pipeline_mode = #tpu.pipeline_mode<synchronous>, transform_indices = @transform_2, window_bounds = array<i64: 1, 8>}, {pipeline_mode = #tpu.pipeline_mode<synchronous>, transform_indices = @transform_3, window_bounds = array<i64: 1, 8>}, {transform_indices = @transform_4, window_bounds = array<i64: 128, 8>}, {transform_indices = @transform_5, window_bounds = array<i64: 128, 8>}]} {
    %c0 = arith.constant 0 : index
    %c0_0 = arith.constant 0 : index
    %0 = vector.load %arg1[%c0, %c0_0] : memref<128x72xbf16, #tpu.memory_space<vmem>>, vector<128x72xbf16>
    %c0_1 = arith.constant 0 : index
    %c0_2 = arith.constant 0 : index
    %1 = vector.load %arg2[%c0_1, %c0_2] : memref<72x8xbf16, #tpu.memory_space<vmem>>, vector<72x8xbf16>
    %cst = arith.constant dense<0.000000e+00> : vector<128x8xf32>
    %2 = tpu.matmul %0, %1, %cst {dimension_numbers = #tpu.dot_dimension_numbers<[1], [0], [0], [1], [0, 0, 1, 1], [], []>} : vector<128x72xbf16>, vector<72x8xbf16>, vector<128x8xf32> -> vector<128x8xf32>
    %c0_3 = arith.constant 0 : index
    %c0_4 = arith.constant 0 : index
    %3 = vector.load %arg3[%c0_3, %c0_4] : memref<1x8xf32, #tpu.memory_space<vmem>>, vector<1x8xf32>
    %4 = vector.broadcast %3 : vector<1x8xf32> to vector<128x8xf32>
    %5 = arith.mulf %2, %4 : vector<128x8xf32>
    %c0_5 = arith.constant 0 : index
    %c0_6 = arith.constant 0 : index
    %6 = vector.load %arg4[%c0_5, %c0_6] : memref<1x8xf32, #tpu.memory_space<vmem>>, vector<1x8xf32>
    %7 = vector.broadcast %6 : vector<1x8xf32> to vector<128x8xf32>
    %8 = arith.addf %5, %7 : vector<128x8xf32>
    %c0_7 = arith.constant 0 : index
    %c0_8 = arith.constant 0 : index
    %9 = vector.load %arg5[%c0_7, %c0_8] : memref<128x8xbf16, #tpu.memory_space<vmem>>, vector<128x8xbf16>
    %10 = arith.extf %9 : vector<128x8xbf16> to vector<128x8xf32>
    %11 = arith.addf %8, %10 : vector<128x8xf32>
    %cst_9 = arith.constant 0.000000e+00 : f32
    %12 = vector.broadcast %cst_9 : f32 to vector<128x8xf32>
    %13 = arith.maximumf %11, %12 : vector<128x8xf32>
    %14 = arith.truncf %13 : vector<128x8xf32> to vector<128x8xbf16>
    %c0_10 = arith.constant 0 : index
    %c0_11 = arith.constant 0 : index
    %15 = vector.load %arg6[%c0_10, %c0_11] : memref<128x8xbf16, #tpu.memory_space<vmem>>, vector<128x8xbf16>
    tpu.vector_store %arg6[%c0_10, %c0_11], %14 {strides = array<i32>} : memref<128x8xbf16, #tpu.memory_space<vmem>>, vector<128x8xbf16>,
    return
  }
  func.func @transform_0(%arg0: i32) -> (i32, i32) {
    %c0_i32 = arith.constant 0 : i32
    %c0_i32_0 = arith.constant 0 : i32
    return %arg0, %c0_i32 : i32, i32
  }
  func.func @transform_1(%arg0: i32) -> (i32, i32) {
    %c0_i32 = arith.constant 0 : i32
    %c0_i32_0 = arith.constant 0 : i32
    %c0_i32_1 = arith.constant 0 : i32
    return %c0_i32, %c0_i32_0 : i32, i32
  }
  func.func @transform_2(%arg0: i32) -> (i32, i32) {
    %c0_i32 = arith.constant 0 : i32
    %c0_i32_0 = arith.constant 0 : i32
    %c0_i32_1 = arith.constant 0 : i32
    return %c0_i32, %c0_i32_0 : i32, i32
  }
  func.func @transform_3(%arg0: i32) -> (i32, i32) {
    %c0_i32 = arith.constant 0 : i32
    %c0_i32_0 = arith.constant 0 : i32
    %c0_i32_1 = arith.constant 0 : i32
    return %c0_i32, %c0_i32_0 : i32, i32
  }
  func.func @transform_4(%arg0: i32) -> (i32, i32) {
    %c0_i32 = arith.constant 0 : i32
    %c0_i32_0 = arith.constant 0 : i32
    return %arg0, %c0_i32 : i32, i32
  }
  func.func @transform_5(%arg0: i32) -> (i32, i32) {
    %c0_i32 = arith.constant 0 : i32
    %c0_i32_0 = arith.constant 0 : i32
    return %arg0, %c0_i32 : i32, i32
  }
}

module attributes {stable_mosaic.version = 11 : i64} {
  func.func @_conv_bn_relu_kernel(%arg0: i32, %arg1: memref<32x72xbf16, #tpu.memory_space<vmem>>, %arg2: memref<72x16xbf16, #tpu.memory_space<vmem>>, %arg3: memref<1x16xf32, #tpu.memory_space<vmem>>, %arg4: memref<1x16xf32, #tpu.memory_space<vmem>>, %arg5: memref<32x16xbf16, #tpu.memory_space<vmem>>) attributes {dimension_semantics = [#tpu.dimension_semantics<parallel>], iteration_bounds = array<i64: 1>, scalar_prefetch = 0 : i64, scratch_operands = 0 : i64, tpu.core_type = #tpu.core_type<tc>, window_params = [{transform_indices = @transform_0, window_bounds = array<i64: 32, 72>}, {pipeline_mode = #tpu.pipeline_mode<synchronous>, transform_indices = @transform_1, window_bounds = array<i64: 72, 16>}, {pipeline_mode = #tpu.pipeline_mode<synchronous>, transform_indices = @transform_2, window_bounds = array<i64: 1, 16>}, {pipeline_mode = #tpu.pipeline_mode<synchronous>, transform_indices = @transform_3, window_bounds = array<i64: 1, 16>}, {transform_indices = @transform_4, window_bounds = array<i64: 32, 16>}]} {
    %c0 = arith.constant 0 : index
    %c0_0 = arith.constant 0 : index
    %0 = vector.load %arg1[%c0, %c0_0] : memref<32x72xbf16, #tpu.memory_space<vmem>>, vector<32x72xbf16>
    %c0_1 = arith.constant 0 : index
    %c0_2 = arith.constant 0 : index
    %1 = vector.load %arg2[%c0_1, %c0_2] : memref<72x16xbf16, #tpu.memory_space<vmem>>, vector<72x16xbf16>
    %cst = arith.constant dense<0.000000e+00> : vector<32x16xf32>
    %2 = tpu.matmul %0, %1, %cst {dimension_numbers = #tpu.dot_dimension_numbers<[1], [0], [0], [1], [0, 0, 1, 1], [], []>} : vector<32x72xbf16>, vector<72x16xbf16>, vector<32x16xf32> -> vector<32x16xf32>
    %c0_3 = arith.constant 0 : index
    %c0_4 = arith.constant 0 : index
    %3 = vector.load %arg3[%c0_3, %c0_4] : memref<1x16xf32, #tpu.memory_space<vmem>>, vector<1x16xf32>
    %4 = vector.broadcast %3 : vector<1x16xf32> to vector<32x16xf32>
    %5 = arith.mulf %2, %4 : vector<32x16xf32>
    %c0_5 = arith.constant 0 : index
    %c0_6 = arith.constant 0 : index
    %6 = vector.load %arg4[%c0_5, %c0_6] : memref<1x16xf32, #tpu.memory_space<vmem>>, vector<1x16xf32>
    %7 = vector.broadcast %6 : vector<1x16xf32> to vector<32x16xf32>
    %8 = arith.addf %5, %7 : vector<32x16xf32>
    %cst_7 = arith.constant 0.000000e+00 : f32
    %9 = vector.broadcast %cst_7 : f32 to vector<32x16xf32>
    %10 = arith.maximumf %8, %9 : vector<32x16xf32>
    %11 = arith.truncf %10 : vector<32x16xf32> to vector<32x16xbf16>
    %c0_8 = arith.constant 0 : index
    %c0_9 = arith.constant 0 : index
    %12 = vector.load %arg5[%c0_8, %c0_9] : memref<32x16xbf16, #tpu.memory_space<vmem>>, vector<32x16xbf16>
    tpu.vector_store %arg5[%c0_8, %c0_9], %11 {strides = array<i32>} : memref<32x16xbf16, #tpu.memory_space<vmem>>, vector<32x16xbf16>,
    return
  }
  func.func @transform_0(%arg0: i32) -> (i32, i32) {
    %c0_i32 = arith.constant 0 : i32
    %c0_i32_0 = arith.constant 0 : i32
    return %arg0, %c0_i32 : i32, i32
  }
  func.func @transform_1(%arg0: i32) -> (i32, i32) {
    %c0_i32 = arith.constant 0 : i32
    %c0_i32_0 = arith.constant 0 : i32
    %c0_i32_1 = arith.constant 0 : i32
    return %c0_i32, %c0_i32_0 : i32, i32
  }
  func.func @transform_2(%arg0: i32) -> (i32, i32) {
    %c0_i32 = arith.constant 0 : i32
    %c0_i32_0 = arith.constant 0 : i32
    %c0_i32_1 = arith.constant 0 : i32
    return %c0_i32, %c0_i32_0 : i32, i32
  }
  func.func @transform_3(%arg0: i32) -> (i32, i32) {
    %c0_i32 = arith.constant 0 : i32
    %c0_i32_0 = arith.constant 0 : i32
    %c0_i32_1 = arith.constant 0 : i32
    return %c0_i32, %c0_i32_0 : i32, i32
  }
  func.func @transform_4(%arg0: i32) -> (i32, i32) {
    %c0_i32 = arith.constant 0 : i32
    %c0_i32_0 = arith.constant 0 : i32
    return %arg0, %c0_i32 : i32, i32
  }
}

module attributes {stable_mosaic.version = 11 : i64} {
  func.func @_conv_bn_kernel(%arg0: i32, %arg1: memref<32x8xbf16, #tpu.memory_space<vmem>>, %arg2: memref<8x16xbf16, #tpu.memory_space<vmem>>, %arg3: memref<1x16xf32, #tpu.memory_space<vmem>>, %arg4: memref<1x16xf32, #tpu.memory_space<vmem>>, %arg5: memref<32x16xbf16, #tpu.memory_space<vmem>>) attributes {dimension_semantics = [#tpu.dimension_semantics<parallel>], iteration_bounds = array<i64: 1>, scalar_prefetch = 0 : i64, scratch_operands = 0 : i64, tpu.core_type = #tpu.core_type<tc>, window_params = [{transform_indices = @transform_0, window_bounds = array<i64: 32, 8>}, {pipeline_mode = #tpu.pipeline_mode<synchronous>, transform_indices = @transform_1, window_bounds = array<i64: 8, 16>}, {pipeline_mode = #tpu.pipeline_mode<synchronous>, transform_indices = @transform_2, window_bounds = array<i64: 1, 16>}, {pipeline_mode = #tpu.pipeline_mode<synchronous>, transform_indices = @transform_3, window_bounds = array<i64: 1, 16>}, {transform_indices = @transform_4, window_bounds = array<i64: 32, 16>}]} {
    %c0 = arith.constant 0 : index
    %c0_0 = arith.constant 0 : index
    %0 = vector.load %arg1[%c0, %c0_0] : memref<32x8xbf16, #tpu.memory_space<vmem>>, vector<32x8xbf16>
    %c0_1 = arith.constant 0 : index
    %c0_2 = arith.constant 0 : index
    %1 = vector.load %arg2[%c0_1, %c0_2] : memref<8x16xbf16, #tpu.memory_space<vmem>>, vector<8x16xbf16>
    %cst = arith.constant dense<0.000000e+00> : vector<32x16xf32>
    %2 = tpu.matmul %0, %1, %cst {dimension_numbers = #tpu.dot_dimension_numbers<[1], [0], [0], [1], [0, 0, 1, 1], [], []>} : vector<32x8xbf16>, vector<8x16xbf16>, vector<32x16xf32> -> vector<32x16xf32>
    %c0_3 = arith.constant 0 : index
    %c0_4 = arith.constant 0 : index
    %3 = vector.load %arg3[%c0_3, %c0_4] : memref<1x16xf32, #tpu.memory_space<vmem>>, vector<1x16xf32>
    %4 = vector.broadcast %3 : vector<1x16xf32> to vector<32x16xf32>
    %5 = arith.mulf %2, %4 : vector<32x16xf32>
    %c0_5 = arith.constant 0 : index
    %c0_6 = arith.constant 0 : index
    %6 = vector.load %arg4[%c0_5, %c0_6] : memref<1x16xf32, #tpu.memory_space<vmem>>, vector<1x16xf32>
    %7 = vector.broadcast %6 : vector<1x16xf32> to vector<32x16xf32>
    %8 = arith.addf %5, %7 : vector<32x16xf32>
    %9 = arith.truncf %8 : vector<32x16xf32> to vector<32x16xbf16>
    %c0_7 = arith.constant 0 : index
    %c0_8 = arith.constant 0 : index
    %10 = vector.load %arg5[%c0_7, %c0_8] : memref<32x16xbf16, #tpu.memory_space<vmem>>, vector<32x16xbf16>
    tpu.vector_store %arg5[%c0_7, %c0_8], %9 {strides = array<i32>} : memref<32x16xbf16, #tpu.memory_space<vmem>>, vector<32x16xbf16>,
    return
  }
  func.func @transform_0(%arg0: i32) -> (i32, i32) {
    %c0_i32 = arith.constant 0 : i32
    %c0_i32_0 = arith.constant 0 : i32
    return %arg0, %c0_i32 : i32, i32
  }
  func.func @transform_1(%arg0: i32) -> (i32, i32) {
    %c0_i32 = arith.constant 0 : i32
    %c0_i32_0 = arith.constant 0 : i32
    %c0_i32_1 = arith.constant 0 : i32
    return %c0_i32, %c0_i32_0 : i32, i32
  }
  func.func @transform_2(%arg0: i32) -> (i32, i32) {
    %c0_i32 = arith.constant 0 : i32
    %c0_i32_0 = arith.constant 0 : i32
    %c0_i32_1 = arith.constant 0 : i32
    return %c0_i32, %c0_i32_0 : i32, i32
  }
  func.func @transform_3(%arg0: i32) -> (i32, i32) {
    %c0_i32 = arith.constant 0 : i32
    %c0_i32_0 = arith.constant 0 : i32
    %c0_i32_1 = arith.constant 0 : i32
    return %c0_i32, %c0_i32_0 : i32, i32
  }
  func.func @transform_4(%arg0: i32) -> (i32, i32) {
    %c0_i32 = arith.constant 0 : i32
    %c0_i32_0 = arith.constant 0 : i32
    return %arg0, %c0_i32 : i32, i32
  }
}

module attributes {stable_mosaic.version = 11 : i64} {
  func.func @_conv_bn_add_relu_kernel(%arg0: i32, %arg1: memref<32x144xbf16, #tpu.memory_space<vmem>>, %arg2: memref<144x16xbf16, #tpu.memory_space<vmem>>, %arg3: memref<1x16xf32, #tpu.memory_space<vmem>>, %arg4: memref<1x16xf32, #tpu.memory_space<vmem>>, %arg5: memref<32x16xbf16, #tpu.memory_space<vmem>>, %arg6: memref<32x16xbf16, #tpu.memory_space<vmem>>) attributes {dimension_semantics = [#tpu.dimension_semantics<parallel>], iteration_bounds = array<i64: 1>, scalar_prefetch = 0 : i64, scratch_operands = 0 : i64, tpu.core_type = #tpu.core_type<tc>, window_params = [{transform_indices = @transform_0, window_bounds = array<i64: 32, 144>}, {pipeline_mode = #tpu.pipeline_mode<synchronous>, transform_indices = @transform_1, window_bounds = array<i64: 144, 16>}, {pipeline_mode = #tpu.pipeline_mode<synchronous>, transform_indices = @transform_2, window_bounds = array<i64: 1, 16>}, {pipeline_mode = #tpu.pipeline_mode<synchronous>, transform_indices = @transform_3, window_bounds = array<i64: 1, 16>}, {transform_indices = @transform_4, window_bounds = array<i64: 32, 16>}, {transform_indices = @transform_5, window_bounds = array<i64: 32, 16>}]} {
    %c0 = arith.constant 0 : index
    %c0_0 = arith.constant 0 : index
    %0 = vector.load %arg1[%c0, %c0_0] : memref<32x144xbf16, #tpu.memory_space<vmem>>, vector<32x144xbf16>
    %c0_1 = arith.constant 0 : index
    %c0_2 = arith.constant 0 : index
    %1 = vector.load %arg2[%c0_1, %c0_2] : memref<144x16xbf16, #tpu.memory_space<vmem>>, vector<144x16xbf16>
    %cst = arith.constant dense<0.000000e+00> : vector<32x16xf32>
    %2 = tpu.matmul %0, %1, %cst {dimension_numbers = #tpu.dot_dimension_numbers<[1], [0], [0], [1], [0, 0, 1, 1], [], []>} : vector<32x144xbf16>, vector<144x16xbf16>, vector<32x16xf32> -> vector<32x16xf32>
    %c0_3 = arith.constant 0 : index
    %c0_4 = arith.constant 0 : index
    %3 = vector.load %arg3[%c0_3, %c0_4] : memref<1x16xf32, #tpu.memory_space<vmem>>, vector<1x16xf32>
    %4 = vector.broadcast %3 : vector<1x16xf32> to vector<32x16xf32>
    %5 = arith.mulf %2, %4 : vector<32x16xf32>
    %c0_5 = arith.constant 0 : index
    %c0_6 = arith.constant 0 : index
    %6 = vector.load %arg4[%c0_5, %c0_6] : memref<1x16xf32, #tpu.memory_space<vmem>>, vector<1x16xf32>
    %7 = vector.broadcast %6 : vector<1x16xf32> to vector<32x16xf32>
    %8 = arith.addf %5, %7 : vector<32x16xf32>
    %c0_7 = arith.constant 0 : index
    %c0_8 = arith.constant 0 : index
    %9 = vector.load %arg5[%c0_7, %c0_8] : memref<32x16xbf16, #tpu.memory_space<vmem>>, vector<32x16xbf16>
    %10 = arith.extf %9 : vector<32x16xbf16> to vector<32x16xf32>
    %11 = arith.addf %8, %10 : vector<32x16xf32>
    %cst_9 = arith.constant 0.000000e+00 : f32
    %12 = vector.broadcast %cst_9 : f32 to vector<32x16xf32>
    %13 = arith.maximumf %11, %12 : vector<32x16xf32>
    %14 = arith.truncf %13 : vector<32x16xf32> to vector<32x16xbf16>
    %c0_10 = arith.constant 0 : index
    %c0_11 = arith.constant 0 : index
    %15 = vector.load %arg6[%c0_10, %c0_11] : memref<32x16xbf16, #tpu.memory_space<vmem>>, vector<32x16xbf16>
    tpu.vector_store %arg6[%c0_10, %c0_11], %14 {strides = array<i32>} : memref<32x16xbf16, #tpu.memory_space<vmem>>, vector<32x16xbf16>,
    return
  }
  func.func @transform_0(%arg0: i32) -> (i32, i32) {
    %c0_i32 = arith.constant 0 : i32
    %c0_i32_0 = arith.constant 0 : i32
    return %arg0, %c0_i32 : i32, i32
  }
  func.func @transform_1(%arg0: i32) -> (i32, i32) {
    %c0_i32 = arith.constant 0 : i32
    %c0_i32_0 = arith.constant 0 : i32
    %c0_i32_1 = arith.constant 0 : i32
    return %c0_i32, %c0_i32_0 : i32, i32
  }
  func.func @transform_2(%arg0: i32) -> (i32, i32) {
    %c0_i32 = arith.constant 0 : i32
    %c0_i32_0 = arith.constant 0 : i32
    %c0_i32_1 = arith.constant 0 : i32
    return %c0_i32, %c0_i32_0 : i32, i32
  }
  func.func @transform_3(%arg0: i32) -> (i32, i32) {
    %c0_i32 = arith.constant 0 : i32
    %c0_i32_0 = arith.constant 0 : i32
    %c0_i32_1 = arith.constant 0 : i32
    return %c0_i32, %c0_i32_0 : i32, i32
  }
  func.func @transform_4(%arg0: i32) -> (i32, i32) {
    %c0_i32 = arith.constant 0 : i32
    %c0_i32_0 = arith.constant 0 : i32
    return %arg0, %c0_i32 : i32, i32
  }
  func.func @transform_5(%arg0: i32) -> (i32, i32) {
    %c0_i32 = arith.constant 0 : i32
    %c0_i32_0 = arith.constant 0 : i32
    return %arg0, %c0_i32 : i32, i32
  }
}

module attributes {stable_mosaic.version = 11 : i64} {
  func.func @_conv_bn_relu_kernel(%arg0: i32, %arg1: memref<32x144xbf16, #tpu.memory_space<vmem>>, %arg2: memref<144x16xbf16, #tpu.memory_space<vmem>>, %arg3: memref<1x16xf32, #tpu.memory_space<vmem>>, %arg4: memref<1x16xf32, #tpu.memory_space<vmem>>, %arg5: memref<32x16xbf16, #tpu.memory_space<vmem>>) attributes {dimension_semantics = [#tpu.dimension_semantics<parallel>], iteration_bounds = array<i64: 1>, scalar_prefetch = 0 : i64, scratch_operands = 0 : i64, tpu.core_type = #tpu.core_type<tc>, window_params = [{transform_indices = @transform_0, window_bounds = array<i64: 32, 144>}, {pipeline_mode = #tpu.pipeline_mode<synchronous>, transform_indices = @transform_1, window_bounds = array<i64: 144, 16>}, {pipeline_mode = #tpu.pipeline_mode<synchronous>, transform_indices = @transform_2, window_bounds = array<i64: 1, 16>}, {pipeline_mode = #tpu.pipeline_mode<synchronous>, transform_indices = @transform_3, window_bounds = array<i64: 1, 16>}, {transform_indices = @transform_4, window_bounds = array<i64: 32, 16>}]} {
    %c0 = arith.constant 0 : index
    %c0_0 = arith.constant 0 : index
    %0 = vector.load %arg1[%c0, %c0_0] : memref<32x144xbf16, #tpu.memory_space<vmem>>, vector<32x144xbf16>
    %c0_1 = arith.constant 0 : index
    %c0_2 = arith.constant 0 : index
    %1 = vector.load %arg2[%c0_1, %c0_2] : memref<144x16xbf16, #tpu.memory_space<vmem>>, vector<144x16xbf16>
    %cst = arith.constant dense<0.000000e+00> : vector<32x16xf32>
    %2 = tpu.matmul %0, %1, %cst {dimension_numbers = #tpu.dot_dimension_numbers<[1], [0], [0], [1], [0, 0, 1, 1], [], []>} : vector<32x144xbf16>, vector<144x16xbf16>, vector<32x16xf32> -> vector<32x16xf32>
    %c0_3 = arith.constant 0 : index
    %c0_4 = arith.constant 0 : index
    %3 = vector.load %arg3[%c0_3, %c0_4] : memref<1x16xf32, #tpu.memory_space<vmem>>, vector<1x16xf32>
    %4 = vector.broadcast %3 : vector<1x16xf32> to vector<32x16xf32>
    %5 = arith.mulf %2, %4 : vector<32x16xf32>
    %c0_5 = arith.constant 0 : index
    %c0_6 = arith.constant 0 : index
    %6 = vector.load %arg4[%c0_5, %c0_6] : memref<1x16xf32, #tpu.memory_space<vmem>>, vector<1x16xf32>
    %7 = vector.broadcast %6 : vector<1x16xf32> to vector<32x16xf32>
    %8 = arith.addf %5, %7 : vector<32x16xf32>
    %cst_7 = arith.constant 0.000000e+00 : f32
    %9 = vector.broadcast %cst_7 : f32 to vector<32x16xf32>
    %10 = arith.maximumf %8, %9 : vector<32x16xf32>
    %11 = arith.truncf %10 : vector<32x16xf32> to vector<32x16xbf16>
    %c0_8 = arith.constant 0 : index
    %c0_9 = arith.constant 0 : index
    %12 = vector.load %arg5[%c0_8, %c0_9] : memref<32x16xbf16, #tpu.memory_space<vmem>>, vector<32x16xbf16>
    tpu.vector_store %arg5[%c0_8, %c0_9], %11 {strides = array<i32>} : memref<32x16xbf16, #tpu.memory_space<vmem>>, vector<32x16xbf16>,
    return
  }
  func.func @transform_0(%arg0: i32) -> (i32, i32) {
    %c0_i32 = arith.constant 0 : i32
    %c0_i32_0 = arith.constant 0 : i32
    return %arg0, %c0_i32 : i32, i32
  }
  func.func @transform_1(%arg0: i32) -> (i32, i32) {
    %c0_i32 = arith.constant 0 : i32
    %c0_i32_0 = arith.constant 0 : i32
    %c0_i32_1 = arith.constant 0 : i32
    return %c0_i32, %c0_i32_0 : i32, i32
  }
  func.func @transform_2(%arg0: i32) -> (i32, i32) {
    %c0_i32 = arith.constant 0 : i32
    %c0_i32_0 = arith.constant 0 : i32
    %c0_i32_1 = arith.constant 0 : i32
    return %c0_i32, %c0_i32_0 : i32, i32
  }
  func.func @transform_3(%arg0: i32) -> (i32, i32) {
    %c0_i32 = arith.constant 0 : i32
    %c0_i32_0 = arith.constant 0 : i32
    %c0_i32_1 = arith.constant 0 : i32
    return %c0_i32, %c0_i32_0 : i32, i32
  }
  func.func @transform_4(%arg0: i32) -> (i32, i32) {
    %c0_i32 = arith.constant 0 : i32
    %c0_i32_0 = arith.constant 0 : i32
    return %arg0, %c0_i32 : i32, i32
  }
}

module attributes {stable_mosaic.version = 11 : i64} {
  func.func @_conv_bn_relu_kernel(%arg0: i32, %arg1: memref<8x144xbf16, #tpu.memory_space<vmem>>, %arg2: memref<144x32xbf16, #tpu.memory_space<vmem>>, %arg3: memref<1x32xf32, #tpu.memory_space<vmem>>, %arg4: memref<1x32xf32, #tpu.memory_space<vmem>>, %arg5: memref<8x32xbf16, #tpu.memory_space<vmem>>) attributes {dimension_semantics = [#tpu.dimension_semantics<parallel>], iteration_bounds = array<i64: 1>, scalar_prefetch = 0 : i64, scratch_operands = 0 : i64, tpu.core_type = #tpu.core_type<tc>, window_params = [{transform_indices = @transform_0, window_bounds = array<i64: 8, 144>}, {pipeline_mode = #tpu.pipeline_mode<synchronous>, transform_indices = @transform_1, window_bounds = array<i64: 144, 32>}, {pipeline_mode = #tpu.pipeline_mode<synchronous>, transform_indices = @transform_2, window_bounds = array<i64: 1, 32>}, {pipeline_mode = #tpu.pipeline_mode<synchronous>, transform_indices = @transform_3, window_bounds = array<i64: 1, 32>}, {transform_indices = @transform_4, window_bounds = array<i64: 8, 32>}]} {
    %c0 = arith.constant 0 : index
    %c0_0 = arith.constant 0 : index
    %0 = vector.load %arg1[%c0, %c0_0] : memref<8x144xbf16, #tpu.memory_space<vmem>>, vector<8x144xbf16>
    %c0_1 = arith.constant 0 : index
    %c0_2 = arith.constant 0 : index
    %1 = vector.load %arg2[%c0_1, %c0_2] : memref<144x32xbf16, #tpu.memory_space<vmem>>, vector<144x32xbf16>
    %cst = arith.constant dense<0.000000e+00> : vector<8x32xf32>
    %2 = tpu.matmul %0, %1, %cst {dimension_numbers = #tpu.dot_dimension_numbers<[1], [0], [0], [1], [0, 0, 1, 1], [], []>} : vector<8x144xbf16>, vector<144x32xbf16>, vector<8x32xf32> -> vector<8x32xf32>
    %c0_3 = arith.constant 0 : index
    %c0_4 = arith.constant 0 : index
    %3 = vector.load %arg3[%c0_3, %c0_4] : memref<1x32xf32, #tpu.memory_space<vmem>>, vector<1x32xf32>
    %4 = vector.broadcast %3 : vector<1x32xf32> to vector<8x32xf32>
    %5 = arith.mulf %2, %4 : vector<8x32xf32>
    %c0_5 = arith.constant 0 : index
    %c0_6 = arith.constant 0 : index
    %6 = vector.load %arg4[%c0_5, %c0_6] : memref<1x32xf32, #tpu.memory_space<vmem>>, vector<1x32xf32>
    %7 = vector.broadcast %6 : vector<1x32xf32> to vector<8x32xf32>
    %8 = arith.addf %5, %7 : vector<8x32xf32>
    %cst_7 = arith.constant 0.000000e+00 : f32
    %9 = vector.broadcast %cst_7 : f32 to vector<8x32xf32>
    %10 = arith.maximumf %8, %9 : vector<8x32xf32>
    %11 = arith.truncf %10 : vector<8x32xf32> to vector<8x32xbf16>
    %c0_8 = arith.constant 0 : index
    %c0_9 = arith.constant 0 : index
    %12 = vector.load %arg5[%c0_8, %c0_9] : memref<8x32xbf16, #tpu.memory_space<vmem>>, vector<8x32xbf16>
    tpu.vector_store %arg5[%c0_8, %c0_9], %11 {strides = array<i32>} : memref<8x32xbf16, #tpu.memory_space<vmem>>, vector<8x32xbf16>,
    return
  }
  func.func @transform_0(%arg0: i32) -> (i32, i32) {
    %c0_i32 = arith.constant 0 : i32
    %c0_i32_0 = arith.constant 0 : i32
    return %arg0, %c0_i32 : i32, i32
  }
  func.func @transform_1(%arg0: i32) -> (i32, i32) {
    %c0_i32 = arith.constant 0 : i32
    %c0_i32_0 = arith.constant 0 : i32
    %c0_i32_1 = arith.constant 0 : i32
    return %c0_i32, %c0_i32_0 : i32, i32
  }
  func.func @transform_2(%arg0: i32) -> (i32, i32) {
    %c0_i32 = arith.constant 0 : i32
    %c0_i32_0 = arith.constant 0 : i32
    %c0_i32_1 = arith.constant 0 : i32
    return %c0_i32, %c0_i32_0 : i32, i32
  }
  func.func @transform_3(%arg0: i32) -> (i32, i32) {
    %c0_i32 = arith.constant 0 : i32
    %c0_i32_0 = arith.constant 0 : i32
    %c0_i32_1 = arith.constant 0 : i32
    return %c0_i32, %c0_i32_0 : i32, i32
  }
  func.func @transform_4(%arg0: i32) -> (i32, i32) {
    %c0_i32 = arith.constant 0 : i32
    %c0_i32_0 = arith.constant 0 : i32
    return %arg0, %c0_i32 : i32, i32
  }
}

module attributes {stable_mosaic.version = 11 : i64} {
  func.func @_conv_bn_kernel(%arg0: i32, %arg1: memref<8x16xbf16, #tpu.memory_space<vmem>>, %arg2: memref<16x32xbf16, #tpu.memory_space<vmem>>, %arg3: memref<1x32xf32, #tpu.memory_space<vmem>>, %arg4: memref<1x32xf32, #tpu.memory_space<vmem>>, %arg5: memref<8x32xbf16, #tpu.memory_space<vmem>>) attributes {dimension_semantics = [#tpu.dimension_semantics<parallel>], iteration_bounds = array<i64: 1>, scalar_prefetch = 0 : i64, scratch_operands = 0 : i64, tpu.core_type = #tpu.core_type<tc>, window_params = [{transform_indices = @transform_0, window_bounds = array<i64: 8, 16>}, {pipeline_mode = #tpu.pipeline_mode<synchronous>, transform_indices = @transform_1, window_bounds = array<i64: 16, 32>}, {pipeline_mode = #tpu.pipeline_mode<synchronous>, transform_indices = @transform_2, window_bounds = array<i64: 1, 32>}, {pipeline_mode = #tpu.pipeline_mode<synchronous>, transform_indices = @transform_3, window_bounds = array<i64: 1, 32>}, {transform_indices = @transform_4, window_bounds = array<i64: 8, 32>}]} {
    %c0 = arith.constant 0 : index
    %c0_0 = arith.constant 0 : index
    %0 = vector.load %arg1[%c0, %c0_0] : memref<8x16xbf16, #tpu.memory_space<vmem>>, vector<8x16xbf16>
    %c0_1 = arith.constant 0 : index
    %c0_2 = arith.constant 0 : index
    %1 = vector.load %arg2[%c0_1, %c0_2] : memref<16x32xbf16, #tpu.memory_space<vmem>>, vector<16x32xbf16>
    %cst = arith.constant dense<0.000000e+00> : vector<8x32xf32>
    %2 = tpu.matmul %0, %1, %cst {dimension_numbers = #tpu.dot_dimension_numbers<[1], [0], [0], [1], [0, 0, 1, 1], [], []>} : vector<8x16xbf16>, vector<16x32xbf16>, vector<8x32xf32> -> vector<8x32xf32>
    %c0_3 = arith.constant 0 : index
    %c0_4 = arith.constant 0 : index
    %3 = vector.load %arg3[%c0_3, %c0_4] : memref<1x32xf32, #tpu.memory_space<vmem>>, vector<1x32xf32>
    %4 = vector.broadcast %3 : vector<1x32xf32> to vector<8x32xf32>
    %5 = arith.mulf %2, %4 : vector<8x32xf32>
    %c0_5 = arith.constant 0 : index
    %c0_6 = arith.constant 0 : index
    %6 = vector.load %arg4[%c0_5, %c0_6] : memref<1x32xf32, #tpu.memory_space<vmem>>, vector<1x32xf32>
    %7 = vector.broadcast %6 : vector<1x32xf32> to vector<8x32xf32>
    %8 = arith.addf %5, %7 : vector<8x32xf32>
    %9 = arith.truncf %8 : vector<8x32xf32> to vector<8x32xbf16>
    %c0_7 = arith.constant 0 : index
    %c0_8 = arith.constant 0 : index
    %10 = vector.load %arg5[%c0_7, %c0_8] : memref<8x32xbf16, #tpu.memory_space<vmem>>, vector<8x32xbf16>
    tpu.vector_store %arg5[%c0_7, %c0_8], %9 {strides = array<i32>} : memref<8x32xbf16, #tpu.memory_space<vmem>>, vector<8x32xbf16>,
    return
  }
  func.func @transform_0(%arg0: i32) -> (i32, i32) {
    %c0_i32 = arith.constant 0 : i32
    %c0_i32_0 = arith.constant 0 : i32
    return %arg0, %c0_i32 : i32, i32
  }
  func.func @transform_1(%arg0: i32) -> (i32, i32) {
    %c0_i32 = arith.constant 0 : i32
    %c0_i32_0 = arith.constant 0 : i32
    %c0_i32_1 = arith.constant 0 : i32
    return %c0_i32, %c0_i32_0 : i32, i32
  }
  func.func @transform_2(%arg0: i32) -> (i32, i32) {
    %c0_i32 = arith.constant 0 : i32
    %c0_i32_0 = arith.constant 0 : i32
    %c0_i32_1 = arith.constant 0 : i32
    return %c0_i32, %c0_i32_0 : i32, i32
  }
  func.func @transform_3(%arg0: i32) -> (i32, i32) {
    %c0_i32 = arith.constant 0 : i32
    %c0_i32_0 = arith.constant 0 : i32
    %c0_i32_1 = arith.constant 0 : i32
    return %c0_i32, %c0_i32_0 : i32, i32
  }
  func.func @transform_4(%arg0: i32) -> (i32, i32) {
    %c0_i32 = arith.constant 0 : i32
    %c0_i32_0 = arith.constant 0 : i32
    return %arg0, %c0_i32 : i32, i32
  }
}

module attributes {stable_mosaic.version = 11 : i64} {
  func.func @_conv_bn_add_relu_kernel(%arg0: i32, %arg1: memref<8x288xbf16, #tpu.memory_space<vmem>>, %arg2: memref<288x32xbf16, #tpu.memory_space<vmem>>, %arg3: memref<1x32xf32, #tpu.memory_space<vmem>>, %arg4: memref<1x32xf32, #tpu.memory_space<vmem>>, %arg5: memref<8x32xbf16, #tpu.memory_space<vmem>>, %arg6: memref<8x32xbf16, #tpu.memory_space<vmem>>) attributes {dimension_semantics = [#tpu.dimension_semantics<parallel>], iteration_bounds = array<i64: 1>, scalar_prefetch = 0 : i64, scratch_operands = 0 : i64, tpu.core_type = #tpu.core_type<tc>, window_params = [{transform_indices = @transform_0, window_bounds = array<i64: 8, 288>}, {pipeline_mode = #tpu.pipeline_mode<synchronous>, transform_indices = @transform_1, window_bounds = array<i64: 288, 32>}, {pipeline_mode = #tpu.pipeline_mode<synchronous>, transform_indices = @transform_2, window_bounds = array<i64: 1, 32>}, {pipeline_mode = #tpu.pipeline_mode<synchronous>, transform_indices = @transform_3, window_bounds = array<i64: 1, 32>}, {transform_indices = @transform_4, window_bounds = array<i64: 8, 32>}, {transform_indices = @transform_5, window_bounds = array<i64: 8, 32>}]} {
    %c0 = arith.constant 0 : index
    %c0_0 = arith.constant 0 : index
    %0 = vector.load %arg1[%c0, %c0_0] : memref<8x288xbf16, #tpu.memory_space<vmem>>, vector<8x288xbf16>
    %c0_1 = arith.constant 0 : index
    %c0_2 = arith.constant 0 : index
    %1 = vector.load %arg2[%c0_1, %c0_2] : memref<288x32xbf16, #tpu.memory_space<vmem>>, vector<288x32xbf16>
    %cst = arith.constant dense<0.000000e+00> : vector<8x32xf32>
    %2 = tpu.matmul %0, %1, %cst {dimension_numbers = #tpu.dot_dimension_numbers<[1], [0], [0], [1], [0, 0, 1, 1], [], []>} : vector<8x288xbf16>, vector<288x32xbf16>, vector<8x32xf32> -> vector<8x32xf32>
    %c0_3 = arith.constant 0 : index
    %c0_4 = arith.constant 0 : index
    %3 = vector.load %arg3[%c0_3, %c0_4] : memref<1x32xf32, #tpu.memory_space<vmem>>, vector<1x32xf32>
    %4 = vector.broadcast %3 : vector<1x32xf32> to vector<8x32xf32>
    %5 = arith.mulf %2, %4 : vector<8x32xf32>
    %c0_5 = arith.constant 0 : index
    %c0_6 = arith.constant 0 : index
    %6 = vector.load %arg4[%c0_5, %c0_6] : memref<1x32xf32, #tpu.memory_space<vmem>>, vector<1x32xf32>
    %7 = vector.broadcast %6 : vector<1x32xf32> to vector<8x32xf32>
    %8 = arith.addf %5, %7 : vector<8x32xf32>
    %c0_7 = arith.constant 0 : index
    %c0_8 = arith.constant 0 : index
    %9 = vector.load %arg5[%c0_7, %c0_8] : memref<8x32xbf16, #tpu.memory_space<vmem>>, vector<8x32xbf16>
    %10 = arith.extf %9 : vector<8x32xbf16> to vector<8x32xf32>
    %11 = arith.addf %8, %10 : vector<8x32xf32>
    %cst_9 = arith.constant 0.000000e+00 : f32
    %12 = vector.broadcast %cst_9 : f32 to vector<8x32xf32>
    %13 = arith.maximumf %11, %12 : vector<8x32xf32>
    %14 = arith.truncf %13 : vector<8x32xf32> to vector<8x32xbf16>
    %c0_10 = arith.constant 0 : index
    %c0_11 = arith.constant 0 : index
    %15 = vector.load %arg6[%c0_10, %c0_11] : memref<8x32xbf16, #tpu.memory_space<vmem>>, vector<8x32xbf16>
    tpu.vector_store %arg6[%c0_10, %c0_11], %14 {strides = array<i32>} : memref<8x32xbf16, #tpu.memory_space<vmem>>, vector<8x32xbf16>,
    return
  }
  func.func @transform_0(%arg0: i32) -> (i32, i32) {
    %c0_i32 = arith.constant 0 : i32
    %c0_i32_0 = arith.constant 0 : i32
    return %arg0, %c0_i32 : i32, i32
  }
  func.func @transform_1(%arg0: i32) -> (i32, i32) {
    %c0_i32 = arith.constant 0 : i32
    %c0_i32_0 = arith.constant 0 : i32
    %c0_i32_1 = arith.constant 0 : i32
    return %c0_i32, %c0_i32_0 : i32, i32
  }
  func.func @transform_2(%arg0: i32) -> (i32, i32) {
    %c0_i32 = arith.constant 0 : i32
    %c0_i32_0 = arith.constant 0 : i32
    %c0_i32_1 = arith.constant 0 : i32
    return %c0_i32, %c0_i32_0 : i32, i32
  }
  func.func @transform_3(%arg0: i32) -> (i32, i32) {
    %c0_i32 = arith.constant 0 : i32
    %c0_i32_0 = arith.constant 0 : i32
    %c0_i32_1 = arith.constant 0 : i32
    return %c0_i32, %c0_i32_0 : i32, i32
  }
  func.func @transform_4(%arg0: i32) -> (i32, i32) {
    %c0_i32 = arith.constant 0 : i32
    %c0_i32_0 = arith.constant 0 : i32
    return %arg0, %c0_i32 : i32, i32
  }
  func.func @transform_5(%arg0: i32) -> (i32, i32) {
    %c0_i32 = arith.constant 0 : i32
    %c0_i32_0 = arith.constant 0 : i32
    return %arg0, %c0_i32 : i32, i32
  }
}

module attributes {stable_mosaic.version = 11 : i64} {
  func.func @_conv_bn_relu_kernel(%arg0: i32, %arg1: memref<8x288xbf16, #tpu.memory_space<vmem>>, %arg2: memref<288x32xbf16, #tpu.memory_space<vmem>>, %arg3: memref<1x32xf32, #tpu.memory_space<vmem>>, %arg4: memref<1x32xf32, #tpu.memory_space<vmem>>, %arg5: memref<8x32xbf16, #tpu.memory_space<vmem>>) attributes {dimension_semantics = [#tpu.dimension_semantics<parallel>], iteration_bounds = array<i64: 1>, scalar_prefetch = 0 : i64, scratch_operands = 0 : i64, tpu.core_type = #tpu.core_type<tc>, window_params = [{transform_indices = @transform_0, window_bounds = array<i64: 8, 288>}, {pipeline_mode = #tpu.pipeline_mode<synchronous>, transform_indices = @transform_1, window_bounds = array<i64: 288, 32>}, {pipeline_mode = #tpu.pipeline_mode<synchronous>, transform_indices = @transform_2, window_bounds = array<i64: 1, 32>}, {pipeline_mode = #tpu.pipeline_mode<synchronous>, transform_indices = @transform_3, window_bounds = array<i64: 1, 32>}, {transform_indices = @transform_4, window_bounds = array<i64: 8, 32>}]} {
    %c0 = arith.constant 0 : index
    %c0_0 = arith.constant 0 : index
    %0 = vector.load %arg1[%c0, %c0_0] : memref<8x288xbf16, #tpu.memory_space<vmem>>, vector<8x288xbf16>
    %c0_1 = arith.constant 0 : index
    %c0_2 = arith.constant 0 : index
    %1 = vector.load %arg2[%c0_1, %c0_2] : memref<288x32xbf16, #tpu.memory_space<vmem>>, vector<288x32xbf16>
    %cst = arith.constant dense<0.000000e+00> : vector<8x32xf32>
    %2 = tpu.matmul %0, %1, %cst {dimension_numbers = #tpu.dot_dimension_numbers<[1], [0], [0], [1], [0, 0, 1, 1], [], []>} : vector<8x288xbf16>, vector<288x32xbf16>, vector<8x32xf32> -> vector<8x32xf32>
    %c0_3 = arith.constant 0 : index
    %c0_4 = arith.constant 0 : index
    %3 = vector.load %arg3[%c0_3, %c0_4] : memref<1x32xf32, #tpu.memory_space<vmem>>, vector<1x32xf32>
    %4 = vector.broadcast %3 : vector<1x32xf32> to vector<8x32xf32>
    %5 = arith.mulf %2, %4 : vector<8x32xf32>
    %c0_5 = arith.constant 0 : index
    %c0_6 = arith.constant 0 : index
    %6 = vector.load %arg4[%c0_5, %c0_6] : memref<1x32xf32, #tpu.memory_space<vmem>>, vector<1x32xf32>
    %7 = vector.broadcast %6 : vector<1x32xf32> to vector<8x32xf32>
    %8 = arith.addf %5, %7 : vector<8x32xf32>
    %cst_7 = arith.constant 0.000000e+00 : f32
    %9 = vector.broadcast %cst_7 : f32 to vector<8x32xf32>
    %10 = arith.maximumf %8, %9 : vector<8x32xf32>
    %11 = arith.truncf %10 : vector<8x32xf32> to vector<8x32xbf16>
    %c0_8 = arith.constant 0 : index
    %c0_9 = arith.constant 0 : index
    %12 = vector.load %arg5[%c0_8, %c0_9] : memref<8x32xbf16, #tpu.memory_space<vmem>>, vector<8x32xbf16>
    tpu.vector_store %arg5[%c0_8, %c0_9], %11 {strides = array<i32>} : memref<8x32xbf16, #tpu.memory_space<vmem>>, vector<8x32xbf16>,
    return
  }
  func.func @transform_0(%arg0: i32) -> (i32, i32) {
    %c0_i32 = arith.constant 0 : i32
    %c0_i32_0 = arith.constant 0 : i32
    return %arg0, %c0_i32 : i32, i32
  }
  func.func @transform_1(%arg0: i32) -> (i32, i32) {
    %c0_i32 = arith.constant 0 : i32
    %c0_i32_0 = arith.constant 0 : i32
    %c0_i32_1 = arith.constant 0 : i32
    return %c0_i32, %c0_i32_0 : i32, i32
  }
  func.func @transform_2(%arg0: i32) -> (i32, i32) {
    %c0_i32 = arith.constant 0 : i32
    %c0_i32_0 = arith.constant 0 : i32
    %c0_i32_1 = arith.constant 0 : i32
    return %c0_i32, %c0_i32_0 : i32, i32
  }
  func.func @transform_3(%arg0: i32) -> (i32, i32) {
    %c0_i32 = arith.constant 0 : i32
    %c0_i32_0 = arith.constant 0 : i32
    %c0_i32_1 = arith.constant 0 : i32
    return %c0_i32, %c0_i32_0 : i32, i32
  }
  func.func @transform_4(%arg0: i32) -> (i32, i32) {
    %c0_i32 = arith.constant 0 : i32
    %c0_i32_0 = arith.constant 0 : i32
    return %arg0, %c0_i32 : i32, i32
  }
}

module attributes {stable_mosaic.version = 11 : i64} {
  func.func @_conv_bn_relu_kernel(%arg0: i32, %arg1: memref<8x288xbf16, #tpu.memory_space<vmem>>, %arg2: memref<288x64xbf16, #tpu.memory_space<vmem>>, %arg3: memref<1x64xf32, #tpu.memory_space<vmem>>, %arg4: memref<1x64xf32, #tpu.memory_space<vmem>>, %arg5: memref<8x64xbf16, #tpu.memory_space<vmem>>) attributes {dimension_semantics = [#tpu.dimension_semantics<parallel>], iteration_bounds = array<i64: 1>, scalar_prefetch = 0 : i64, scratch_operands = 0 : i64, tpu.core_type = #tpu.core_type<tc>, window_params = [{transform_indices = @transform_0, window_bounds = array<i64: 8, 288>}, {pipeline_mode = #tpu.pipeline_mode<synchronous>, transform_indices = @transform_1, window_bounds = array<i64: 288, 64>}, {pipeline_mode = #tpu.pipeline_mode<synchronous>, transform_indices = @transform_2, window_bounds = array<i64: 1, 64>}, {pipeline_mode = #tpu.pipeline_mode<synchronous>, transform_indices = @transform_3, window_bounds = array<i64: 1, 64>}, {transform_indices = @transform_4, window_bounds = array<i64: 8, 64>}]} {
    %c0 = arith.constant 0 : index
    %c0_0 = arith.constant 0 : index
    %0 = vector.load %arg1[%c0, %c0_0] : memref<8x288xbf16, #tpu.memory_space<vmem>>, vector<8x288xbf16>
    %c0_1 = arith.constant 0 : index
    %c0_2 = arith.constant 0 : index
    %1 = vector.load %arg2[%c0_1, %c0_2] : memref<288x64xbf16, #tpu.memory_space<vmem>>, vector<288x64xbf16>
    %cst = arith.constant dense<0.000000e+00> : vector<8x64xf32>
    %2 = tpu.matmul %0, %1, %cst {dimension_numbers = #tpu.dot_dimension_numbers<[1], [0], [0], [1], [0, 0, 1, 1], [], []>} : vector<8x288xbf16>, vector<288x64xbf16>, vector<8x64xf32> -> vector<8x64xf32>
    %c0_3 = arith.constant 0 : index
    %c0_4 = arith.constant 0 : index
    %3 = vector.load %arg3[%c0_3, %c0_4] : memref<1x64xf32, #tpu.memory_space<vmem>>, vector<1x64xf32>
    %4 = vector.broadcast %3 : vector<1x64xf32> to vector<8x64xf32>
    %5 = arith.mulf %2, %4 : vector<8x64xf32>
    %c0_5 = arith.constant 0 : index
    %c0_6 = arith.constant 0 : index
    %6 = vector.load %arg4[%c0_5, %c0_6] : memref<1x64xf32, #tpu.memory_space<vmem>>, vector<1x64xf32>
    %7 = vector.broadcast %6 : vector<1x64xf32> to vector<8x64xf32>
    %8 = arith.addf %5, %7 : vector<8x64xf32>
    %cst_7 = arith.constant 0.000000e+00 : f32
    %9 = vector.broadcast %cst_7 : f32 to vector<8x64xf32>
    %10 = arith.maximumf %8, %9 : vector<8x64xf32>
    %11 = arith.truncf %10 : vector<8x64xf32> to vector<8x64xbf16>
    %c0_8 = arith.constant 0 : index
    %c0_9 = arith.constant 0 : index
    %12 = vector.load %arg5[%c0_8, %c0_9] : memref<8x64xbf16, #tpu.memory_space<vmem>>, vector<8x64xbf16>
    tpu.vector_store %arg5[%c0_8, %c0_9], %11 {strides = array<i32>} : memref<8x64xbf16, #tpu.memory_space<vmem>>, vector<8x64xbf16>,
    return
  }
  func.func @transform_0(%arg0: i32) -> (i32, i32) {
    %c0_i32 = arith.constant 0 : i32
    %c0_i32_0 = arith.constant 0 : i32
    return %arg0, %c0_i32 : i32, i32
  }
  func.func @transform_1(%arg0: i32) -> (i32, i32) {
    %c0_i32 = arith.constant 0 : i32
    %c0_i32_0 = arith.constant 0 : i32
    %c0_i32_1 = arith.constant 0 : i32
    return %c0_i32, %c0_i32_0 : i32, i32
  }
  func.func @transform_2(%arg0: i32) -> (i32, i32) {
    %c0_i32 = arith.constant 0 : i32
    %c0_i32_0 = arith.constant 0 : i32
    %c0_i32_1 = arith.constant 0 : i32
    return %c0_i32, %c0_i32_0 : i32, i32
  }
  func.func @transform_3(%arg0: i32) -> (i32, i32) {
    %c0_i32 = arith.constant 0 : i32
    %c0_i32_0 = arith.constant 0 : i32
    %c0_i32_1 = arith.constant 0 : i32
    return %c0_i32, %c0_i32_0 : i32, i32
  }
  func.func @transform_4(%arg0: i32) -> (i32, i32) {
    %c0_i32 = arith.constant 0 : i32
    %c0_i32_0 = arith.constant 0 : i32
    return %arg0, %c0_i32 : i32, i32
  }
}

module attributes {stable_mosaic.version = 11 : i64} {
  func.func @_conv_bn_kernel(%arg0: i32, %arg1: memref<8x32xbf16, #tpu.memory_space<vmem>>, %arg2: memref<32x64xbf16, #tpu.memory_space<vmem>>, %arg3: memref<1x64xf32, #tpu.memory_space<vmem>>, %arg4: memref<1x64xf32, #tpu.memory_space<vmem>>, %arg5: memref<8x64xbf16, #tpu.memory_space<vmem>>) attributes {dimension_semantics = [#tpu.dimension_semantics<parallel>], iteration_bounds = array<i64: 1>, scalar_prefetch = 0 : i64, scratch_operands = 0 : i64, tpu.core_type = #tpu.core_type<tc>, window_params = [{transform_indices = @transform_0, window_bounds = array<i64: 8, 32>}, {pipeline_mode = #tpu.pipeline_mode<synchronous>, transform_indices = @transform_1, window_bounds = array<i64: 32, 64>}, {pipeline_mode = #tpu.pipeline_mode<synchronous>, transform_indices = @transform_2, window_bounds = array<i64: 1, 64>}, {pipeline_mode = #tpu.pipeline_mode<synchronous>, transform_indices = @transform_3, window_bounds = array<i64: 1, 64>}, {transform_indices = @transform_4, window_bounds = array<i64: 8, 64>}]} {
    %c0 = arith.constant 0 : index
    %c0_0 = arith.constant 0 : index
    %0 = vector.load %arg1[%c0, %c0_0] : memref<8x32xbf16, #tpu.memory_space<vmem>>, vector<8x32xbf16>
    %c0_1 = arith.constant 0 : index
    %c0_2 = arith.constant 0 : index
    %1 = vector.load %arg2[%c0_1, %c0_2] : memref<32x64xbf16, #tpu.memory_space<vmem>>, vector<32x64xbf16>
    %cst = arith.constant dense<0.000000e+00> : vector<8x64xf32>
    %2 = tpu.matmul %0, %1, %cst {dimension_numbers = #tpu.dot_dimension_numbers<[1], [0], [0], [1], [0, 0, 1, 1], [], []>} : vector<8x32xbf16>, vector<32x64xbf16>, vector<8x64xf32> -> vector<8x64xf32>
    %c0_3 = arith.constant 0 : index
    %c0_4 = arith.constant 0 : index
    %3 = vector.load %arg3[%c0_3, %c0_4] : memref<1x64xf32, #tpu.memory_space<vmem>>, vector<1x64xf32>
    %4 = vector.broadcast %3 : vector<1x64xf32> to vector<8x64xf32>
    %5 = arith.mulf %2, %4 : vector<8x64xf32>
    %c0_5 = arith.constant 0 : index
    %c0_6 = arith.constant 0 : index
    %6 = vector.load %arg4[%c0_5, %c0_6] : memref<1x64xf32, #tpu.memory_space<vmem>>, vector<1x64xf32>
    %7 = vector.broadcast %6 : vector<1x64xf32> to vector<8x64xf32>
    %8 = arith.addf %5, %7 : vector<8x64xf32>
    %9 = arith.truncf %8 : vector<8x64xf32> to vector<8x64xbf16>
    %c0_7 = arith.constant 0 : index
    %c0_8 = arith.constant 0 : index
    %10 = vector.load %arg5[%c0_7, %c0_8] : memref<8x64xbf16, #tpu.memory_space<vmem>>, vector<8x64xbf16>
    tpu.vector_store %arg5[%c0_7, %c0_8], %9 {strides = array<i32>} : memref<8x64xbf16, #tpu.memory_space<vmem>>, vector<8x64xbf16>,
    return
  }
  func.func @transform_0(%arg0: i32) -> (i32, i32) {
    %c0_i32 = arith.constant 0 : i32
    %c0_i32_0 = arith.constant 0 : i32
    return %arg0, %c0_i32 : i32, i32
  }
  func.func @transform_1(%arg0: i32) -> (i32, i32) {
    %c0_i32 = arith.constant 0 : i32
    %c0_i32_0 = arith.constant 0 : i32
    %c0_i32_1 = arith.constant 0 : i32
    return %c0_i32, %c0_i32_0 : i32, i32
  }
  func.func @transform_2(%arg0: i32) -> (i32, i32) {
    %c0_i32 = arith.constant 0 : i32
    %c0_i32_0 = arith.constant 0 : i32
    %c0_i32_1 = arith.constant 0 : i32
    return %c0_i32, %c0_i32_0 : i32, i32
  }
  func.func @transform_3(%arg0: i32) -> (i32, i32) {
    %c0_i32 = arith.constant 0 : i32
    %c0_i32_0 = arith.constant 0 : i32
    %c0_i32_1 = arith.constant 0 : i32
    return %c0_i32, %c0_i32_0 : i32, i32
  }
  func.func @transform_4(%arg0: i32) -> (i32, i32) {
    %c0_i32 = arith.constant 0 : i32
    %c0_i32_0 = arith.constant 0 : i32
    return %arg0, %c0_i32 : i32, i32
  }
}

module attributes {stable_mosaic.version = 11 : i64} {
  func.func @_conv_bn_add_relu_kernel(%arg0: i32, %arg1: memref<8x576xbf16, #tpu.memory_space<vmem>>, %arg2: memref<576x64xbf16, #tpu.memory_space<vmem>>, %arg3: memref<1x64xf32, #tpu.memory_space<vmem>>, %arg4: memref<1x64xf32, #tpu.memory_space<vmem>>, %arg5: memref<8x64xbf16, #tpu.memory_space<vmem>>, %arg6: memref<8x64xbf16, #tpu.memory_space<vmem>>) attributes {dimension_semantics = [#tpu.dimension_semantics<parallel>], iteration_bounds = array<i64: 1>, scalar_prefetch = 0 : i64, scratch_operands = 0 : i64, tpu.core_type = #tpu.core_type<tc>, window_params = [{transform_indices = @transform_0, window_bounds = array<i64: 8, 576>}, {pipeline_mode = #tpu.pipeline_mode<synchronous>, transform_indices = @transform_1, window_bounds = array<i64: 576, 64>}, {pipeline_mode = #tpu.pipeline_mode<synchronous>, transform_indices = @transform_2, window_bounds = array<i64: 1, 64>}, {pipeline_mode = #tpu.pipeline_mode<synchronous>, transform_indices = @transform_3, window_bounds = array<i64: 1, 64>}, {transform_indices = @transform_4, window_bounds = array<i64: 8, 64>}, {transform_indices = @transform_5, window_bounds = array<i64: 8, 64>}]} {
    %c0 = arith.constant 0 : index
    %c0_0 = arith.constant 0 : index
    %0 = vector.load %arg1[%c0, %c0_0] : memref<8x576xbf16, #tpu.memory_space<vmem>>, vector<8x576xbf16>
    %c0_1 = arith.constant 0 : index
    %c0_2 = arith.constant 0 : index
    %1 = vector.load %arg2[%c0_1, %c0_2] : memref<576x64xbf16, #tpu.memory_space<vmem>>, vector<576x64xbf16>
    %cst = arith.constant dense<0.000000e+00> : vector<8x64xf32>
    %2 = tpu.matmul %0, %1, %cst {dimension_numbers = #tpu.dot_dimension_numbers<[1], [0], [0], [1], [0, 0, 1, 1], [], []>} : vector<8x576xbf16>, vector<576x64xbf16>, vector<8x64xf32> -> vector<8x64xf32>
    %c0_3 = arith.constant 0 : index
    %c0_4 = arith.constant 0 : index
    %3 = vector.load %arg3[%c0_3, %c0_4] : memref<1x64xf32, #tpu.memory_space<vmem>>, vector<1x64xf32>
    %4 = vector.broadcast %3 : vector<1x64xf32> to vector<8x64xf32>
    %5 = arith.mulf %2, %4 : vector<8x64xf32>
    %c0_5 = arith.constant 0 : index
    %c0_6 = arith.constant 0 : index
    %6 = vector.load %arg4[%c0_5, %c0_6] : memref<1x64xf32, #tpu.memory_space<vmem>>, vector<1x64xf32>
    %7 = vector.broadcast %6 : vector<1x64xf32> to vector<8x64xf32>
    %8 = arith.addf %5, %7 : vector<8x64xf32>
    %c0_7 = arith.constant 0 : index
    %c0_8 = arith.constant 0 : index
    %9 = vector.load %arg5[%c0_7, %c0_8] : memref<8x64xbf16, #tpu.memory_space<vmem>>, vector<8x64xbf16>
    %10 = arith.extf %9 : vector<8x64xbf16> to vector<8x64xf32>
    %11 = arith.addf %8, %10 : vector<8x64xf32>
    %cst_9 = arith.constant 0.000000e+00 : f32
    %12 = vector.broadcast %cst_9 : f32 to vector<8x64xf32>
    %13 = arith.maximumf %11, %12 : vector<8x64xf32>
    %14 = arith.truncf %13 : vector<8x64xf32> to vector<8x64xbf16>
    %c0_10 = arith.constant 0 : index
    %c0_11 = arith.constant 0 : index
    %15 = vector.load %arg6[%c0_10, %c0_11] : memref<8x64xbf16, #tpu.memory_space<vmem>>, vector<8x64xbf16>
    tpu.vector_store %arg6[%c0_10, %c0_11], %14 {strides = array<i32>} : memref<8x64xbf16, #tpu.memory_space<vmem>>, vector<8x64xbf16>,
    return
  }
  func.func @transform_0(%arg0: i32) -> (i32, i32) {
    %c0_i32 = arith.constant 0 : i32
    %c0_i32_0 = arith.constant 0 : i32
    return %arg0, %c0_i32 : i32, i32
  }
  func.func @transform_1(%arg0: i32) -> (i32, i32) {
    %c0_i32 = arith.constant 0 : i32
    %c0_i32_0 = arith.constant 0 : i32
    %c0_i32_1 = arith.constant 0 : i32
    return %c0_i32, %c0_i32_0 : i32, i32
  }
  func.func @transform_2(%arg0: i32) -> (i32, i32) {
    %c0_i32 = arith.constant 0 : i32
    %c0_i32_0 = arith.constant 0 : i32
    %c0_i32_1 = arith.constant 0 : i32
    return %c0_i32, %c0_i32_0 : i32, i32
  }
  func.func @transform_3(%arg0: i32) -> (i32, i32) {
    %c0_i32 = arith.constant 0 : i32
    %c0_i32_0 = arith.constant 0 : i32
    %c0_i32_1 = arith.constant 0 : i32
    return %c0_i32, %c0_i32_0 : i32, i32
  }
  func.func @transform_4(%arg0: i32) -> (i32, i32) {
    %c0_i32 = arith.constant 0 : i32
    %c0_i32_0 = arith.constant 0 : i32
    return %arg0, %c0_i32 : i32, i32
  }
  func.func @transform_5(%arg0: i32) -> (i32, i32) {
    %c0_i32 = arith.constant 0 : i32
    %c0_i32_0 = arith.constant 0 : i32
    return %arg0, %c0_i32 : i32, i32
  }
}

module attributes {stable_mosaic.version = 11 : i64} {
  func.func @_conv_bn_relu_kernel(%arg0: i32, %arg1: memref<8x576xbf16, #tpu.memory_space<vmem>>, %arg2: memref<576x64xbf16, #tpu.memory_space<vmem>>, %arg3: memref<1x64xf32, #tpu.memory_space<vmem>>, %arg4: memref<1x64xf32, #tpu.memory_space<vmem>>, %arg5: memref<8x64xbf16, #tpu.memory_space<vmem>>) attributes {dimension_semantics = [#tpu.dimension_semantics<parallel>], iteration_bounds = array<i64: 1>, scalar_prefetch = 0 : i64, scratch_operands = 0 : i64, tpu.core_type = #tpu.core_type<tc>, window_params = [{transform_indices = @transform_0, window_bounds = array<i64: 8, 576>}, {pipeline_mode = #tpu.pipeline_mode<synchronous>, transform_indices = @transform_1, window_bounds = array<i64: 576, 64>}, {pipeline_mode = #tpu.pipeline_mode<synchronous>, transform_indices = @transform_2, window_bounds = array<i64: 1, 64>}, {pipeline_mode = #tpu.pipeline_mode<synchronous>, transform_indices = @transform_3, window_bounds = array<i64: 1, 64>}, {transform_indices = @transform_4, window_bounds = array<i64: 8, 64>}]} {
    %c0 = arith.constant 0 : index
    %c0_0 = arith.constant 0 : index
    %0 = vector.load %arg1[%c0, %c0_0] : memref<8x576xbf16, #tpu.memory_space<vmem>>, vector<8x576xbf16>
    %c0_1 = arith.constant 0 : index
    %c0_2 = arith.constant 0 : index
    %1 = vector.load %arg2[%c0_1, %c0_2] : memref<576x64xbf16, #tpu.memory_space<vmem>>, vector<576x64xbf16>
    %cst = arith.constant dense<0.000000e+00> : vector<8x64xf32>
    %2 = tpu.matmul %0, %1, %cst {dimension_numbers = #tpu.dot_dimension_numbers<[1], [0], [0], [1], [0, 0, 1, 1], [], []>} : vector<8x576xbf16>, vector<576x64xbf16>, vector<8x64xf32> -> vector<8x64xf32>
    %c0_3 = arith.constant 0 : index
    %c0_4 = arith.constant 0 : index
    %3 = vector.load %arg3[%c0_3, %c0_4] : memref<1x64xf32, #tpu.memory_space<vmem>>, vector<1x64xf32>
    %4 = vector.broadcast %3 : vector<1x64xf32> to vector<8x64xf32>
    %5 = arith.mulf %2, %4 : vector<8x64xf32>
    %c0_5 = arith.constant 0 : index
    %c0_6 = arith.constant 0 : index
    %6 = vector.load %arg4[%c0_5, %c0_6] : memref<1x64xf32, #tpu.memory_space<vmem>>, vector<1x64xf32>
    %7 = vector.broadcast %6 : vector<1x64xf32> to vector<8x64xf32>
    %8 = arith.addf %5, %7 : vector<8x64xf32>
    %cst_7 = arith.constant 0.000000e+00 : f32
    %9 = vector.broadcast %cst_7 : f32 to vector<8x64xf32>
    %10 = arith.maximumf %8, %9 : vector<8x64xf32>
    %11 = arith.truncf %10 : vector<8x64xf32> to vector<8x64xbf16>
    %c0_8 = arith.constant 0 : index
    %c0_9 = arith.constant 0 : index
    %12 = vector.load %arg5[%c0_8, %c0_9] : memref<8x64xbf16, #tpu.memory_space<vmem>>, vector<8x64xbf16>
    tpu.vector_store %arg5[%c0_8, %c0_9], %11 {strides = array<i32>} : memref<8x64xbf16, #tpu.memory_space<vmem>>, vector<8x64xbf16>,
    return
  }
  func.func @transform_0(%arg0: i32) -> (i32, i32) {
    %c0_i32 = arith.constant 0 : i32
    %c0_i32_0 = arith.constant 0 : i32
    return %arg0, %c0_i32 : i32, i32
  }
  func.func @transform_1(%arg0: i32) -> (i32, i32) {
    %c0_i32 = arith.constant 0 : i32
    %c0_i32_0 = arith.constant 0 : i32
    %c0_i32_1 = arith.constant 0 : i32
    return %c0_i32, %c0_i32_0 : i32, i32
  }
  func.func @transform_2(%arg0: i32) -> (i32, i32) {
    %c0_i32 = arith.constant 0 : i32
    %c0_i32_0 = arith.constant 0 : i32
    %c0_i32_1 = arith.constant 0 : i32
    return %c0_i32, %c0_i32_0 : i32, i32
  }
  func.func @transform_3(%arg0: i32) -> (i32, i32) {
    %c0_i32 = arith.constant 0 : i32
    %c0_i32_0 = arith.constant 0 : i32
    %c0_i32_1 = arith.constant 0 : i32
    return %c0_i32, %c0_i32_0 : i32, i32
  }
  func.func @transform_4(%arg0: i32) -> (i32, i32) {
    %c0_i32 = arith.constant 0 : i32
    %c0_i32_0 = arith.constant 0 : i32
    return %arg0, %c0_i32 : i32, i32
  }
}

</mosaic_0001>

<llo_original>
// kernel: resnet_features.20
$region0: #{resnet_features.20}
  #allocation0 [shape = 'u32[]', space=smem, size = 0x4, offset = 0x4, fixed_abs, tag = 'smem constant byte address 0x4 - core index']
  #allocation1 [shape = 'u32[144,128]{1,0:T(1,128)}', space=vmem, size = 0x12000, scoped, tag = 'internal scratch']
  %s0 = inlined_call_operand.vmem [shape: bf16[512,147], index: 0, kind: input, shape index: {}]
  %s1 = inlined_call_operand.vmem [shape: bf16[147,8], index: 1, kind: input, shape index: {}]
  %s2 = inlined_call_operand.vmem [shape: f32[1,8], index: 2, kind: input, shape index: {}]
  %s3 = inlined_call_operand.vmem [shape: f32[1,8], index: 3, kind: input, shape index: {}]
  %s4 = inlined_call_operand.vmem [shape: bf16[512,8], index: 4, kind: output, shape index: {}]
  %s5 = sld [smem:[#allocation0]]
  $region49: #{resnet_features.20} parent=0
    _
  %s7 = ssub.s32 1, %s5
  %s8 = scalar_select 0, %s7, %s5
  loop: start=0, step=1, limit=4
  $region2: #{resnet_features.20} parent=0 // loop_pre_header
    _
  $region3: #{resnet_features.20} parent=0 // loop_header
    %s10 = sphi 0, %s14
    %p11 = scmp.ge.s32.totalorder %s10, 4
    %s20 = sphi 0, %s22
    %s23 = sphi 0, %s20
    %s24 = sphi 0, %s23
    %s40 = sphi 0, %s24
    %s44 = sphi 0, %s44
    %s46 = sphi 0, %s44
    %s47 = sphi 0, %s46
    %s61 = sphi 0, %s47
    %s65 = sphi 0, %s65
    %s67 = sphi 0, %s65
    %s68 = sphi 0, %s67
    %s82 = sphi 0, %s68
    %s86 = sphi 0, %s86
    %s88 = sphi 0, %s86
    %s89 = sphi 0, %s88
    %s103 = sphi 0, %s89
    %s109 = sphi 0, %s111
    %s112 = sphi 0, %s109
    %s113 = sphi 0, %s112
    %s129 = sphi 0, %s113
  $region4: #{resnet_features.20} parent=0 // loop_header_branch
    %13 = sbr.rel (%p11) target = $region8
  $region5: #{resnet_features.20} parent=0 // loop_body
    %s15 = ssub.s32 %s10, 1
    %s16 = ssub.s32 %s10, 2
    %s17 = sadd.s32 %s10, 1
    %s18 = ssub.s32 %s10, %s17
    %p19 = scmp.eq.s32.totalorder %s18, 0
    %s21 = sadd.s32 %s20, 1
    %s22 = scalar_select %p19, %s20, %s21
    %p25 = pneg %p19
    %p26 = scmp.eq.s32.totalorder %s10, 1
    %p27 = por %p25, %p26
    %p28 = scmp.ne.s32.totalorder %s20, %s23
    %p29 = scmp.eq.s32.totalorder %s10, 0
    %p30 = por %p28, %p29
    %p31 = scmp.ne.s32.totalorder %s20, %s23
    %p32 = scmp.eq.s32.totalorder %s15, 1
    %p33 = por %p31, %p32
    %p34 = scmp.ne.s32.totalorder %s23, %s24
    %p35 = scmp.eq.s32.totalorder %s15, 0
    %p36 = por %p34, %p35
    %p37 = scmp.ne.s32.totalorder %s23, %s24
    %p38 = scmp.eq.s32.totalorder %s16, 1
    %p39 = por %p37, %p38
    %p41 = scmp.ne.s32.totalorder %s24, %s40
    %p42 = scmp.eq.s32.totalorder %s16, 0
    %p43 = por %p41, %p42
    %s45 = sadd.s32 %s44, 1
    %p48 = scmp.eq.s32.totalorder %s10, 1
    %p49 = scmp.ne.s32.totalorder %s44, %s46
    %p50 = scmp.eq.s32.totalorder %s10, 0
    %p51 = por %p49, %p50
    %p52 = scmp.ne.s32.totalorder %s44, %s46
    %p53 = scmp.eq.s32.totalorder %s15, 1
    %p54 = por %p52, %p53
    %p55 = scmp.ne.s32.totalorder %s46, %s47
    %p56 = scmp.eq.s32.totalorder %s15, 0
    %p57 = por %p55, %p56
    %p58 = scmp.ne.s32.totalorder %s46, %s47
    %p59 = scmp.eq.s32.totalorder %s16, 1
    %p60 = por %p58, %p59
    %p62 = scmp.ne.s32.totalorder %s47, %s61
    %p63 = scmp.eq.s32.totalorder %s16, 0
    %p64 = por %p62, %p63
    %s66 = sadd.s32 %s65, 1
    %p69 = scmp.eq.s32.totalorder %s10, 1
    %p70 = scmp.ne.s32.totalorder %s65, %s67
    %p71 = scmp.eq.s32.totalorder %s10, 0
    %p72 = por %p70, %p71
    %p73 = scmp.ne.s32.totalorder %s65, %s67
    %p74 = scmp.eq.s32.totalorder %s15, 1
    %p75 = por %p73, %p74
    %p76 = scmp.ne.s32.totalorder %s67, %s68
    %p77 = scmp.eq.s32.totalorder %s15, 0
    %p78 = por %p76, %p77
    %p79 = scmp.ne.s32.totalorder %s67, %s68
    %p80 = scmp.eq.s32.totalorder %s16, 1
    %p81 = por %p79, %p80
    %p83 = scmp.ne.s32.totalorder %s68, %s82
    %p84 = scmp.eq.s32.totalorder %s16, 0
    %p85 = por %p83, %p84
    %s87 = sadd.s32 %s86, 1
    %p90 = scmp.eq.s32.totalorder %s10, 1
    %p91 = scmp.ne.s32.totalorder %s86, %s88
    %p92 = scmp.eq.s32.totalorder %s10, 0
    %p93 = por %p91, %p92
    %p94 = scmp.ne.s32.totalorder %s86, %s88
    %p95 = scmp.eq.s32.totalorder %s15, 1
    %p96 = por %p94, %p95
    %p97 = scmp.ne.s32.totalorder %s88, %s89
    %p98 = scmp.eq.s32.totalorder %s15, 0
    %p99 = por %p97, %p98
    %p100 = scmp.ne.s32.totalorder %s88, %s89
    %p101 = scmp.eq.s32.totalorder %s16, 1
    %p102 = por %p100, %p101
    %p104 = scmp.ne.s32.totalorder %s89, %s103
    %p105 = scmp.eq.s32.totalorder %s16, 0
    %p106 = por %p104, %p105
    %s107 = ssub.s32 %s10, %s17
    %p108 = scmp.eq.s32.totalorder %s107, 0
    %s110 = sadd.s32 %s109, 1
    %s111 = scalar_select %p108, %s109, %s110
    %p114 = pneg %p108
    %p115 = scmp.eq.s32.totalorder %s10, 1
    %p116 = por %p114, %p115
    %p117 = scmp.ne.s32.totalorder %s109, %s112
    %p118 = scmp.eq.s32.totalorder %s10, 0
    %p119 = por %p117, %p118
    %p120 = scmp.ne.s32.totalorder %s109, %s112
    %p121 = scmp.eq.s32.totalorder %s15, 1
    %p122 = por %p120, %p121
    %p123 = scmp.ne.s32.totalorder %s112, %s113
    %p124 = scmp.eq.s32.totalorder %s15, 0
    %p125 = por %p123, %p124
    %p126 = scmp.ne.s32.totalorder %s112, %s113
    %p127 = scmp.eq.s32.totalorder %s16, 1
    %p128 = por %p126, %p127
    %p130 = scmp.ne.s32.totalorder %s113, %s129
    %p131 = scmp.eq.s32.totalorder %s16, 0
    %p132 = por %p130, %p131
    %p133 = scmp.le.s32.totalorder 1, %s10
    %p134 = scmp.lt.s32.totalorder %s10, 3
    %p135 = pnand %p133, %p134
    %p136 = pneg %p135
    // Predicated region
    $region9: #{resnet_features.20} parent=5 // pred_check
      _
    $region10: #{resnet_features.20} parent=5 // pred_check_branch
      %138 = sbr.rel (%p135) target = $region12
    $region11: #{resnet_features.20} parent=5 // pred_region
      %s139 = ssub.s32 %s10, 1
      // Predicated region
      $region13: #{resnet_features.20} parent=11 // pred_check
        %p140 = pneg %p57
      $region14: #{resnet_features.20} parent=11 // pred_check_branch
        %142 = sbr.rel (%p140) target = $region16
      $region15: #{resnet_features.20} parent=11 // pred_region
        _
      $region16: #{resnet_features.20} parent=11 // pred_fallthru
        _
      // Predicated region
      $region17: #{resnet_features.20} parent=11 // pred_check
        %p143 = pneg %p78
      $region18: #{resnet_features.20} parent=11 // pred_check_branch
        %145 = sbr.rel (%p143) target = $region20
      $region19: #{resnet_features.20} parent=11 // pred_region
        _
      $region20: #{resnet_features.20} parent=11 // pred_fallthru
        _
      // Predicated region
      $region21: #{resnet_features.20} parent=11 // pred_check
        %p146 = pneg %p99
      $region22: #{resnet_features.20} parent=11 // pred_check_branch
        %148 = sbr.rel (%p146) target = $region24
      $region23: #{resnet_features.20} parent=11 // pred_region
        _
      $region24: #{resnet_features.20} parent=11 // pred_fallthru
        _
    $region12: #{resnet_features.20} parent=5 // pred_fallthru
      _
    %p149 = scmp.lt.s32.totalorder %s10, 2
    // Predicated region
    $region25: #{resnet_features.20} parent=5 // pred_check
      %p150 = pneg %p149
    $region26: #{resnet_features.20} parent=5 // pred_check_branch
      %152 = sbr.rel (%p150) target = $region28
    $region27: #{resnet_features.20} parent=5 // pred_region
      // Predicated region
      $region29: #{resnet_features.20} parent=27 // pred_check
        %p153 = pneg %p30
      $region30: #{resnet_features.20} parent=27 // pred_check_branch
        %155 = sbr.rel (%p153) target = $region32
      $region31: #{resnet_features.20} parent=27 // pred_region
        %s156 = smul.u32 32, %s10
        %p157 = scmp.lt.s32.totalorder %s156, 63
        %s158 = scalar_select %p157, %s156, 63
        %s159 = smul.addr %s158, 2
        %s160 = smul.addr %s159, 4
        %s161 = scalar_lea.vmem %s0, %s160
        %s162 = smul.u32 32, %s10
      $region32: #{resnet_features.20} parent=27 // pred_fallthru
        _
    $region28: #{resnet_features.20} parent=5 // pred_fallthru
      _
    %p163 = scmp.le.s32.totalorder 1, %s10
    %p164 = scmp.lt.s32.totalorder %s10, 3
    %p165 = pnand %p163, %p164
    %p166 = pneg %p165
    // Predicated region
    $region33: #{resnet_features.20} parent=5 // pred_check
      _
    $region34: #{resnet_features.20} parent=5 // pred_check_branch
      %168 = sbr.rel (%p165) target = $region36
    $region35: #{resnet_features.20} parent=5 // pred_region
      %s169 = ssub.s32 %s10, 1
      %s170 = smul.u32 32, %s15
      %p171 = scmp.lt.s32.totalorder %s170, 63
      %s172 = scalar_select %p171, %s170, 63
      %s173 = smul.addr %s172, 2
      %s174 = smul.addr %s173, 4
      %s175 = scalar_lea.vmem %s0, %s174
      %p176 = pneg %p36
      %p177 = pneg %p33
      %p178 = pneg %p57
      %p179 = pneg %p54
      %p180 = pneg %p78
      %p181 = pneg %p75
      %p182 = pneg %p99
      %p183 = pneg %p96
      %p184 = pneg %p125
      %p185 = pneg %p122
      %s186 = smul.u32 32, %s15
      %p187 = scmp.lt.s32.totalorder %s186, 63
      %s188 = scalar_select %p187, %s186, 63
      %s189 = smul.addr %s188, 4
      %s190 = scalar_lea.vmem %s4, %s189
      %s191 = smul.u32 32, %s15
      %p192 = scmp.lt.s32.totalorder %s191, 63
      %s193 = scalar_select %p192, %s191, 63
      %s194 = smul.addr %s193, 2
      %s195 = smul.addr %s194, 4
      %s196 = scalar_lea.vmem %s0, %s195
      %s197 = smul.u32 32, %s15
      %s198 = smul.u32 32, %s15
      %p199 = scmp.lt.s32.totalorder %s198, 63
      %s200 = scalar_select %p199, %s198, 63
      %s201 = smul.addr %s200, 4
      %s202 = scalar_lea.vmem %s4, %s201
      %s203 = smul.u32 32, %s15
      %v205 = vld [vmem:[%s196] sm:$0xff]
      %v206 = vld [vmem:[%s196 + $0x8] sm:$0xff]
      %v207 = vld [vmem:[%s196 + $0x10] sm:$0xff]
      %v208 = vld [vmem:[%s196 + $0x18] sm:$0xff]
      %v209 = vld [vmem:[%s196 + $0x20] sm:$0xff]
      %v210 = vld [vmem:[%s196 + $0x28] sm:$0xff]
      %v211 = vld [vmem:[%s196 + $0x30] sm:$0xff]
      %v212 = vld [vmem:[%s196 + $0x38] sm:$0xff]
      %v213 = vld [vmem:[%s196 + $0x40] sm:$0xff]
      %v214 = vld [vmem:[%s196 + $0x48] sm:$0xff]
      %v215 = vld [vmem:[%s196 + $0x50] sm:$0xff]
      %v216 = vld [vmem:[%s196 + $0x58] sm:$0xff]
      %v217 = vld [vmem:[%s196 + $0x60] sm:$0xff]
      %v218 = vld [vmem:[%s196 + $0x68] sm:$0xff]
      %v219 = vld [vmem:[%s196 + $0x70] sm:$0xff]
      %v220 = vld [vmem:[%s196 + $0x78] sm:$0xff]
      %v221 = vld [vmem:[%s196 + $0x80] sm:$0xff]
      %v222 = vld [vmem:[%s196 + $0x88] sm:$0xff]
      %v223 = vld [vmem:[%s196 + $0x90] sm:$0xff]
      %v224 = vld [vmem:[%s196 + $0x98] sm:$0xff]
      %v225 = vld [vmem:[%s196 + $0xa0] sm:$0xff]
      %v226 = vld [vmem:[%s196 + $0xa8] sm:$0xff]
      %v227 = vld [vmem:[%s196 + $0xb0] sm:$0xff]
      %v228 = vld [vmem:[%s196 + $0xb8] sm:$0xff]
      %v229 = vld [vmem:[%s196 + $0xc0] sm:$0xff]
      %v230 = vld [vmem:[%s196 + $0xc8] sm:$0xff]
      %v231 = vld [vmem:[%s196 + $0xd0] sm:$0xff]
      %v232 = vld [vmem:[%s196 + $0xd8] sm:$0xff]
      %v233 = vld [vmem:[%s196 + $0xe0] sm:$0xff]
      %v234 = vld [vmem:[%s196 + $0xe8] sm:$0xff]
      %v235 = vld [vmem:[%s196 + $0xf0] sm:$0xff]
      %v236 = vld [vmem:[%s196 + $0xf8] sm:$0xff]
      %v237 = vld [vmem:[%s1] sm:$0xf]
      %v238 = vld [vmem:[%s1 + $0x4] sm:$0xf]
      %v239 = vld [vmem:[%s1 + $0x8] sm:$0xf]
      %v240 = vld [vmem:[%s1 + $0xc] sm:$0xf]
      %v241 = vld [vmem:[%s1 + $0x10] sm:$0xf]
      %v242 = vld [vmem:[%s1 + $0x14] sm:$0xf]
      %v243 = vld [vmem:[%s1 + $0x18] sm:$0xf]
      %v244 = vld [vmem:[%s1 + $0x1c] sm:$0xf]
      %v245 = vld [vmem:[%s1 + $0x20] sm:$0xf]
      %v246 = vld [vmem:[%s1 + $0x24] sm:$0xf]
      %v247 = vld [vmem:[%s1 + $0x28] sm:$0xf]
      %v248 = vld [vmem:[%s1 + $0x2c] sm:$0xf]
      %v249 = vld [vmem:[%s1 + $0x30] sm:$0xf]
      %v250 = vld [vmem:[%s1 + $0x34] sm:$0xf]
      %v251 = vld [vmem:[%s1 + $0x38] sm:$0xf]
      %v252 = vld [vmem:[%s1 + $0x3c] sm:$0xf]
      %v253 = vld [vmem:[%s1 + $0x40] sm:$0xf]
      %v254 = vld [vmem:[%s1 + $0x44] sm:$0xf]
      %v255 = vld [vmem:[%s1 + $0x48] sm:$0x3]
      %v288 = vunpack.c.l.b16 %v205
      %v289 = vunpack.c.h.b16 %v205
      %v290 = vunpack.c.l.b16 %v206
      %v291 = vunpack.c.h.b16 %v206
      %v292 = vunpack.c.l.b16 %v207
      %v293 = vunpack.c.h.b16 %v207
      %v294 = vunpack.c.l.b16 %v208
      %v295 = vunpack.c.h.b16 %v208
      %v296 = vunpack.c.l.b16 %v209
      %v297 = vunpack.c.h.b16 %v209
      %v298 = vunpack.c.l.b16 %v210
      %v299 = vunpack.c.h.b16 %v210
      %v300 = vunpack.c.l.b16 %v211
      %v301 = vunpack.c.h.b16 %v211
      %v302 = vunpack.c.l.b16 %v212
      %v303 = vunpack.c.h.b16 %v212
      %v304 = vunpack.c.l.b16 %v213
      %v305 = vunpack.c.h.b16 %v213
      %v306 = vunpack.c.l.b16 %v214
      %v307 = vunpack.c.h.b16 %v214
      %v308 = vunpack.c.l.b16 %v215
      %v309 = vunpack.c.h.b16 %v215
      %v310 = vunpack.c.l.b16 %v216
      %v311 = vunpack.c.h.b16 %v216
      %v312 = vunpack.c.l.b16 %v217
      %v313 = vunpack.c.h.b16 %v217
      %v314 = vunpack.c.l.b16 %v218
      %v315 = vunpack.c.h.b16 %v218
      %v316 = vunpack.c.l.b16 %v219
      %v317 = vunpack.c.h.b16 %v219
      %v318 = vunpack.c.l.b16 %v220
      %v319 = vunpack.c.h.b16 %v220
      %v320 = vunpack.c.l.b16 %v221
      %v321 = vunpack.c.h.b16 %v221
      %v322 = vunpack.c.l.b16 %v222
      %v323 = vunpack.c.h.b16 %v222
      %v324 = vunpack.c.l.b16 %v223
      %v325 = vunpack.c.h.b16 %v223
      %v326 = vunpack.c.l.b16 %v224
      %v327 = vunpack.c.h.b16 %v224
      %v328 = vunpack.c.l.b16 %v225
      %v329 = vunpack.c.h.b16 %v225
      %v330 = vunpack.c.l.b16 %v226
      %v331 = vunpack.c.h.b16 %v226
      %v332 = vunpack.c.l.b16 %v227
      %v333 = vunpack.c.h.b16 %v227
      %v334 = vunpack.c.l.b16 %v228
      %v335 = vunpack.c.h.b16 %v228
      %v336 = vunpack.c.l.b16 %v229
      %v337 = vunpack.c.h.b16 %v229
      %v338 = vunpack.c.l.b16 %v230
      %v339 = vunpack.c.h.b16 %v230
      %v340 = vunpack.c.l.b16 %v231
      %v341 = vunpack.c.h.b16 %v231
      %v342 = vunpack.c.l.b16 %v232
      %v343 = vunpack.c.h.b16 %v232
      %v344 = vunpack.c.l.b16 %v233
      %v345 = vunpack.c.h.b16 %v233
      %v346 = vunpack.c.l.b16 %v234
      %v347 = vunpack.c.h.b16 %v234
      %v348 = vunpack.c.l.b16 %v235
      %v349 = vunpack.c.h.b16 %v235
      %v350 = vunpack.c.l.b16 %v236
      %v351 = vunpack.c.h.b16 %v236
      %v352 = vpack.c.b16 %v290, %v288
      %v353 = vpack.c.b16 %v291, %v289
      %v354 = vpack.c.b16 %v294, %v292
      %v355 = vpack.c.b16 %v295, %v293
      %v356 = vpack.c.b16 %v298, %v296
      %v357 = vpack.c.b16 %v299, %v297
      %v358 = vpack.c.b16 %v302, %v300
      %v359 = vpack.c.b16 %v303, %v301
      %v360 = vpack.c.b16 %v306, %v304
      %v361 = vpack.c.b16 %v307, %v305
      %v362 = vpack.c.b16 %v310, %v308
      %v363 = vpack.c.b16 %v311, %v309
      %v364 = vpack.c.b16 %v314, %v312
      %v365 = vpack.c.b16 %v315, %v313
      %v366 = vpack.c.b16 %v318, %v316
      %v367 = vpack.c.b16 %v319, %v317
      %v368 = vpack.c.b16 %v322, %v320
      %v369 = vpack.c.b16 %v323, %v321
      %v370 = vpack.c.b16 %v326, %v324
      %v371 = vpack.c.b16 %v327, %v325
      %v372 = vpack.c.b16 %v330, %v328
      %v373 = vpack.c.b16 %v331, %v329
      %v374 = vpack.c.b16 %v334, %v332
      %v375 = vpack.c.b16 %v335, %v333
      %v376 = vpack.c.b16 %v338, %v336
      %v377 = vpack.c.b16 %v339, %v337
      %v378 = vpack.c.b16 %v342, %v340
      %v379 = vpack.c.b16 %v343, %v341
      %v380 = vpack.c.b16 %v346, %v344
      %v381 = vpack.c.b16 %v347, %v345
      %v382 = vpack.c.b16 %v350, %v348
      %v383 = vpack.c.b16 %v351, %v349
      %v419 = vunpack.c.l.b16 %v237
      %v420 = vunpack.c.l.b16 %v238
      %v421 = vunpack.c.l.b16 %v239
      %v422 = vunpack.c.l.b16 %v240
      %v423 = vunpack.c.l.b16 %v241
      %v424 = vunpack.c.l.b16 %v242
      %v425 = vunpack.c.l.b16 %v243
      %v426 = vunpack.c.l.b16 %v244
      %v427 = vunpack.c.l.b16 %v245
      %v428 = vunpack.c.l.b16 %v246
      %v429 = vunpack.c.l.b16 %v247
      %v430 = vunpack.c.l.b16 %v248
      %v431 = vunpack.c.l.b16 %v249
      %v432 = vunpack.c.l.b16 %v250
      %v433 = vunpack.c.l.b16 %v251
      %v434 = vunpack.c.l.b16 %v252
      %v435 = vunpack.c.l.b16 %v253
      %v436 = vunpack.c.l.b16 %v254
      %v437 = vunpack.c.l.b16 %v255
      %v438 = vpack.c.b16 %v420, %v419
      %v439 = vpack.c.b16 %v422, %v421
      %v440 = vpack.c.b16 %v424, %v423
      %v441 = vpack.c.b16 %v426, %v425
      %v442 = vpack.c.b16 %v428, %v427
      %v443 = vpack.c.b16 %v430, %v429
      %v444 = vpack.c.b16 %v432, %v431
      %v445 = vpack.c.b16 %v434, %v433
      %v446 = vpack.c.b16 %v436, %v435
      %v447 = vpack.c.b16 %v437, %v437
      %vm457 = vcmask 154624
      %v459 = vsel %vm457, %v353, 0
      %v462 = vsel %vm457, %v355, 0
      %v465 = vsel %vm457, %v357, 0
      %v468 = vsel %vm457, %v359, 0
      %v471 = vsel %vm457, %v361, 0
      %v474 = vsel %vm457, %v363, 0
      %v477 = vsel %vm457, %v365, 0
      %v480 = vsel %vm457, %v367, 0
      %v483 = vsel %vm457, %v369, 0
      %v486 = vsel %vm457, %v371, 0
      %v489 = vsel %vm457, %v373, 0
      %v492 = vsel %vm457, %v375, 0
      %v495 = vsel %vm457, %v377, 0
      %v498 = vsel %vm457, %v379, 0
      %v501 = vsel %vm457, %v381, 0
      %v504 = vsel %vm457, %v383, 0
      %vm506 = vcmask 1040384
      %vm507 = vcmask 1041408
      %v508 = vsel %vm506, 4294967295, 65535
      %v509 = vsel %vm507, %v508, 0
      %v511 = vand.u32 %v447, %v509
      %513 = vmatprep.subr.bf16.mxu0 0
      %514 = vmatpush1.bf16.msra.mxu0 %v438
      %515 = vmatprep.subr.bf16.mxu0 0
      %516 = vmatpush1.bf16.msra.mxu0 %v439
      %517 = vmatprep.subr.bf16.mxu0 0
      %518 = vmatpush1.bf16.msra.mxu0 %v440
      %519 = vmatprep.subr.bf16.mxu0 0
      %520 = vmatpush1.bf16.msra.mxu0 %v441
      %521 = vmatprep.subr.bf16.mxu0 0
      %522 = vmatpush1.bf16.msra.mxu0 %v442
      %523 = vmatprep.subr.bf16.mxu0 0
      %524 = vmatpush1.bf16.msra.mxu0 %v443
      %525 = vmatprep.subr.bf16.mxu0 0
      %526 = vmatpush1.bf16.msra.mxu0 %v444
      %527 = vmatprep.subr.bf16.mxu0 0
      %528 = vmatpush1.bf16.msra.mxu0 %v445
      %529 = vmatprep.subr.bf16.mxu0 0
      %530 = vmatpush1.bf16.msra.mxu0 %v446
      %531 = vmatprep.subr.bf16.mxu0 0
      %532 = vmatpush1.bf16.msra.mxu0 %v511
      %533 = vmatprep.subr.bf16.mxu0 0
      %534 = vmatpush1.bf16.msra.mxu0 0
      %535 = vmatprep.subr.bf16.mxu0 0
      %536 = vmatpush1.bf16.msra.mxu0 0
      %537 = vmatprep.subr.bf16.mxu0 0
      %538 = vmatpush1.bf16.msra.mxu0 0
      %539 = vmatprep.subr.bf16.mxu0 0
      %540 = vmatpush1.bf16.msra.mxu0 0
      %541 = vmatprep.subr.bf16.mxu0 0
      %542 = vmatpush1.bf16.msra.mxu0 0
      %543 = vmatprep.subr.bf16.mxu0 0
      %544 = vmatpush1.bf16.msra.mxu0 0
      %545 = vmatprep.mubr.bf16.mxu0 %v459
      %546 = vmatmul.mubr.bf16.gmra.mrb[0].mxu0 %v352
      %v547 = vpop.f32.mrb[0].mxu0
      %v548 = vadd.f32 0.0, %v547
      %v549 = vpop.f32.mrb[0].mxu0
      %v550 = vpop.f32.mrb[0].mxu0
      %v551 = vadd.f32 0.0, %v550
      %v552 = vpop.f32.mrb[0].mxu0
      %553 = vmatprep.mubr.bf16.mxu0 %v462
      %554 = vmatmul.mubr.bf16.gmra.mrb[0].mxu0 %v354
      %v555 = vpop.f32.mrb[0].mxu0
      %v556 = vadd.f32 0.0, %v555
      %v557 = vpop.f32.mrb[0].mxu0
      %v558 = vpop.f32.mrb[0].mxu0
      %v559 = vadd.f32 0.0, %v558
      %v560 = vpop.f32.mrb[0].mxu0
      %561 = vmatprep.mubr.bf16.mxu0 %v465
      %562 = vmatmul.mubr.bf16.gmra.mrb[0].mxu0 %v356
      %v563 = vpop.f32.mrb[0].mxu0
      %v564 = vadd.f32 0.0, %v563
      %v565 = vpop.f32.mrb[0].mxu0
      %v566 = vpop.f32.mrb[0].mxu0
      %v567 = vadd.f32 0.0, %v566
      %v568 = vpop.f32.mrb[0].mxu0
      %569 = vmatprep.mubr.bf16.mxu0 %v468
      %570 = vmatmul.mubr.bf16.gmra.mrb[0].mxu0 %v358
      %v571 = vpop.f32.mrb[0].mxu0
      %v572 = vadd.f32 0.0, %v571
      %v573 = vpop.f32.mrb[0].mxu0
      %v574 = vpop.f32.mrb[0].mxu0
      %v575 = vadd.f32 0.0, %v574
      %v576 = vpop.f32.mrb[0].mxu0
      %577 = vmatprep.mubr.bf16.mxu0 %v471
      %578 = vmatmul.mubr.bf16.gmra.mrb[0].mxu0 %v360
      %v579 = vpop.f32.mrb[0].mxu0
      %v580 = vadd.f32 0.0, %v579
      %v581 = vpop.f32.mrb[0].mxu0
      %v582 = vpop.f32.mrb[0].mxu0
      %v583 = vadd.f32 0.0, %v582
      %v584 = vpop.f32.mrb[0].mxu0
      %585 = vmatprep.mubr.bf16.mxu0 %v474
      %586 = vmatmul.mubr.bf16.gmra.mrb[0].mxu0 %v362
      %v587 = vpop.f32.mrb[0].mxu0
      %v588 = vadd.f32 0.0, %v587
      %v589 = vpop.f32.mrb[0].mxu0
      %v590 = vpop.f32.mrb[0].mxu0
      %v591 = vadd.f32 0.0, %v590
      %v592 = vpop.f32.mrb[0].mxu0
      %593 = vmatprep.mubr.bf16.mxu0 %v477
      %594 = vmatmul.mubr.bf16.gmra.mrb[0].mxu0 %v364
      %v595 = vpop.f32.mrb[0].mxu0
      %v596 = vadd.f32 0.0, %v595
      %v597 = vpop.f32.mrb[0].mxu0
      %v598 = vpop.f32.mrb[0].mxu0
      %v599 = vadd.f32 0.0, %v598
      %v600 = vpop.f32.mrb[0].mxu0
      %601 = vmatprep.mubr.bf16.mxu0 %v480
      %602 = vmatmul.mubr.bf16.gmra.mrb[0].mxu0 %v366
      %v603 = vpop.f32.mrb[0].mxu0
      %v604 = vadd.f32 0.0, %v603
      %v605 = vpop.f32.mrb[0].mxu0
      %v606 = vpop.f32.mrb[0].mxu0
      %v607 = vadd.f32 0.0, %v606
      %v608 = vpop.f32.mrb[0].mxu0
      %609 = vmatprep.mubr.bf16.mxu0 %v483
      %610 = vmatmul.mubr.bf16.gmra.mrb[0].mxu0 %v368
      %v611 = vpop.f32.mrb[0].mxu0
      %v612 = vadd.f32 0.0, %v611
      %v613 = vpop.f32.mrb[0].mxu0
      %v614 = vpop.f32.mrb[0].mxu0
      %v615 = vadd.f32 0.0, %v614
      %v616 = vpop.f32.mrb[0].mxu0
      %617 = vmatprep.mubr.bf16.mxu0 %v486
      %618 = vmatmul.mubr.bf16.gmra.mrb[0].mxu0 %v370
      %v619 = vpop.f32.mrb[0].mxu0
      %v620 = vadd.f32 0.0, %v619
      %v621 = vpop.f32.mrb[0].mxu0
      %v622 = vpop.f32.mrb[0].mxu0
      %v623 = vadd.f32 0.0, %v622
      %v624 = vpop.f32.mrb[0].mxu0
      %625 = vmatprep.mubr.bf16.mxu0 %v489
      %626 = vmatmul.mubr.bf16.gmra.mrb[0].mxu0 %v372
      %v627 = vpop.f32.mrb[0].mxu0
      %v628 = vadd.f32 0.0, %v627
      %v629 = vpop.f32.mrb[0].mxu0
      %v630 = vpop.f32.mrb[0].mxu0
      %v631 = vadd.f32 0.0, %v630
      %v632 = vpop.f32.mrb[0].mxu0
      %633 = vmatprep.mubr.bf16.mxu0 %v492
      %634 = vmatmul.mubr.bf16.gmra.mrb[0].mxu0 %v374
      %v635 = vpop.f32.mrb[0].mxu0
      %v636 = vadd.f32 0.0, %v635
      %v637 = vpop.f32.mrb[0].mxu0
      %v638 = vpop.f32.mrb[0].mxu0
      %v639 = vadd.f32 0.0, %v638
      %v640 = vpop.f32.mrb[0].mxu0
      %641 = vmatprep.mubr.bf16.mxu0 %v495
      %642 = vmatmul.mubr.bf16.gmra.mrb[0].mxu0 %v376
      %v643 = vpop.f32.mrb[0].mxu0
      %v644 = vadd.f32 0.0, %v643
      %v645 = vpop.f32.mrb[0].mxu0
      %v646 = vpop.f32.mrb[0].mxu0
      %v647 = vadd.f32 0.0, %v646
      %v648 = vpop.f32.mrb[0].mxu0
      %649 = vmatprep.mubr.bf16.mxu0 %v498
      %650 = vmatmul.mubr.bf16.gmra.mrb[0].mxu0 %v378
      %v651 = vpop.f32.mrb[0].mxu0
      %v652 = vadd.f32 0.0, %v651
      %v653 = vpop.f32.mrb[0].mxu0
      %v654 = vpop.f32.mrb[0].mxu0
      %v655 = vadd.f32 0.0, %v654
      %v656 = vpop.f32.mrb[0].mxu0
      %657 = vmatprep.mubr.bf16.mxu0 %v501
      %658 = vmatmul.mubr.bf16.gmra.mrb[0].mxu0 %v380
      %v659 = vpop.f32.mrb[0].mxu0
      %v660 = vadd.f32 0.0, %v659
      %v661 = vpop.f32.mrb[0].mxu0
      %v662 = vpop.f32.mrb[0].mxu0
      %v663 = vadd.f32 0.0, %v662
      %v664 = vpop.f32.mrb[0].mxu0
      %665 = vmatprep.mubr.bf16.mxu0 %v504
      %666 = vmatmul.mubr.bf16.gmra.mrb[0].mxu0 %v382
      %v667 = vpop.f32.mrb[0].mxu0
      %v668 = vadd.f32 0.0, %v667
      %v669 = vpop.f32.mrb[0].mxu0
      %v670 = vpop.f32.mrb[0].mxu0
      %v671 = vadd.f32 0.0, %v670
      %v672 = vpop.f32.mrb[0].mxu0
      %673 = vdwg.mxu0
      %v674 = vld [vmem:[%s2] sm:$0x1]
      %v676 = vlaneseq
      %v677 = vshrl.u32 %v676, 7
      %v678 = vsub.s32 0, %v677
      %v679 = vrot.slane %v674, %v678
      %v681 = vmul.f32 %v548, %v679
      %v682 = vmul.f32 %v551, %v679
      %v683 = vmul.f32 %v556, %v679
      %v684 = vmul.f32 %v559, %v679
      %v685 = vmul.f32 %v564, %v679
      %v686 = vmul.f32 %v567, %v679
      %v687 = vmul.f32 %v572, %v679
      %v688 = vmul.f32 %v575, %v679
      %v689 = vmul.f32 %v580, %v679
      %v690 = vmul.f32 %v583, %v679
      %v691 = vmul.f32 %v588, %v679
      %v692 = vmul.f32 %v591, %v679
      %v693 = vmul.f32 %v596, %v679
      %v694 = vmul.f32 %v599, %v679
      %v695 = vmul.f32 %v604, %v679
      %v696 = vmul.f32 %v607, %v679
      %v697 = vmul.f32 %v612, %v679
      %v698 = vmul.f32 %v615, %v679
      %v699 = vmul.f32 %v620, %v679
      %v700 = vmul.f32 %v623, %v679
      %v701 = vmul.f32 %v628, %v679
      %v702 = vmul.f32 %v631, %v679
      %v703 = vmul.f32 %v636, %v679
      %v704 = vmul.f32 %v639, %v679
      %v705 = vmul.f32 %v644, %v679
      %v706 = vmul.f32 %v647, %v679
      %v707 = vmul.f32 %v652, %v679
      %v708 = vmul.f32 %v655, %v679
      %v709 = vmul.f32 %v660, %v679
      %v710 = vmul.f32 %v663, %v679
      %v711 = vmul.f32 %v668, %v679
      %v712 = vmul.f32 %v671, %v679
      %v713 = vld [vmem:[%s3] sm:$0x1]
      %v715 = vlaneseq
      %v716 = vshrl.u32 %v715, 7
      %v717 = vsub.s32 0, %v716
      %v718 = vrot.slane %v713, %v717
      %v720 = vadd.f32 %v681, %v718
      %v721 = vadd.f32 %v682, %v718
      %v722 = vadd.f32 %v683, %v718
      %v723 = vadd.f32 %v684, %v718
      %v724 = vadd.f32 %v685, %v718
      %v725 = vadd.f32 %v686, %v718
      %v726 = vadd.f32 %v687, %v718
      %v727 = vadd.f32 %v688, %v718
      %v728 = vadd.f32 %v689, %v718
      %v729 = vadd.f32 %v690, %v718
      %v730 = vadd.f32 %v691, %v718
      %v731 = vadd.f32 %v692, %v718
      %v732 = vadd.f32 %v693, %v718
      %v733 = vadd.f32 %v694, %v718
      %v734 = vadd.f32 %v695, %v718
      %v735 = vadd.f32 %v696, %v718
      %v736 = vadd.f32 %v697, %v718
      %v737 = vadd.f32 %v698, %v718
      %v738 = vadd.f32 %v699, %v718
      %v739 = vadd.f32 %v700, %v718
      %v740 = vadd.f32 %v701, %v718
      %v741 = vadd.f32 %v702, %v718
      %v742 = vadd.f32 %v703, %v718
      %v743 = vadd.f32 %v704, %v718
      %v744 = vadd.f32 %v705, %v718
      %v745 = vadd.f32 %v706, %v718
      %v746 = vadd.f32 %v707, %v718
      %v747 = vadd.f32 %v708, %v718
      %v748 = vadd.f32 %v709, %v718
      %v749 = vadd.f32 %v710, %v718
      %v750 = vadd.f32 %v711, %v718
      %v751 = vadd.f32 %v712, %v718
      %v752 = vmax.f32 %v720, 0.0
      %v753 = vmax.f32 %v721, 0.0
      %v754 = vmax.f32 %v722, 0.0
      %v755 = vmax.f32 %v723, 0.0
      %v756 = vmax.f32 %v724, 0.0
      %v757 = vmax.f32 %v725, 0.0
      %v758 = vmax.f32 %v726, 0.0
      %v759 = vmax.f32 %v727, 0.0
      %v760 = vmax.f32 %v728, 0.0
      %v761 = vmax.f32 %v729, 0.0
      %v762 = vmax.f32 %v730, 0.0
      %v763 = vmax.f32 %v731, 0.0
      %v764 = vmax.f32 %v732, 0.0
      %v765 = vmax.f32 %v733, 0.0
      %v766 = vmax.f32 %v734, 0.0
      %v767 = vmax.f32 %v735, 0.0
      %v768 = vmax.f32 %v736, 0.0
      %v769 = vmax.f32 %v737, 0.0
      %v770 = vmax.f32 %v738, 0.0
      %v771 = vmax.f32 %v739, 0.0
      %v772 = vmax.f32 %v740, 0.0
      %v773 = vmax.f32 %v741, 0.0
      %v774 = vmax.f32 %v742, 0.0
      %v775 = vmax.f32 %v743, 0.0
      %v776 = vmax.f32 %v744, 0.0
      %v777 = vmax.f32 %v745, 0.0
      %v778 = vmax.f32 %v746, 0.0
      %v779 = vmax.f32 %v747, 0.0
      %v780 = vmax.f32 %v748, 0.0
      %v781 = vmax.f32 %v749, 0.0
      %v782 = vmax.f32 %v750, 0.0
      %v783 = vmax.f32 %v751, 0.0
      %v784 = vpack.c.bf16 %v753, %v752
      %v785 = vpack.c.bf16 %v755, %v754
      %v786 = vpack.c.bf16 %v757, %v756
      %v787 = vpack.c.bf16 %v759, %v758
      %v788 = vpack.c.bf16 %v761, %v760
      %v789 = vpack.c.bf16 %v763, %v762
      %v790 = vpack.c.bf16 %v765, %v764
      %v791 = vpack.c.bf16 %v767, %v766
      %v792 = vpack.c.bf16 %v769, %v768
      %v793 = vpack.c.bf16 %v771, %v770
      %v794 = vpack.c.bf16 %v773, %v772
      %v795 = vpack.c.bf16 %v775, %v774
      %v796 = vpack.c.bf16 %v777, %v776
      %v797 = vpack.c.bf16 %v779, %v778
      %v798 = vpack.c.bf16 %v781, %v780
      %v799 = vpack.c.bf16 %v783, %v782
      %v816 = vunpack.c.l.b16 %v784
      %v817 = vunpack.c.h.b16 %v784
      %v818 = vunpack.c.l.b16 %v785
      %v819 = vunpack.c.h.b16 %v785
      %v820 = vunpack.c.l.b16 %v786
      %v821 = vunpack.c.h.b16 %v786
      %v822 = vunpack.c.l.b16 %v787
      %v823 = vunpack.c.h.b16 %v787
      %v824 = vunpack.c.l.b16 %v788
      %v825 = vunpack.c.h.b16 %v788
      %v826 = vunpack.c.l.b16 %v789
      %v827 = vunpack.c.h.b16 %v789
      %v828 = vunpack.c.l.b16 %v790
      %v829 = vunpack.c.h.b16 %v790
      %v830 = vunpack.c.l.b16 %v791
      %v831 = vunpack.c.h.b16 %v791
      %v832 = vunpack.c.l.b16 %v792
      %v833 = vunpack.c.h.b16 %v792
      %v834 = vunpack.c.l.b16 %v793
      %v835 = vunpack.c.h.b16 %v793
      %v836 = vunpack.c.l.b16 %v794
      %v837 = vunpack.c.h.b16 %v794
      %v838 = vunpack.c.l.b16 %v795
      %v839 = vunpack.c.h.b16 %v795
      %v840 = vunpack.c.l.b16 %v796
      %v841 = vunpack.c.h.b16 %v796
      %v842 = vunpack.c.l.b16 %v797
      %v843 = vunpack.c.h.b16 %v797
      %v844 = vunpack.c.l.b16 %v798
      %v845 = vunpack.c.h.b16 %v798
      %v846 = vunpack.c.l.b16 %v799
      %v847 = vunpack.c.h.b16 %v799
      %v848 = vpack.c.b16 %v816, %v816
      %v849 = vpack.c.b16 %v817, %v817
      %v850 = vpack.c.b16 %v818, %v818
      %v851 = vpack.c.b16 %v819, %v819
      %v852 = vpack.c.b16 %v820, %v820
      %v853 = vpack.c.b16 %v821, %v821
      %v854 = vpack.c.b16 %v822, %v822
      %v855 = vpack.c.b16 %v823, %v823
      %v856 = vpack.c.b16 %v824, %v824
      %v857 = vpack.c.b16 %v825, %v825
      %v858 = vpack.c.b16 %v826, %v826
      %v859 = vpack.c.b16 %v827, %v827
      %v860 = vpack.c.b16 %v828, %v828
      %v861 = vpack.c.b16 %v829, %v829
      %v862 = vpack.c.b16 %v830, %v830
      %v863 = vpack.c.b16 %v831, %v831
      %v864 = vpack.c.b16 %v832, %v832
      %v865 = vpack.c.b16 %v833, %v833
      %v866 = vpack.c.b16 %v834, %v834
      %v867 = vpack.c.b16 %v835, %v835
      %v868 = vpack.c.b16 %v836, %v836
      %v869 = vpack.c.b16 %v837, %v837
      %v870 = vpack.c.b16 %v838, %v838
      %v871 = vpack.c.b16 %v839, %v839
      %v872 = vpack.c.b16 %v840, %v840
      %v873 = vpack.c.b16 %v841, %v841
      %v874 = vpack.c.b16 %v842, %v842
      %v875 = vpack.c.b16 %v843, %v843
      %v876 = vpack.c.b16 %v844, %v844
      %v877 = vpack.c.b16 %v845, %v845
      %v878 = vpack.c.b16 %v846, %v846
      %v879 = vpack.c.b16 %v847, %v847
      %vm912 = vcmask 60416
      %913 = vst.msk [vmem:[%s202] sm:$0xf] %vm912, %v848
      %914 = vst.msk [vmem:[%s202 + $0x4] sm:$0xf] %vm912, %v849
      %915 = vst.msk [vmem:[%s202 + $0x8] sm:$0xf] %vm912, %v850
      %916 = vst.msk [vmem:[%s202 + $0xc] sm:$0xf] %vm912, %v851
      %917 = vst.msk [vmem:[%s202 + $0x10] sm:$0xf] %vm912, %v852
      %918 = vst.msk [vmem:[%s202 + $0x14] sm:$0xf] %vm912, %v853
      %919 = vst.msk [vmem:[%s202 + $0x18] sm:$0xf] %vm912, %v854
      %920 = vst.msk [vmem:[%s202 + $0x1c] sm:$0xf] %vm912, %v855
      %921 = vst.msk [vmem:[%s202 + $0x20] sm:$0xf] %vm912, %v856
      %922 = vst.msk [vmem:[%s202 + $0x24] sm:$0xf] %vm912, %v857
      %923 = vst.msk [vmem:[%s202 + $0x28] sm:$0xf] %vm912, %v858
      %924 = vst.msk [vmem:[%s202 + $0x2c] sm:$0xf] %vm912, %v859
      %925 = vst.msk [vmem:[%s202 + $0x30] sm:$0xf] %vm912, %v860
      %926 = vst.msk [vmem:[%s202 + $0x34] sm:$0xf] %vm912, %v861
      %927 = vst.msk [vmem:[%s202 + $0x38] sm:$0xf] %vm912, %v862
      %928 = vst.msk [vmem:[%s202 + $0x3c] sm:$0xf] %vm912, %v863
      %929 = vst.msk [vmem:[%s202 + $0x40] sm:$0xf] %vm912, %v864
      %930 = vst.msk [vmem:[%s202 + $0x44] sm:$0xf] %vm912, %v865
      %931 = vst.msk [vmem:[%s202 + $0x48] sm:$0xf] %vm912, %v866
      %932 = vst.msk [vmem:[%s202 + $0x4c] sm:$0xf] %vm912, %v867
      %933 = vst.msk [vmem:[%s202 + $0x50] sm:$0xf] %vm912, %v868
      %934 = vst.msk [vmem:[%s202 + $0x54] sm:$0xf] %vm912, %v869
      %935 = vst.msk [vmem:[%s202 + $0x58] sm:$0xf] %vm912, %v870
      %936 = vst.msk [vmem:[%s202 + $0x5c] sm:$0xf] %vm912, %v871
      %937 = vst.msk [vmem:[%s202 + $0x60] sm:$0xf] %vm912, %v872
      %938 = vst.msk [vmem:[%s202 + $0x64] sm:$0xf] %vm912, %v873
      %939 = vst.msk [vmem:[%s202 + $0x68] sm:$0xf] %vm912, %v874
      %940 = vst.msk [vmem:[%s202 + $0x6c] sm:$0xf] %vm912, %v875
      %941 = vst.msk [vmem:[%s202 + $0x70] sm:$0xf] %vm912, %v876
      %942 = vst.msk [vmem:[%s202 + $0x74] sm:$0xf] %vm912, %v877
      %943 = vst.msk [vmem:[%s202 + $0x78] sm:$0xf] %vm912, %v878
      %944 = vst.msk [vmem:[%s202 + $0x7c] sm:$0xf] %vm912, %v879
      %s945 = smul.u32 32, %s15
      %p946 = scmp.lt.s32.totalorder %s945, 63
      %s947 = scalar_select %p946, %s945, 63
      %s948 = smul.addr %s947, 4
      %s949 = scalar_lea.vmem %s4, %s948
      // Predicated region
      $region37: #{resnet_features.20} parent=35 // pred_check
        %p950 = pneg %p122
      $region38: #{resnet_features.20} parent=35 // pred_check_branch
        %952 = sbr.rel (%p950) target = $region40
      $region39: #{resnet_features.20} parent=35 // pred_region
        %s953 = smul.u32 32, %s15
      $region40: #{resnet_features.20} parent=35 // pred_fallthru
        _
    $region36: #{resnet_features.20} parent=5 // pred_fallthru
      _
    %p954 = scmp.le.s32.totalorder 2, %s10
    // Predicated region
    $region41: #{resnet_features.20} parent=5 // pred_check
      %p955 = pneg %p954
    $region42: #{resnet_features.20} parent=5 // pred_check_branch
      %957 = sbr.rel (%p955) target = $region44
    $region43: #{resnet_features.20} parent=5 // pred_region
      %s958 = ssub.s32 %s10, 2
      // Predicated region
      $region45: #{resnet_features.20} parent=43 // pred_check
        %p959 = pneg %p128
      $region46: #{resnet_features.20} parent=43 // pred_check_branch
        %961 = sbr.rel (%p959) target = $region48
      $region47: #{resnet_features.20} parent=43 // pred_region
        %s962 = smul.u32 32, %s16
        %p963 = scmp.lt.s32.totalorder %s962, 63
        %s964 = scalar_select %p963, %s962, 63
        %s965 = smul.addr %s964, 4
        %s966 = scalar_lea.vmem %s4, %s965
      $region48: #{resnet_features.20} parent=43 // pred_fallthru
        _
    $region44: #{resnet_features.20} parent=5 // pred_fallthru
      _
  $region6: #{resnet_features.20} parent=0 // loop_footer
    %s14 = sadd.s32 1, %s10
  $region7: #{resnet_features.20} parent=0 // loop_footer_branch
    %9 = sbr.rel target = $region3
  $region8: #{resnet_features.20} parent=0 // loop_exit
    _

// kernel: resnet_features.21
$region0: #{resnet_features.21}
  #allocation0 [shape = 'u32[]', space=smem, size = 0x4, offset = 0x4, fixed_abs, tag = 'smem constant byte address 0x4 - core index']
  #allocation1 [shape = 'u32[144,128]{1,0:T(1,128)}', space=vmem, size = 0x12000, scoped, tag = 'internal scratch']
  %s0 = inlined_call_operand.vmem [shape: bf16[128,72], index: 0, kind: input, shape index: {}]
  %s1 = inlined_call_operand.vmem [shape: bf16[72,8], index: 1, kind: input, shape index: {}]
  %s2 = inlined_call_operand.vmem [shape: f32[1,8], index: 2, kind: input, shape index: {}]
  %s3 = inlined_call_operand.vmem [shape: f32[1,8], index: 3, kind: input, shape index: {}]
  %s4 = inlined_call_operand.vmem [shape: bf16[128,8], index: 4, kind: output, shape index: {}]
  %s5 = sld [smem:[#allocation0]]
  $region26: #{resnet_features.21} parent=0
    _
  %s7 = ssub.s32 1, %s5
  %s8 = scalar_select 0, %s7, %s5
  // Predicated region
  $region2: #{resnet_features.21} parent=0 // pred_check
    _
  $region3: #{resnet_features.21} parent=0 // pred_check_branch
    %10 = sbr.rel (0) target = $region5
  $region4: #{resnet_features.21} parent=0 // pred_region
    _
  $region5: #{resnet_features.21} parent=0 // pred_fallthru
    _
  // Predicated region
  $region6: #{resnet_features.21} parent=0 // pred_check
    _
  $region7: #{resnet_features.21} parent=0 // pred_check_branch
    %12 = sbr.rel (0) target = $region9
  $region8: #{resnet_features.21} parent=0 // pred_region
    _
  $region9: #{resnet_features.21} parent=0 // pred_fallthru
    _
  // Predicated region
  $region10: #{resnet_features.21} parent=0 // pred_check
    _
  $region11: #{resnet_features.21} parent=0 // pred_check_branch
    %14 = sbr.rel (0) target = $region13
  $region12: #{resnet_features.21} parent=0 // pred_region
    _
  $region13: #{resnet_features.21} parent=0 // pred_fallthru
    _
  // Predicated region
  $region14: #{resnet_features.21} parent=0 // pred_check
    _
  $region15: #{resnet_features.21} parent=0 // pred_check_branch
    %16 = sbr.rel (0) target = $region17
  $region16: #{resnet_features.21} parent=0 // pred_region
    _
  $region17: #{resnet_features.21} parent=0 // pred_fallthru
    _
  %v18 = vld [vmem:[%s0] sm:$0xf]
  %v19 = vld [vmem:[%s0 + $0x4] sm:$0xf]
  %v20 = vld [vmem:[%s0 + $0x8] sm:$0xf]
  %v21 = vld [vmem:[%s0 + $0xc] sm:$0xf]
  %v22 = vld [vmem:[%s0 + $0x10] sm:$0xf]
  %v23 = vld [vmem:[%s0 + $0x14] sm:$0xf]
  %v24 = vld [vmem:[%s0 + $0x18] sm:$0xf]
  %v25 = vld [vmem:[%s0 + $0x1c] sm:$0xf]
  %v26 = vld [vmem:[%s0 + $0x20] sm:$0xf]
  %v27 = vld [vmem:[%s0 + $0x24] sm:$0xf]
  %v28 = vld [vmem:[%s0 + $0x28] sm:$0xf]
  %v29 = vld [vmem:[%s0 + $0x2c] sm:$0xf]
  %v30 = vld [vmem:[%s0 + $0x30] sm:$0xf]
  %v31 = vld [vmem:[%s0 + $0x34] sm:$0xf]
  %v32 = vld [vmem:[%s0 + $0x38] sm:$0xf]
  %v33 = vld [vmem:[%s0 + $0x3c] sm:$0xf]
  %v34 = vld [vmem:[%s1] sm:$0xf]
  %v35 = vld [vmem:[%s1 + $0x4] sm:$0xf]
  %v36 = vld [vmem:[%s1 + $0x8] sm:$0xf]
  %v37 = vld [vmem:[%s1 + $0xc] sm:$0xf]
  %v38 = vld [vmem:[%s1 + $0x10] sm:$0xf]
  %v39 = vld [vmem:[%s1 + $0x14] sm:$0xf]
  %v40 = vld [vmem:[%s1 + $0x18] sm:$0xf]
  %v41 = vld [vmem:[%s1 + $0x1c] sm:$0xf]
  %v42 = vld [vmem:[%s1 + $0x20] sm:$0xf]
  %v59 = vunpack.c.l.b16 %v18
  %v60 = vunpack.c.l.b16 %v19
  %v61 = vunpack.c.l.b16 %v20
  %v62 = vunpack.c.l.b16 %v21
  %v63 = vunpack.c.l.b16 %v22
  %v64 = vunpack.c.l.b16 %v23
  %v65 = vunpack.c.l.b16 %v24
  %v66 = vunpack.c.l.b16 %v25
  %v67 = vunpack.c.l.b16 %v26
  %v68 = vunpack.c.l.b16 %v27
  %v69 = vunpack.c.l.b16 %v28
  %v70 = vunpack.c.l.b16 %v29
  %v71 = vunpack.c.l.b16 %v30
  %v72 = vunpack.c.l.b16 %v31
  %v73 = vunpack.c.l.b16 %v32
  %v74 = vunpack.c.l.b16 %v33
  %v75 = vpack.c.b16 %v60, %v59
  %v76 = vpack.c.b16 %v62, %v61
  %v77 = vpack.c.b16 %v64, %v63
  %v78 = vpack.c.b16 %v66, %v65
  %v79 = vpack.c.b16 %v68, %v67
  %v80 = vpack.c.b16 %v70, %v69
  %v81 = vpack.c.b16 %v72, %v71
  %v82 = vpack.c.b16 %v74, %v73
  %v92 = vunpack.c.l.b16 %v34
  %v93 = vunpack.c.l.b16 %v35
  %v94 = vunpack.c.l.b16 %v36
  %v95 = vunpack.c.l.b16 %v37
  %v96 = vunpack.c.l.b16 %v38
  %v97 = vunpack.c.l.b16 %v39
  %v98 = vunpack.c.l.b16 %v40
  %v99 = vunpack.c.l.b16 %v41
  %v100 = vunpack.c.l.b16 %v42
  %v101 = vpack.c.b16 %v93, %v92
  %v102 = vpack.c.b16 %v95, %v94
  %v103 = vpack.c.b16 %v97, %v96
  %v104 = vpack.c.b16 %v99, %v98
  %v105 = vpack.c.b16 %v100, %v100
  %vm110 = vcmask 588800
  %v112 = vsel %vm110, %v75, 0
  %v115 = vsel %vm110, %v76, 0
  %v118 = vsel %vm110, %v77, 0
  %v121 = vsel %vm110, %v78, 0
  %v124 = vsel %vm110, %v79, 0
  %v127 = vsel %vm110, %v80, 0
  %v130 = vsel %vm110, %v81, 0
  %v133 = vsel %vm110, %v82, 0
  %vm135 = vcmask 1043456
  %v137 = vsel %vm135, %v105, 0
  %139 = vmatprep.subr.bf16.mxu0 0
  %140 = vmatpush1.bf16.msra.mxu0 %v101
  %141 = vmatprep.subr.bf16.mxu0 0
  %142 = vmatpush1.bf16.msra.mxu0 %v102
  %143 = vmatprep.subr.bf16.mxu0 0
  %144 = vmatpush1.bf16.msra.mxu0 %v103
  %145 = vmatprep.subr.bf16.mxu0 0
  %146 = vmatpush1.bf16.msra.mxu0 %v104
  %147 = vmatprep.subr.bf16.mxu0 0
  %148 = vmatpush1.bf16.msra.mxu0 %v137
  %149 = vmatprep.subr.bf16.mxu0 0
  %150 = vmatpush1.bf16.msra.mxu0 0
  %151 = vmatprep.subr.bf16.mxu0 0
  %152 = vmatpush1.bf16.msra.mxu0 0
  %153 = vmatprep.subr.bf16.mxu0 0
  %154 = vmatpush1.bf16.msra.mxu0 0
  %155 = vmatprep.subr.bf16.mxu0 0
  %156 = vmatpush1.bf16.msra.mxu0 0
  %157 = vmatprep.subr.bf16.mxu0 0
  %158 = vmatpush1.bf16.msra.mxu0 0
  %159 = vmatprep.subr.bf16.mxu0 0
  %160 = vmatpush1.bf16.msra.mxu0 0
  %161 = vmatprep.subr.bf16.mxu0 0
  %162 = vmatpush1.bf16.msra.mxu0 0
  %163 = vmatprep.subr.bf16.mxu0 0
  %164 = vmatpush1.bf16.msra.mxu0 0
  %165 = vmatprep.subr.bf16.mxu0 0
  %166 = vmatpush1.bf16.msra.mxu0 0
  %167 = vmatprep.subr.bf16.mxu0 0
  %168 = vmatpush1.bf16.msra.mxu0 0
  %169 = vmatprep.subr.bf16.mxu0 0
  %170 = vmatpush1.bf16.msra.mxu0 0
  %171 = vmatprep.mubr.bf16.mxu0 0
  %172 = vmatmul.mubr.bf16.gmra.mrb[0].mxu0 %v112
  %v173 = vpop.f32.mrb[0].mxu0
  %v174 = vadd.f32 0.0, %v173
  %v175 = vpop.f32.mrb[0].mxu0
  %v176 = vpop.f32.mrb[0].mxu0
  %v177 = vadd.f32 0.0, %v176
  %v178 = vpop.f32.mrb[0].mxu0
  %179 = vmatprep.mubr.bf16.mxu0 0
  %180 = vmatmul.mubr.bf16.gmra.mrb[0].mxu0 %v115
  %v181 = vpop.f32.mrb[0].mxu0
  %v182 = vadd.f32 0.0, %v181
  %v183 = vpop.f32.mrb[0].mxu0
  %v184 = vpop.f32.mrb[0].mxu0
  %v185 = vadd.f32 0.0, %v184
  %v186 = vpop.f32.mrb[0].mxu0
  %187 = vmatprep.mubr.bf16.mxu0 0
  %188 = vmatmul.mubr.bf16.gmra.mrb[0].mxu0 %v118
  %v189 = vpop.f32.mrb[0].mxu0
  %v190 = vadd.f32 0.0, %v189
  %v191 = vpop.f32.mrb[0].mxu0
  %v192 = vpop.f32.mrb[0].mxu0
  %v193 = vadd.f32 0.0, %v192
  %v194 = vpop.f32.mrb[0].mxu0
  %195 = vmatprep.mubr.bf16.mxu0 0
  %196 = vmatmul.mubr.bf16.gmra.mrb[0].mxu0 %v121
  %v197 = vpop.f32.mrb[0].mxu0
  %v198 = vadd.f32 0.0, %v197
  %v199 = vpop.f32.mrb[0].mxu0
  %v200 = vpop.f32.mrb[0].mxu0
  %v201 = vadd.f32 0.0, %v200
  %v202 = vpop.f32.mrb[0].mxu0
  %203 = vmatprep.mubr.bf16.mxu0 0
  %204 = vmatmul.mubr.bf16.gmra.mrb[0].mxu0 %v124
  %v205 = vpop.f32.mrb[0].mxu0
  %v206 = vadd.f32 0.0, %v205
  %v207 = vpop.f32.mrb[0].mxu0
  %v208 = vpop.f32.mrb[0].mxu0
  %v209 = vadd.f32 0.0, %v208
  %v210 = vpop.f32.mrb[0].mxu0
  %211 = vmatprep.mubr.bf16.mxu0 0
  %212 = vmatmul.mubr.bf16.gmra.mrb[0].mxu0 %v127
  %v213 = vpop.f32.mrb[0].mxu0
  %v214 = vadd.f32 0.0, %v213
  %v215 = vpop.f32.mrb[0].mxu0
  %v216 = vpop.f32.mrb[0].mxu0
  %v217 = vadd.f32 0.0, %v216
  %v218 = vpop.f32.mrb[0].mxu0
  %219 = vmatprep.mubr.bf16.mxu0 0
  %220 = vmatmul.mubr.bf16.gmra.mrb[0].mxu0 %v130
  %v221 = vpop.f32.mrb[0].mxu0
  %v222 = vadd.f32 0.0, %v221
  %v223 = vpop.f32.mrb[0].mxu0
  %v224 = vpop.f32.mrb[0].mxu0
  %v225 = vadd.f32 0.0, %v224
  %v226 = vpop.f32.mrb[0].mxu0
  %227 = vmatprep.mubr.bf16.mxu0 0
  %228 = vmatmul.mubr.bf16.gmra.mrb[0].mxu0 %v133
  %v229 = vpop.f32.mrb[0].mxu0
  %v230 = vadd.f32 0.0, %v229
  %v231 = vpop.f32.mrb[0].mxu0
  %v232 = vpop.f32.mrb[0].mxu0
  %v233 = vadd.f32 0.0, %v232
  %v234 = vpop.f32.mrb[0].mxu0
  %235 = vdwg.mxu0
  %v236 = vld [vmem:[%s2] sm:$0x1]
  %v238 = vlaneseq
  %v239 = vshrl.u32 %v238, 7
  %v240 = vsub.s32 0, %v239
  %v241 = vrot.slane %v236, %v240
  %v243 = vmul.f32 %v174, %v241
  %v244 = vmul.f32 %v177, %v241
  %v245 = vmul.f32 %v182, %v241
  %v246 = vmul.f32 %v185, %v241
  %v247 = vmul.f32 %v190, %v241
  %v248 = vmul.f32 %v193, %v241
  %v249 = vmul.f32 %v198, %v241
  %v250 = vmul.f32 %v201, %v241
  %v251 = vmul.f32 %v206, %v241
  %v252 = vmul.f32 %v209, %v241
  %v253 = vmul.f32 %v214, %v241
  %v254 = vmul.f32 %v217, %v241
  %v255 = vmul.f32 %v222, %v241
  %v256 = vmul.f32 %v225, %v241
  %v257 = vmul.f32 %v230, %v241
  %v258 = vmul.f32 %v233, %v241
  %v259 = vld [vmem:[%s3] sm:$0x1]
  %v261 = vlaneseq
  %v262 = vshrl.u32 %v261, 7
  %v263 = vsub.s32 0, %v262
  %v264 = vrot.slane %v259, %v263
  %v266 = vadd.f32 %v243, %v264
  %v267 = vadd.f32 %v244, %v264
  %v268 = vadd.f32 %v245, %v264
  %v269 = vadd.f32 %v246, %v264
  %v270 = vadd.f32 %v247, %v264
  %v271 = vadd.f32 %v248, %v264
  %v272 = vadd.f32 %v249, %v264
  %v273 = vadd.f32 %v250, %v264
  %v274 = vadd.f32 %v251, %v264
  %v275 = vadd.f32 %v252, %v264
  %v276 = vadd.f32 %v253, %v264
  %v277 = vadd.f32 %v254, %v264
  %v278 = vadd.f32 %v255, %v264
  %v279 = vadd.f32 %v256, %v264
  %v280 = vadd.f32 %v257, %v264
  %v281 = vadd.f32 %v258, %v264
  %v282 = vmax.f32 %v266, 0.0
  %v283 = vmax.f32 %v267, 0.0
  %v284 = vmax.f32 %v268, 0.0
  %v285 = vmax.f32 %v269, 0.0
  %v286 = vmax.f32 %v270, 0.0
  %v287 = vmax.f32 %v271, 0.0
  %v288 = vmax.f32 %v272, 0.0
  %v289 = vmax.f32 %v273, 0.0
  %v290 = vmax.f32 %v274, 0.0
  %v291 = vmax.f32 %v275, 0.0
  %v292 = vmax.f32 %v276, 0.0
  %v293 = vmax.f32 %v277, 0.0
  %v294 = vmax.f32 %v278, 0.0
  %v295 = vmax.f32 %v279, 0.0
  %v296 = vmax.f32 %v280, 0.0
  %v297 = vmax.f32 %v281, 0.0
  %v298 = vpack.c.bf16 %v283, %v282
  %v299 = vpack.c.bf16 %v285, %v284
  %v300 = vpack.c.bf16 %v287, %v286
  %v301 = vpack.c.bf16 %v289, %v288
  %v302 = vpack.c.bf16 %v291, %v290
  %v303 = vpack.c.bf16 %v293, %v292
  %v304 = vpack.c.bf16 %v295, %v294
  %v305 = vpack.c.bf16 %v297, %v296
  %v314 = vunpack.c.l.b16 %v298
  %v315 = vunpack.c.h.b16 %v298
  %v316 = vunpack.c.l.b16 %v299
  %v317 = vunpack.c.h.b16 %v299
  %v318 = vunpack.c.l.b16 %v300
  %v319 = vunpack.c.h.b16 %v300
  %v320 = vunpack.c.l.b16 %v301
  %v321 = vunpack.c.h.b16 %v301
  %v322 = vunpack.c.l.b16 %v302
  %v323 = vunpack.c.h.b16 %v302
  %v324 = vunpack.c.l.b16 %v303
  %v325 = vunpack.c.h.b16 %v303
  %v326 = vunpack.c.l.b16 %v304
  %v327 = vunpack.c.h.b16 %v304
  %v328 = vunpack.c.l.b16 %v305
  %v329 = vunpack.c.h.b16 %v305
  %v330 = vpack.c.b16 %v314, %v314
  %v331 = vpack.c.b16 %v315, %v315
  %v332 = vpack.c.b16 %v316, %v316
  %v333 = vpack.c.b16 %v317, %v317
  %v334 = vpack.c.b16 %v318, %v318
  %v335 = vpack.c.b16 %v319, %v319
  %v336 = vpack.c.b16 %v320, %v320
  %v337 = vpack.c.b16 %v321, %v321
  %v338 = vpack.c.b16 %v322, %v322
  %v339 = vpack.c.b16 %v323, %v323
  %v340 = vpack.c.b16 %v324, %v324
  %v341 = vpack.c.b16 %v325, %v325
  %v342 = vpack.c.b16 %v326, %v326
  %v343 = vpack.c.b16 %v327, %v327
  %v344 = vpack.c.b16 %v328, %v328
  %v345 = vpack.c.b16 %v329, %v329
  %vm362 = vcmask 60416
  %363 = vst.msk [vmem:[%s4] sm:$0xf] %vm362, %v330
  %364 = vst.msk [vmem:[%s4 + $0x4] sm:$0xf] %vm362, %v331
  %365 = vst.msk [vmem:[%s4 + $0x8] sm:$0xf] %vm362, %v332
  %366 = vst.msk [vmem:[%s4 + $0xc] sm:$0xf] %vm362, %v333
  %367 = vst.msk [vmem:[%s4 + $0x10] sm:$0xf] %vm362, %v334
  %368 = vst.msk [vmem:[%s4 + $0x14] sm:$0xf] %vm362, %v335
  %369 = vst.msk [vmem:[%s4 + $0x18] sm:$0xf] %vm362, %v336
  %370 = vst.msk [vmem:[%s4 + $0x1c] sm:$0xf] %vm362, %v337
  %371 = vst.msk [vmem:[%s4 + $0x20] sm:$0xf] %vm362, %v338
  %372 = vst.msk [vmem:[%s4 + $0x24] sm:$0xf] %vm362, %v339
  %373 = vst.msk [vmem:[%s4 + $0x28] sm:$0xf] %vm362, %v340
  %374 = vst.msk [vmem:[%s4 + $0x2c] sm:$0xf] %vm362, %v341
  %375 = vst.msk [vmem:[%s4 + $0x30] sm:$0xf] %vm362, %v342
  %376 = vst.msk [vmem:[%s4 + $0x34] sm:$0xf] %vm362, %v343
  %377 = vst.msk [vmem:[%s4 + $0x38] sm:$0xf] %vm362, %v344
  %378 = vst.msk [vmem:[%s4 + $0x3c] sm:$0xf] %vm362, %v345
  // Predicated region
  $region18: #{resnet_features.21} parent=0 // pred_check
    _
  $region19: #{resnet_features.21} parent=0 // pred_check_branch
    %380 = sbr.rel (0) target = $region21
  $region20: #{resnet_features.21} parent=0 // pred_region
    _
  $region21: #{resnet_features.21} parent=0 // pred_fallthru
    _
  // Predicated region
  $region22: #{resnet_features.21} parent=0 // pred_check
    _
  $region23: #{resnet_features.21} parent=0 // pred_check_branch
    %382 = sbr.rel (0) target = $region25
  $region24: #{resnet_features.21} parent=0 // pred_region
    _
  $region25: #{resnet_features.21} parent=0 // pred_fallthru
    _

// kernel: resnet_features.22
$region0: #{resnet_features.22}
  #allocation0 [shape = 'u32[]', space=smem, size = 0x4, offset = 0x4, fixed_abs, tag = 'smem constant byte address 0x4 - core index']
  #allocation1 [shape = 'u32[144,128]{1,0:T(1,128)}', space=vmem, size = 0x12000, scoped, tag = 'internal scratch']
  %s0 = inlined_call_operand.vmem [shape: bf16[128,72], index: 0, kind: input, shape index: {}]
  %s1 = inlined_call_operand.vmem [shape: bf16[72,8], index: 1, kind: input, shape index: {}]
  %s2 = inlined_call_operand.vmem [shape: f32[1,8], index: 2, kind: input, shape index: {}]
  %s3 = inlined_call_operand.vmem [shape: f32[1,8], index: 3, kind: input, shape index: {}]
  %s4 = inlined_call_operand.vmem [shape: bf16[128,8], index: 4, kind: input, shape index: {}]
  %s5 = inlined_call_operand.vmem [shape: bf16[128,8], index: 5, kind: output, shape index: {}]
  %s6 = sld [smem:[#allocation0]]
  $region30: #{resnet_features.22} parent=0
    _
  %s8 = ssub.s32 1, %s6
  %s9 = scalar_select 0, %s8, %s6
  // Predicated region
  $region2: #{resnet_features.22} parent=0 // pred_check
    _
  $region3: #{resnet_features.22} parent=0 // pred_check_branch
    %11 = sbr.rel (0) target = $region5
  $region4: #{resnet_features.22} parent=0 // pred_region
    _
  $region5: #{resnet_features.22} parent=0 // pred_fallthru
    _
  // Predicated region
  $region6: #{resnet_features.22} parent=0 // pred_check
    _
  $region7: #{resnet_features.22} parent=0 // pred_check_branch
    %13 = sbr.rel (0) target = $region9
  $region8: #{resnet_features.22} parent=0 // pred_region
    _
  $region9: #{resnet_features.22} parent=0 // pred_fallthru
    _
  // Predicated region
  $region10: #{resnet_features.22} parent=0 // pred_check
    _
  $region11: #{resnet_features.22} parent=0 // pred_check_branch
    %15 = sbr.rel (0) target = $region13
  $region12: #{resnet_features.22} parent=0 // pred_region
    _
  $region13: #{resnet_features.22} parent=0 // pred_fallthru
    _
  // Predicated region
  $region14: #{resnet_features.22} parent=0 // pred_check
    _
  $region15: #{resnet_features.22} parent=0 // pred_check_branch
    %17 = sbr.rel (0) target = $region17
  $region16: #{resnet_features.22} parent=0 // pred_region
    _
  $region17: #{resnet_features.22} parent=0 // pred_fallthru
    _
  // Predicated region
  $region18: #{resnet_features.22} parent=0 // pred_check
    _
  $region19: #{resnet_features.22} parent=0 // pred_check_branch
    %19 = sbr.rel (0) target = $region21
  $region20: #{resnet_features.22} parent=0 // pred_region
    _
  $region21: #{resnet_features.22} parent=0 // pred_fallthru
    _
  %v21 = vld [vmem:[%s0] sm:$0xf]
  %v22 = vld [vmem:[%s0 + $0x4] sm:$0xf]
  %v23 = vld [vmem:[%s0 + $0x8] sm:$0xf]
  %v24 = vld [vmem:[%s0 + $0xc] sm:$0xf]
  %v25 = vld [vmem:[%s0 + $0x10] sm:$0xf]
  %v26 = vld [vmem:[%s0 + $0x14] sm:$0xf]
  %v27 = vld [vmem:[%s0 + $0x18] sm:$0xf]
  %v28 = vld [vmem:[%s0 + $0x1c] sm:$0xf]
  %v29 = vld [vmem:[%s0 + $0x20] sm:$0xf]
  %v30 = vld [vmem:[%s0 + $0x24] sm:$0xf]
  %v31 = vld [vmem:[%s0 + $0x28] sm:$0xf]
  %v32 = vld [vmem:[%s0 + $0x2c] sm:$0xf]
  %v33 = vld [vmem:[%s0 + $0x30] sm:$0xf]
  %v34 = vld [vmem:[%s0 + $0x34] sm:$0xf]
  %v35 = vld [vmem:[%s0 + $0x38] sm:$0xf]
  %v36 = vld [vmem:[%s0 + $0x3c] sm:$0xf]
  %v37 = vld [vmem:[%s1] sm:$0xf]
  %v38 = vld [vmem:[%s1 + $0x4] sm:$0xf]
  %v39 = vld [vmem:[%s1 + $0x8] sm:$0xf]
  %v40 = vld [vmem:[%s1 + $0xc] sm:$0xf]
  %v41 = vld [vmem:[%s1 + $0x10] sm:$0xf]
  %v42 = vld [vmem:[%s1 + $0x14] sm:$0xf]
  %v43 = vld [vmem:[%s1 + $0x18] sm:$0xf]
  %v44 = vld [vmem:[%s1 + $0x1c] sm:$0xf]
  %v45 = vld [vmem:[%s1 + $0x20] sm:$0xf]
  %v62 = vunpack.c.l.b16 %v21
  %v63 = vunpack.c.l.b16 %v22
  %v64 = vunpack.c.l.b16 %v23
  %v65 = vunpack.c.l.b16 %v24
  %v66 = vunpack.c.l.b16 %v25
  %v67 = vunpack.c.l.b16 %v26
  %v68 = vunpack.c.l.b16 %v27
  %v69 = vunpack.c.l.b16 %v28
  %v70 = vunpack.c.l.b16 %v29
  %v71 = vunpack.c.l.b16 %v30
  %v72 = vunpack.c.l.b16 %v31
  %v73 = vunpack.c.l.b16 %v32
  %v74 = vunpack.c.l.b16 %v33
  %v75 = vunpack.c.l.b16 %v34
  %v76 = vunpack.c.l.b16 %v35
  %v77 = vunpack.c.l.b16 %v36
  %v78 = vpack.c.b16 %v63, %v62
  %v79 = vpack.c.b16 %v65, %v64
  %v80 = vpack.c.b16 %v67, %v66
  %v81 = vpack.c.b16 %v69, %v68
  %v82 = vpack.c.b16 %v71, %v70
  %v83 = vpack.c.b16 %v73, %v72
  %v84 = vpack.c.b16 %v75, %v74
  %v85 = vpack.c.b16 %v77, %v76
  %v95 = vunpack.c.l.b16 %v37
  %v96 = vunpack.c.l.b16 %v38
  %v97 = vunpack.c.l.b16 %v39
  %v98 = vunpack.c.l.b16 %v40
  %v99 = vunpack.c.l.b16 %v41
  %v100 = vunpack.c.l.b16 %v42
  %v101 = vunpack.c.l.b16 %v43
  %v102 = vunpack.c.l.b16 %v44
  %v103 = vunpack.c.l.b16 %v45
  %v104 = vpack.c.b16 %v96, %v95
  %v105 = vpack.c.b16 %v98, %v97
  %v106 = vpack.c.b16 %v100, %v99
  %v107 = vpack.c.b16 %v102, %v101
  %v108 = vpack.c.b16 %v103, %v103
  %vm113 = vcmask 588800
  %v115 = vsel %vm113, %v78, 0
  %v118 = vsel %vm113, %v79, 0
  %v121 = vsel %vm113, %v80, 0
  %v124 = vsel %vm113, %v81, 0
  %v127 = vsel %vm113, %v82, 0
  %v130 = vsel %vm113, %v83, 0
  %v133 = vsel %vm113, %v84, 0
  %v136 = vsel %vm113, %v85, 0
  %vm138 = vcmask 1043456
  %v140 = vsel %vm138, %v108, 0
  %142 = vmatprep.subr.bf16.mxu0 0
  %143 = vmatpush1.bf16.msra.mxu0 %v104
  %144 = vmatprep.subr.bf16.mxu0 0
  %145 = vmatpush1.bf16.msra.mxu0 %v105
  %146 = vmatprep.subr.bf16.mxu0 0
  %147 = vmatpush1.bf16.msra.mxu0 %v106
  %148 = vmatprep.subr.bf16.mxu0 0
  %149 = vmatpush1.bf16.msra.mxu0 %v107
  %150 = vmatprep.subr.bf16.mxu0 0
  %151 = vmatpush1.bf16.msra.mxu0 %v140
  %152 = vmatprep.subr.bf16.mxu0 0
  %153 = vmatpush1.bf16.msra.mxu0 0
  %154 = vmatprep.subr.bf16.mxu0 0
  %155 = vmatpush1.bf16.msra.mxu0 0
  %156 = vmatprep.subr.bf16.mxu0 0
  %157 = vmatpush1.bf16.msra.mxu0 0
  %158 = vmatprep.subr.bf16.mxu0 0
  %159 = vmatpush1.bf16.msra.mxu0 0
  %160 = vmatprep.subr.bf16.mxu0 0
  %161 = vmatpush1.bf16.msra.mxu0 0
  %162 = vmatprep.subr.bf16.mxu0 0
  %163 = vmatpush1.bf16.msra.mxu0 0
  %164 = vmatprep.subr.bf16.mxu0 0
  %165 = vmatpush1.bf16.msra.mxu0 0
  %166 = vmatprep.subr.bf16.mxu0 0
  %167 = vmatpush1.bf16.msra.mxu0 0
  %168 = vmatprep.subr.bf16.mxu0 0
  %169 = vmatpush1.bf16.msra.mxu0 0
  %170 = vmatprep.subr.bf16.mxu0 0
  %171 = vmatpush1.bf16.msra.mxu0 0
  %172 = vmatprep.subr.bf16.mxu0 0
  %173 = vmatpush1.bf16.msra.mxu0 0
  %174 = vmatprep.mubr.bf16.mxu0 0
  %175 = vmatmul.mubr.bf16.gmra.mrb[0].mxu0 %v115
  %v176 = vpop.f32.mrb[0].mxu0
  %v177 = vadd.f32 0.0, %v176
  %v178 = vpop.f32.mrb[0].mxu0
  %v179 = vpop.f32.mrb[0].mxu0
  %v180 = vadd.f32 0.0, %v179
  %v181 = vpop.f32.mrb[0].mxu0
  %182 = vmatprep.mubr.bf16.mxu0 0
  %183 = vmatmul.mubr.bf16.gmra.mrb[0].mxu0 %v118
  %v184 = vpop.f32.mrb[0].mxu0
  %v185 = vadd.f32 0.0, %v184
  %v186 = vpop.f32.mrb[0].mxu0
  %v187 = vpop.f32.mrb[0].mxu0
  %v188 = vadd.f32 0.0, %v187
  %v189 = vpop.f32.mrb[0].mxu0
  %190 = vmatprep.mubr.bf16.mxu0 0
  %191 = vmatmul.mubr.bf16.gmra.mrb[0].mxu0 %v121
  %v192 = vpop.f32.mrb[0].mxu0
  %v193 = vadd.f32 0.0, %v192
  %v194 = vpop.f32.mrb[0].mxu0
  %v195 = vpop.f32.mrb[0].mxu0
  %v196 = vadd.f32 0.0, %v195
  %v197 = vpop.f32.mrb[0].mxu0
  %198 = vmatprep.mubr.bf16.mxu0 0
  %199 = vmatmul.mubr.bf16.gmra.mrb[0].mxu0 %v124
  %v200 = vpop.f32.mrb[0].mxu0
  %v201 = vadd.f32 0.0, %v200
  %v202 = vpop.f32.mrb[0].mxu0
  %v203 = vpop.f32.mrb[0].mxu0
  %v204 = vadd.f32 0.0, %v203
  %v205 = vpop.f32.mrb[0].mxu0
  %206 = vmatprep.mubr.bf16.mxu0 0
  %207 = vmatmul.mubr.bf16.gmra.mrb[0].mxu0 %v127
  %v208 = vpop.f32.mrb[0].mxu0
  %v209 = vadd.f32 0.0, %v208
  %v210 = vpop.f32.mrb[0].mxu0
  %v211 = vpop.f32.mrb[0].mxu0
  %v212 = vadd.f32 0.0, %v211
  %v213 = vpop.f32.mrb[0].mxu0
  %214 = vmatprep.mubr.bf16.mxu0 0
  %215 = vmatmul.mubr.bf16.gmra.mrb[0].mxu0 %v130
  %v216 = vpop.f32.mrb[0].mxu0
  %v217 = vadd.f32 0.0, %v216
  %v218 = vpop.f32.mrb[0].mxu0
  %v219 = vpop.f32.mrb[0].mxu0
  %v220 = vadd.f32 0.0, %v219
  %v221 = vpop.f32.mrb[0].mxu0
  %222 = vmatprep.mubr.bf16.mxu0 0
  %223 = vmatmul.mubr.bf16.gmra.mrb[0].mxu0 %v133
  %v224 = vpop.f32.mrb[0].mxu0
  %v225 = vadd.f32 0.0, %v224
  %v226 = vpop.f32.mrb[0].mxu0
  %v227 = vpop.f32.mrb[0].mxu0
  %v228 = vadd.f32 0.0, %v227
  %v229 = vpop.f32.mrb[0].mxu0
  %230 = vmatprep.mubr.bf16.mxu0 0
  %231 = vmatmul.mubr.bf16.gmra.mrb[0].mxu0 %v136
  %v232 = vpop.f32.mrb[0].mxu0
  %v233 = vadd.f32 0.0, %v232
  %v234 = vpop.f32.mrb[0].mxu0
  %v235 = vpop.f32.mrb[0].mxu0
  %v236 = vadd.f32 0.0, %v235
  %v237 = vpop.f32.mrb[0].mxu0
  %238 = vdwg.mxu0
  %v239 = vld [vmem:[%s2] sm:$0x1]
  %v241 = vlaneseq
  %v242 = vshrl.u32 %v241, 7
  %v243 = vsub.s32 0, %v242
  %v244 = vrot.slane %v239, %v243
  %v246 = vmul.f32 %v177, %v244
  %v247 = vmul.f32 %v180, %v244
  %v248 = vmul.f32 %v185, %v244
  %v249 = vmul.f32 %v188, %v244
  %v250 = vmul.f32 %v193, %v244
  %v251 = vmul.f32 %v196, %v244
  %v252 = vmul.f32 %v201, %v244
  %v253 = vmul.f32 %v204, %v244
  %v254 = vmul.f32 %v209, %v244
  %v255 = vmul.f32 %v212, %v244
  %v256 = vmul.f32 %v217, %v244
  %v257 = vmul.f32 %v220, %v244
  %v258 = vmul.f32 %v225, %v244
  %v259 = vmul.f32 %v228, %v244
  %v260 = vmul.f32 %v233, %v244
  %v261 = vmul.f32 %v236, %v244
  %v262 = vld [vmem:[%s3] sm:$0x1]
  %v264 = vlaneseq
  %v265 = vshrl.u32 %v264, 7
  %v266 = vsub.s32 0, %v265
  %v267 = vrot.slane %v262, %v266
  %v269 = vadd.f32 %v246, %v267
  %v270 = vadd.f32 %v247, %v267
  %v271 = vadd.f32 %v248, %v267
  %v272 = vadd.f32 %v249, %v267
  %v273 = vadd.f32 %v250, %v267
  %v274 = vadd.f32 %v251, %v267
  %v275 = vadd.f32 %v252, %v267
  %v276 = vadd.f32 %v253, %v267
  %v277 = vadd.f32 %v254, %v267
  %v278 = vadd.f32 %v255, %v267
  %v279 = vadd.f32 %v256, %v267
  %v280 = vadd.f32 %v257, %v267
  %v281 = vadd.f32 %v258, %v267
  %v282 = vadd.f32 %v259, %v267
  %v283 = vadd.f32 %v260, %v267
  %v284 = vadd.f32 %v261, %v267
  %v285 = vld [vmem:[%s4] sm:$0xf]
  %v286 = vld [vmem:[%s4 + $0x4] sm:$0xf]
  %v287 = vld [vmem:[%s4 + $0x8] sm:$0xf]
  %v288 = vld [vmem:[%s4 + $0xc] sm:$0xf]
  %v289 = vld [vmem:[%s4 + $0x10] sm:$0xf]
  %v290 = vld [vmem:[%s4 + $0x14] sm:$0xf]
  %v291 = vld [vmem:[%s4 + $0x18] sm:$0xf]
  %v292 = vld [vmem:[%s4 + $0x1c] sm:$0xf]
  %v293 = vld [vmem:[%s4 + $0x20] sm:$0xf]
  %v294 = vld [vmem:[%s4 + $0x24] sm:$0xf]
  %v295 = vld [vmem:[%s4 + $0x28] sm:$0xf]
  %v296 = vld [vmem:[%s4 + $0x2c] sm:$0xf]
  %v297 = vld [vmem:[%s4 + $0x30] sm:$0xf]
  %v298 = vld [vmem:[%s4 + $0x34] sm:$0xf]
  %v299 = vld [vmem:[%s4 + $0x38] sm:$0xf]
  %v300 = vld [vmem:[%s4 + $0x3c] sm:$0xf]
  %v301 = vunpack.c.l.bf16 %v285
  %v302 = vunpack.c.l.bf16 %v286
  %v303 = vunpack.c.l.bf16 %v287
  %v304 = vunpack.c.l.bf16 %v288
  %v305 = vunpack.c.l.bf16 %v289
  %v306 = vunpack.c.l.bf16 %v290
  %v307 = vunpack.c.l.bf16 %v291
  %v308 = vunpack.c.l.bf16 %v292
  %v309 = vunpack.c.l.bf16 %v293
  %v310 = vunpack.c.l.bf16 %v294
  %v311 = vunpack.c.l.bf16 %v295
  %v312 = vunpack.c.l.bf16 %v296
  %v313 = vunpack.c.l.bf16 %v297
  %v314 = vunpack.c.l.bf16 %v298
  %v315 = vunpack.c.l.bf16 %v299
  %v316 = vunpack.c.l.bf16 %v300
  %v317 = vadd.f32 %v269, %v301
  %v318 = vadd.f32 %v270, %v302
  %v319 = vadd.f32 %v271, %v303
  %v320 = vadd.f32 %v272, %v304
  %v321 = vadd.f32 %v273, %v305
  %v322 = vadd.f32 %v274, %v306
  %v323 = vadd.f32 %v275, %v307
  %v324 = vadd.f32 %v276, %v308
  %v325 = vadd.f32 %v277, %v309
  %v326 = vadd.f32 %v278, %v310
  %v327 = vadd.f32 %v279, %v311
  %v328 = vadd.f32 %v280, %v312
  %v329 = vadd.f32 %v281, %v313
  %v330 = vadd.f32 %v282, %v314
  %v331 = vadd.f32 %v283, %v315
  %v332 = vadd.f32 %v284, %v316
  %v333 = vmax.f32 %v317, 0.0
  %v334 = vmax.f32 %v318, 0.0
  %v335 = vmax.f32 %v319, 0.0
  %v336 = vmax.f32 %v320, 0.0
  %v337 = vmax.f32 %v321, 0.0
  %v338 = vmax.f32 %v322, 0.0
  %v339 = vmax.f32 %v323, 0.0
  %v340 = vmax.f32 %v324, 0.0
  %v341 = vmax.f32 %v325, 0.0
  %v342 = vmax.f32 %v326, 0.0
  %v343 = vmax.f32 %v327, 0.0
  %v344 = vmax.f32 %v328, 0.0
  %v345 = vmax.f32 %v329, 0.0
  %v346 = vmax.f32 %v330, 0.0
  %v347 = vmax.f32 %v331, 0.0
  %v348 = vmax.f32 %v332, 0.0
  %v349 = vpack.c.bf16 %v334, %v333
  %v350 = vpack.c.bf16 %v336, %v335
  %v351 = vpack.c.bf16 %v338, %v337
  %v352 = vpack.c.bf16 %v340, %v339
  %v353 = vpack.c.bf16 %v342, %v341
  %v354 = vpack.c.bf16 %v344, %v343
  %v355 = vpack.c.bf16 %v346, %v345
  %v356 = vpack.c.bf16 %v348, %v347
  %v365 = vunpack.c.l.b16 %v349
  %v366 = vunpack.c.h.b16 %v349
  %v367 = vunpack.c.l.b16 %v350
  %v368 = vunpack.c.h.b16 %v350
  %v369 = vunpack.c.l.b16 %v351
  %v370 = vunpack.c.h.b16 %v351
  %v371 = vunpack.c.l.b16 %v352
  %v372 = vunpack.c.h.b16 %v352
  %v373 = vunpack.c.l.b16 %v353
  %v374 = vunpack.c.h.b16 %v353
  %v375 = vunpack.c.l.b16 %v354
  %v376 = vunpack.c.h.b16 %v354
  %v377 = vunpack.c.l.b16 %v355
  %v378 = vunpack.c.h.b16 %v355
  %v379 = vunpack.c.l.b16 %v356
  %v380 = vunpack.c.h.b16 %v356
  %v381 = vpack.c.b16 %v365, %v365
  %v382 = vpack.c.b16 %v366, %v366
  %v383 = vpack.c.b16 %v367, %v367
  %v384 = vpack.c.b16 %v368, %v368
  %v385 = vpack.c.b16 %v369, %v369
  %v386 = vpack.c.b16 %v370, %v370
  %v387 = vpack.c.b16 %v371, %v371
  %v388 = vpack.c.b16 %v372, %v372
  %v389 = vpack.c.b16 %v373, %v373
  %v390 = vpack.c.b16 %v374, %v374
  %v391 = vpack.c.b16 %v375, %v375
  %v392 = vpack.c.b16 %v376, %v376
  %v393 = vpack.c.b16 %v377, %v377
  %v394 = vpack.c.b16 %v378, %v378
  %v395 = vpack.c.b16 %v379, %v379
  %v396 = vpack.c.b16 %v380, %v380
  %vm413 = vcmask 60416
  %414 = vst.msk [vmem:[%s5] sm:$0xf] %vm413, %v381
  %415 = vst.msk [vmem:[%s5 + $0x4] sm:$0xf] %vm413, %v382
  %416 = vst.msk [vmem:[%s5 + $0x8] sm:$0xf] %vm413, %v383
  %417 = vst.msk [vmem:[%s5 + $0xc] sm:$0xf] %vm413, %v384
  %418 = vst.msk [vmem:[%s5 + $0x10] sm:$0xf] %vm413, %v385
  %419 = vst.msk [vmem:[%s5 + $0x14] sm:$0xf] %vm413, %v386
  %420 = vst.msk [vmem:[%s5 + $0x18] sm:$0xf] %vm413, %v387
  %421 = vst.msk [vmem:[%s5 + $0x1c] sm:$0xf] %vm413, %v388
  %422 = vst.msk [vmem:[%s5 + $0x20] sm:$0xf] %vm413, %v389
  %423 = vst.msk [vmem:[%s5 + $0x24] sm:$0xf] %vm413, %v390
  %424 = vst.msk [vmem:[%s5 + $0x28] sm:$0xf] %vm413, %v391
  %425 = vst.msk [vmem:[%s5 + $0x2c] sm:$0xf] %vm413, %v392
  %426 = vst.msk [vmem:[%s5 + $0x30] sm:$0xf] %vm413, %v393
  %427 = vst.msk [vmem:[%s5 + $0x34] sm:$0xf] %vm413, %v394
  %428 = vst.msk [vmem:[%s5 + $0x38] sm:$0xf] %vm413, %v395
  %429 = vst.msk [vmem:[%s5 + $0x3c] sm:$0xf] %vm413, %v396
  // Predicated region
  $region22: #{resnet_features.22} parent=0 // pred_check
    _
  $region23: #{resnet_features.22} parent=0 // pred_check_branch
    %431 = sbr.rel (0) target = $region25
  $region24: #{resnet_features.22} parent=0 // pred_region
    _
  $region25: #{resnet_features.22} parent=0 // pred_fallthru
    _
  // Predicated region
  $region26: #{resnet_features.22} parent=0 // pred_check
    _
  $region27: #{resnet_features.22} parent=0 // pred_check_branch
    %433 = sbr.rel (0) target = $region29
  $region28: #{resnet_features.22} parent=0 // pred_region
    _
  $region29: #{resnet_features.22} parent=0 // pred_fallthru
    _

// kernel: resnet_features.25
$region0: #{resnet_features.25}
  #allocation0 [shape = 'u32[]', space=smem, size = 0x4, offset = 0x4, fixed_abs, tag = 'smem constant byte address 0x4 - core index']
  #allocation1 [shape = 'u32[144,128]{1,0:T(1,128)}', space=vmem, size = 0x12000, scoped, tag = 'internal scratch']
  %s0 = inlined_call_operand.vmem [shape: bf16[32,72], index: 0, kind: input, shape index: {}]
  %s1 = inlined_call_operand.vmem [shape: bf16[72,16], index: 1, kind: input, shape index: {}]
  %s2 = inlined_call_operand.vmem [shape: f32[1,16], index: 2, kind: input, shape index: {}]
  %s3 = inlined_call_operand.vmem [shape: f32[1,16], index: 3, kind: input, shape index: {}]
  %s4 = inlined_call_operand.vmem [shape: bf16[32,16], index: 4, kind: output, shape index: {}]
  %s5 = sld [smem:[#allocation0]]
  $region26: #{resnet_features.25} parent=0
    _
  %s7 = ssub.s32 1, %s5
  %s8 = scalar_select 0, %s7, %s5
  // Predicated region
  $region2: #{resnet_features.25} parent=0 // pred_check
    _
  $region3: #{resnet_features.25} parent=0 // pred_check_branch
    %10 = sbr.rel (0) target = $region5
  $region4: #{resnet_features.25} parent=0 // pred_region
    _
  $region5: #{resnet_features.25} parent=0 // pred_fallthru
    _
  // Predicated region
  $region6: #{resnet_features.25} parent=0 // pred_check
    _
  $region7: #{resnet_features.25} parent=0 // pred_check_branch
    %12 = sbr.rel (0) target = $region9
  $region8: #{resnet_features.25} parent=0 // pred_region
    _
  $region9: #{resnet_features.25} parent=0 // pred_fallthru
    _
  // Predicated region
  $region10: #{resnet_features.25} parent=0 // pred_check
    _
  $region11: #{resnet_features.25} parent=0 // pred_check_branch
    %14 = sbr.rel (0) target = $region13
  $region12: #{resnet_features.25} parent=0 // pred_region
    _
  $region13: #{resnet_features.25} parent=0 // pred_fallthru
    _
  // Predicated region
  $region14: #{resnet_features.25} parent=0 // pred_check
    _
  $region15: #{resnet_features.25} parent=0 // pred_check_branch
    %16 = sbr.rel (0) target = $region17
  $region16: #{resnet_features.25} parent=0 // pred_region
    _
  $region17: #{resnet_features.25} parent=0 // pred_fallthru
    _
  %v18 = vld [vmem:[%s0] sm:$0xf]
  %v19 = vld [vmem:[%s0 + $0x4] sm:$0xf]
  %v20 = vld [vmem:[%s0 + $0x8] sm:$0xf]
  %v21 = vld [vmem:[%s0 + $0xc] sm:$0xf]
  %v22 = vld [vmem:[%s1] sm:$0xf]
  %v23 = vld [vmem:[%s1 + $0x4] sm:$0xf]
  %v24 = vld [vmem:[%s1 + $0x8] sm:$0xf]
  %v25 = vld [vmem:[%s1 + $0xc] sm:$0xf]
  %v26 = vld [vmem:[%s1 + $0x10] sm:$0xf]
  %v27 = vld [vmem:[%s1 + $0x14] sm:$0xf]
  %v28 = vld [vmem:[%s1 + $0x18] sm:$0xf]
  %v29 = vld [vmem:[%s1 + $0x1c] sm:$0xf]
  %v30 = vld [vmem:[%s1 + $0x20] sm:$0xf]
  %v35 = vunpack.c.l.b16 %v18
  %v36 = vunpack.c.l.b16 %v19
  %v37 = vunpack.c.l.b16 %v20
  %v38 = vunpack.c.l.b16 %v21
  %v39 = vpack.c.b16 %v36, %v35
  %v40 = vpack.c.b16 %v38, %v37
  %v50 = vunpack.c.l.b16 %v22
  %v51 = vunpack.c.l.b16 %v23
  %v52 = vunpack.c.l.b16 %v24
  %v53 = vunpack.c.l.b16 %v25
  %v54 = vunpack.c.l.b16 %v26
  %v55 = vunpack.c.l.b16 %v27
  %v56 = vunpack.c.l.b16 %v28
  %v57 = vunpack.c.l.b16 %v29
  %v58 = vunpack.c.l.b16 %v30
  %v59 = vpack.c.b16 %v51, %v50
  %v60 = vpack.c.b16 %v53, %v52
  %v61 = vpack.c.b16 %v55, %v54
  %v62 = vpack.c.b16 %v57, %v56
  %v63 = vpack.c.b16 %v58, %v58
  %vm68 = vcmask 588800
  %v70 = vsel %vm68, %v39, 0
  %v73 = vsel %vm68, %v40, 0
  %vm75 = vcmask 1043456
  %v77 = vsel %vm75, %v63, 0
  %79 = vmatprep.subr.bf16.mxu0 0
  %80 = vmatpush1.bf16.msra.mxu0 %v59
  %81 = vmatprep.subr.bf16.mxu0 0
  %82 = vmatpush1.bf16.msra.mxu0 %v60
  %83 = vmatprep.subr.bf16.mxu0 0
  %84 = vmatpush1.bf16.msra.mxu0 %v61
  %85 = vmatprep.subr.bf16.mxu0 0
  %86 = vmatpush1.bf16.msra.mxu0 %v62
  %87 = vmatprep.subr.bf16.mxu0 0
  %88 = vmatpush1.bf16.msra.mxu0 %v77
  %89 = vmatprep.subr.bf16.mxu0 0
  %90 = vmatpush1.bf16.msra.mxu0 0
  %91 = vmatprep.subr.bf16.mxu0 0
  %92 = vmatpush1.bf16.msra.mxu0 0
  %93 = vmatprep.subr.bf16.mxu0 0
  %94 = vmatpush1.bf16.msra.mxu0 0
  %95 = vmatprep.subr.bf16.mxu0 0
  %96 = vmatpush1.bf16.msra.mxu0 0
  %97 = vmatprep.subr.bf16.mxu0 0
  %98 = vmatpush1.bf16.msra.mxu0 0
  %99 = vmatprep.subr.bf16.mxu0 0
  %100 = vmatpush1.bf16.msra.mxu0 0
  %101 = vmatprep.subr.bf16.mxu0 0
  %102 = vmatpush1.bf16.msra.mxu0 0
  %103 = vmatprep.subr.bf16.mxu0 0
  %104 = vmatpush1.bf16.msra.mxu0 0
  %105 = vmatprep.subr.bf16.mxu0 0
  %106 = vmatpush1.bf16.msra.mxu0 0
  %107 = vmatprep.subr.bf16.mxu0 0
  %108 = vmatpush1.bf16.msra.mxu0 0
  %109 = vmatprep.subr.bf16.mxu0 0
  %110 = vmatpush1.bf16.msra.mxu0 0
  %111 = vmatprep.mubr.bf16.mxu0 0
  %112 = vmatmul.mubr.bf16.gmra.mrb[0].mxu0 %v70
  %v113 = vpop.f32.mrb[0].mxu0
  %v114 = vadd.f32 0.0, %v113
  %v115 = vpop.f32.mrb[0].mxu0
  %v116 = vpop.f32.mrb[0].mxu0
  %v117 = vadd.f32 0.0, %v116
  %v118 = vpop.f32.mrb[0].mxu0
  %119 = vmatprep.mubr.bf16.mxu0 0
  %120 = vmatmul.mubr.bf16.gmra.mrb[0].mxu0 %v73
  %v121 = vpop.f32.mrb[0].mxu0
  %v122 = vadd.f32 0.0, %v121
  %v123 = vpop.f32.mrb[0].mxu0
  %v124 = vpop.f32.mrb[0].mxu0
  %v125 = vadd.f32 0.0, %v124
  %v126 = vpop.f32.mrb[0].mxu0
  %127 = vdwg.mxu0
  %v128 = vld [vmem:[%s2] sm:$0x1]
  %v130 = vlaneseq
  %v131 = vshrl.u32 %v130, 7
  %v132 = vsub.s32 0, %v131
  %v133 = vrot.slane %v128, %v132
  %v135 = vmul.f32 %v114, %v133
  %v136 = vmul.f32 %v117, %v133
  %v137 = vmul.f32 %v122, %v133
  %v138 = vmul.f32 %v125, %v133
  %v139 = vld [vmem:[%s3] sm:$0x1]
  %v141 = vlaneseq
  %v142 = vshrl.u32 %v141, 7
  %v143 = vsub.s32 0, %v142
  %v144 = vrot.slane %v139, %v143
  %v146 = vadd.f32 %v135, %v144
  %v147 = vadd.f32 %v136, %v144
  %v148 = vadd.f32 %v137, %v144
  %v149 = vadd.f32 %v138, %v144
  %v150 = vmax.f32 %v146, 0.0
  %v151 = vmax.f32 %v147, 0.0
  %v152 = vmax.f32 %v148, 0.0
  %v153 = vmax.f32 %v149, 0.0
  %v154 = vpack.c.bf16 %v151, %v150
  %v155 = vpack.c.bf16 %v153, %v152
  %v158 = vunpack.c.l.b16 %v154
  %v159 = vunpack.c.h.b16 %v154
  %v160 = vunpack.c.l.b16 %v155
  %v161 = vunpack.c.h.b16 %v155
  %v162 = vpack.c.b16 %v158, %v158
  %v163 = vpack.c.b16 %v159, %v159
  %v164 = vpack.c.b16 %v160, %v160
  %v165 = vpack.c.b16 %v161, %v161
  %vm170 = vcmask 125952
  %171 = vst.msk [vmem:[%s4] sm:$0xf] %vm170, %v162
  %172 = vst.msk [vmem:[%s4 + $0x4] sm:$0xf] %vm170, %v163
  %173 = vst.msk [vmem:[%s4 + $0x8] sm:$0xf] %vm170, %v164
  %174 = vst.msk [vmem:[%s4 + $0xc] sm:$0xf] %vm170, %v165
  // Predicated region
  $region18: #{resnet_features.25} parent=0 // pred_check
    _
  $region19: #{resnet_features.25} parent=0 // pred_check_branch
    %176 = sbr.rel (0) target = $region21
  $region20: #{resnet_features.25} parent=0 // pred_region
    _
  $region21: #{resnet_features.25} parent=0 // pred_fallthru
    _
  // Predicated region
  $region22: #{resnet_features.25} parent=0 // pred_check
    _
  $region23: #{resnet_features.25} parent=0 // pred_check_branch
    %178 = sbr.rel (0) target = $region25
  $region24: #{resnet_features.25} parent=0 // pred_region
    _
  $region25: #{resnet_features.25} parent=0 // pred_fallthru
    _

// kernel: resnet_features.26
$region0: #{resnet_features.26}
  #allocation0 [shape = 'u32[]', space=smem, size = 0x4, offset = 0x4, fixed_abs, tag = 'smem constant byte address 0x4 - core index']
  #allocation1 [shape = 'u32[144,128]{1,0:T(1,128)}', space=vmem, size = 0x12000, scoped, tag = 'internal scratch']
  %s0 = inlined_call_operand.vmem [shape: bf16[32,8], index: 0, kind: input, shape index: {}]
  %s1 = inlined_call_operand.vmem [shape: bf16[8,16], index: 1, kind: input, shape index: {}]
  %s2 = inlined_call_operand.vmem [shape: f32[1,16], index: 2, kind: input, shape index: {}]
  %s3 = inlined_call_operand.vmem [shape: f32[1,16], index: 3, kind: input, shape index: {}]
  %s4 = inlined_call_operand.vmem [shape: bf16[32,16], index: 4, kind: output, shape index: {}]
  %s5 = sld [smem:[#allocation0]]
  $region26: #{resnet_features.26} parent=0
    _
  %s7 = ssub.s32 1, %s5
  %s8 = scalar_select 0, %s7, %s5
  // Predicated region
  $region2: #{resnet_features.26} parent=0 // pred_check
    _
  $region3: #{resnet_features.26} parent=0 // pred_check_branch
    %10 = sbr.rel (0) target = $region5
  $region4: #{resnet_features.26} parent=0 // pred_region
    _
  $region5: #{resnet_features.26} parent=0 // pred_fallthru
    _
  // Predicated region
  $region6: #{resnet_features.26} parent=0 // pred_check
    _
  $region7: #{resnet_features.26} parent=0 // pred_check_branch
    %12 = sbr.rel (0) target = $region9
  $region8: #{resnet_features.26} parent=0 // pred_region
    _
  $region9: #{resnet_features.26} parent=0 // pred_fallthru
    _
  // Predicated region
  $region10: #{resnet_features.26} parent=0 // pred_check
    _
  $region11: #{resnet_features.26} parent=0 // pred_check_branch
    %14 = sbr.rel (0) target = $region13
  $region12: #{resnet_features.26} parent=0 // pred_region
    _
  $region13: #{resnet_features.26} parent=0 // pred_fallthru
    _
  // Predicated region
  $region14: #{resnet_features.26} parent=0 // pred_check
    _
  $region15: #{resnet_features.26} parent=0 // pred_check_branch
    %16 = sbr.rel (0) target = $region17
  $region16: #{resnet_features.26} parent=0 // pred_region
    _
  $region17: #{resnet_features.26} parent=0 // pred_fallthru
    _
  %v18 = vld [vmem:[%s0] sm:$0xf]
  %v19 = vld [vmem:[%s0 + $0x4] sm:$0xf]
  %v20 = vld [vmem:[%s0 + $0x8] sm:$0xf]
  %v21 = vld [vmem:[%s0 + $0xc] sm:$0xf]
  %v22 = vld [vmem:[%s1] sm:$0xf]
  %v27 = vunpack.c.l.b16 %v18
  %v28 = vunpack.c.l.b16 %v19
  %v29 = vunpack.c.l.b16 %v20
  %v30 = vunpack.c.l.b16 %v21
  %v31 = vpack.c.b16 %v28, %v27
  %v32 = vpack.c.b16 %v30, %v29
  %vm33 = vcmask 64512
  %v35 = vsel %vm33, %v31, 0
  %v38 = vsel %vm33, %v32, 0
  %vm40 = vcmask 1043456
  %v42 = vsel %vm40, %v22, 0
  %44 = vmatprep.subr.bf16.mxu0 0
  %45 = vmatpush1.bf16.msra.mxu0 %v42
  %46 = vmatprep.subr.bf16.mxu0 0
  %47 = vmatpush1.bf16.msra.mxu0 0
  %48 = vmatprep.subr.bf16.mxu0 0
  %49 = vmatpush1.bf16.msra.mxu0 0
  %50 = vmatprep.subr.bf16.mxu0 0
  %51 = vmatpush1.bf16.msra.mxu0 0
  %52 = vmatprep.subr.bf16.mxu0 0
  %53 = vmatpush1.bf16.msra.mxu0 0
  %54 = vmatprep.subr.bf16.mxu0 0
  %55 = vmatpush1.bf16.msra.mxu0 0
  %56 = vmatprep.subr.bf16.mxu0 0
  %57 = vmatpush1.bf16.msra.mxu0 0
  %58 = vmatprep.subr.bf16.mxu0 0
  %59 = vmatpush1.bf16.msra.mxu0 0
  %60 = vmatprep.subr.bf16.mxu0 0
  %61 = vmatpush1.bf16.msra.mxu0 0
  %62 = vmatprep.subr.bf16.mxu0 0
  %63 = vmatpush1.bf16.msra.mxu0 0
  %64 = vmatprep.subr.bf16.mxu0 0
  %65 = vmatpush1.bf16.msra.mxu0 0
  %66 = vmatprep.subr.bf16.mxu0 0
  %67 = vmatpush1.bf16.msra.mxu0 0
  %68 = vmatprep.subr.bf16.mxu0 0
  %69 = vmatpush1.bf16.msra.mxu0 0
  %70 = vmatprep.subr.bf16.mxu0 0
  %71 = vmatpush1.bf16.msra.mxu0 0
  %72 = vmatprep.subr.bf16.mxu0 0
  %73 = vmatpush1.bf16.msra.mxu0 0
  %74 = vmatprep.subr.bf16.mxu0 0
  %75 = vmatpush1.bf16.msra.mxu0 0
  %76 = vmatprep.mubr.bf16.mxu0 0
  %77 = vmatmul.mubr.bf16.gmra.mrb[0].mxu0 %v35
  %v78 = vpop.f32.mrb[0].mxu0
  %v79 = vadd.f32 0.0, %v78
  %v80 = vpop.f32.mrb[0].mxu0
  %v81 = vpop.f32.mrb[0].mxu0
  %v82 = vadd.f32 0.0, %v81
  %v83 = vpop.f32.mrb[0].mxu0
  %84 = vmatprep.mubr.bf16.mxu0 0
  %85 = vmatmul.mubr.bf16.gmra.mrb[0].mxu0 %v38
  %v86 = vpop.f32.mrb[0].mxu0
  %v87 = vadd.f32 0.0, %v86
  %v88 = vpop.f32.mrb[0].mxu0
  %v89 = vpop.f32.mrb[0].mxu0
  %v90 = vadd.f32 0.0, %v89
  %v91 = vpop.f32.mrb[0].mxu0
  %92 = vdwg.mxu0
  %v93 = vld [vmem:[%s2] sm:$0x1]
  %v95 = vlaneseq
  %v96 = vshrl.u32 %v95, 7
  %v97 = vsub.s32 0, %v96
  %v98 = vrot.slane %v93, %v97
  %v100 = vmul.f32 %v79, %v98
  %v101 = vmul.f32 %v82, %v98
  %v102 = vmul.f32 %v87, %v98
  %v103 = vmul.f32 %v90, %v98
  %v104 = vld [vmem:[%s3] sm:$0x1]
  %v106 = vlaneseq
  %v107 = vshrl.u32 %v106, 7
  %v108 = vsub.s32 0, %v107
  %v109 = vrot.slane %v104, %v108
  %v111 = vadd.f32 %v100, %v109
  %v112 = vadd.f32 %v101, %v109
  %v113 = vadd.f32 %v102, %v109
  %v114 = vadd.f32 %v103, %v109
  %v115 = vpack.c.bf16 %v112, %v111
  %v116 = vpack.c.bf16 %v114, %v113
  %v119 = vunpack.c.l.b16 %v115
  %v120 = vunpack.c.h.b16 %v115
  %v121 = vunpack.c.l.b16 %v116
  %v122 = vunpack.c.h.b16 %v116
  %v123 = vpack.c.b16 %v119, %v119
  %v124 = vpack.c.b16 %v120, %v120
  %v125 = vpack.c.b16 %v121, %v121
  %v126 = vpack.c.b16 %v122, %v122
  %vm131 = vcmask 125952
  %132 = vst.msk [vmem:[%s4] sm:$0xf] %vm131, %v123
  %133 = vst.msk [vmem:[%s4 + $0x4] sm:$0xf] %vm131, %v124
  %134 = vst.msk [vmem:[%s4 + $0x8] sm:$0xf] %vm131, %v125
  %135 = vst.msk [vmem:[%s4 + $0xc] sm:$0xf] %vm131, %v126
  // Predicated region
  $region18: #{resnet_features.26} parent=0 // pred_check
    _
  $region19: #{resnet_features.26} parent=0 // pred_check_branch
    %137 = sbr.rel (0) target = $region21
  $region20: #{resnet_features.26} parent=0 // pred_region
    _
  $region21: #{resnet_features.26} parent=0 // pred_fallthru
    _
  // Predicated region
  $region22: #{resnet_features.26} parent=0 // pred_check
    _
  $region23: #{resnet_features.26} parent=0 // pred_check_branch
    %139 = sbr.rel (0) target = $region25
  $region24: #{resnet_features.26} parent=0 // pred_region
    _
  $region25: #{resnet_features.26} parent=0 // pred_fallthru
    _

// kernel: resnet_features.27
$region0: #{resnet_features.27}
  #allocation0 [shape = 'u32[]', space=smem, size = 0x4, offset = 0x4, fixed_abs, tag = 'smem constant byte address 0x4 - core index']
  #allocation1 [shape = 'u32[144,128]{1,0:T(1,128)}', space=vmem, size = 0x12000, scoped, tag = 'internal scratch']
  %s0 = inlined_call_operand.vmem [shape: bf16[32,144], index: 0, kind: input, shape index: {}]
  %s1 = inlined_call_operand.vmem [shape: bf16[144,16], index: 1, kind: input, shape index: {}]
  %s2 = inlined_call_operand.vmem [shape: f32[1,16], index: 2, kind: input, shape index: {}]
  %s3 = inlined_call_operand.vmem [shape: f32[1,16], index: 3, kind: input, shape index: {}]
  %s4 = inlined_call_operand.vmem [shape: bf16[32,16], index: 4, kind: input, shape index: {}]
  %s5 = inlined_call_operand.vmem [shape: bf16[32,16], index: 5, kind: output, shape index: {}]
  %s6 = sld [smem:[#allocation0]]
  $region30: #{resnet_features.27} parent=0
    _
  %s8 = ssub.s32 1, %s6
  %s9 = scalar_select 0, %s8, %s6
  // Predicated region
  $region2: #{resnet_features.27} parent=0 // pred_check
    _
  $region3: #{resnet_features.27} parent=0 // pred_check_branch
    %11 = sbr.rel (0) target = $region5
  $region4: #{resnet_features.27} parent=0 // pred_region
    _
  $region5: #{resnet_features.27} parent=0 // pred_fallthru
    _
  // Predicated region
  $region6: #{resnet_features.27} parent=0 // pred_check
    _
  $region7: #{resnet_features.27} parent=0 // pred_check_branch
    %13 = sbr.rel (0) target = $region9
  $region8: #{resnet_features.27} parent=0 // pred_region
    _
  $region9: #{resnet_features.27} parent=0 // pred_fallthru
    _
  // Predicated region
  $region10: #{resnet_features.27} parent=0 // pred_check
    _
  $region11: #{resnet_features.27} parent=0 // pred_check_branch
    %15 = sbr.rel (0) target = $region13
  $region12: #{resnet_features.27} parent=0 // pred_region
    _
  $region13: #{resnet_features.27} parent=0 // pred_fallthru
    _
  // Predicated region
  $region14: #{resnet_features.27} parent=0 // pred_check
    _
  $region15: #{resnet_features.27} parent=0 // pred_check_branch
    %17 = sbr.rel (0) target = $region17
  $region16: #{resnet_features.27} parent=0 // pred_region
    _
  $region17: #{resnet_features.27} parent=0 // pred_fallthru
    _
  // Predicated region
  $region18: #{resnet_features.27} parent=0 // pred_check
    _
  $region19: #{resnet_features.27} parent=0 // pred_check_branch
    %19 = sbr.rel (0) target = $region21
  $region20: #{resnet_features.27} parent=0 // pred_region
    _
  $region21: #{resnet_features.27} parent=0 // pred_fallthru
    _
  %v21 = vld [vmem:[%s0] sm:$0xff]
  %v22 = vld [vmem:[%s0 + $0x8] sm:$0xff]
  %v23 = vld [vmem:[%s0 + $0x10] sm:$0xff]
  %v24 = vld [vmem:[%s0 + $0x18] sm:$0xff]
  %v25 = vld [vmem:[%s1] sm:$0xf]
  %v26 = vld [vmem:[%s1 + $0x4] sm:$0xf]
  %v27 = vld [vmem:[%s1 + $0x8] sm:$0xf]
  %v28 = vld [vmem:[%s1 + $0xc] sm:$0xf]
  %v29 = vld [vmem:[%s1 + $0x10] sm:$0xf]
  %v30 = vld [vmem:[%s1 + $0x14] sm:$0xf]
  %v31 = vld [vmem:[%s1 + $0x18] sm:$0xf]
  %v32 = vld [vmem:[%s1 + $0x1c] sm:$0xf]
  %v33 = vld [vmem:[%s1 + $0x20] sm:$0xf]
  %v34 = vld [vmem:[%s1 + $0x24] sm:$0xf]
  %v35 = vld [vmem:[%s1 + $0x28] sm:$0xf]
  %v36 = vld [vmem:[%s1 + $0x2c] sm:$0xf]
  %v37 = vld [vmem:[%s1 + $0x30] sm:$0xf]
  %v38 = vld [vmem:[%s1 + $0x34] sm:$0xf]
  %v39 = vld [vmem:[%s1 + $0x38] sm:$0xf]
  %v40 = vld [vmem:[%s1 + $0x3c] sm:$0xf]
  %v41 = vld [vmem:[%s1 + $0x40] sm:$0xf]
  %v42 = vld [vmem:[%s1 + $0x44] sm:$0xf]
  %v47 = vunpack.c.l.b16 %v21
  %v48 = vunpack.c.h.b16 %v21
  %v49 = vunpack.c.l.b16 %v22
  %v50 = vunpack.c.h.b16 %v22
  %v51 = vunpack.c.l.b16 %v23
  %v52 = vunpack.c.h.b16 %v23
  %v53 = vunpack.c.l.b16 %v24
  %v54 = vunpack.c.h.b16 %v24
  %v55 = vpack.c.b16 %v49, %v47
  %v56 = vpack.c.b16 %v50, %v48
  %v57 = vpack.c.b16 %v53, %v51
  %v58 = vpack.c.b16 %v54, %v52
  %v79 = vunpack.c.l.b16 %v25
  %v80 = vunpack.c.l.b16 %v26
  %v81 = vunpack.c.l.b16 %v27
  %v82 = vunpack.c.l.b16 %v28
  %v83 = vunpack.c.l.b16 %v29
  %v84 = vunpack.c.l.b16 %v30
  %v85 = vunpack.c.l.b16 %v31
  %v86 = vunpack.c.l.b16 %v32
  %v87 = vunpack.c.l.b16 %v33
  %v88 = vunpack.c.l.b16 %v34
  %v89 = vunpack.c.l.b16 %v35
  %v90 = vunpack.c.l.b16 %v36
  %v91 = vunpack.c.l.b16 %v37
  %v92 = vunpack.c.l.b16 %v38
  %v93 = vunpack.c.l.b16 %v39
  %v94 = vunpack.c.l.b16 %v40
  %v95 = vunpack.c.l.b16 %v41
  %v96 = vunpack.c.l.b16 %v42
  %v97 = vpack.c.b16 %v80, %v79
  %v98 = vpack.c.b16 %v82, %v81
  %v99 = vpack.c.b16 %v84, %v83
  %v100 = vpack.c.b16 %v86, %v85
  %v101 = vpack.c.b16 %v88, %v87
  %v102 = vpack.c.b16 %v90, %v89
  %v103 = vpack.c.b16 %v92, %v91
  %v104 = vpack.c.b16 %v94, %v93
  %v105 = vpack.c.b16 %v96, %v95
  %vm115 = vcmask 130048
  %v117 = vsel %vm115, %v56, 0
  %v120 = vsel %vm115, %v58, 0
  %122 = vmatprep.subr.bf16.mxu0 0
  %123 = vmatpush1.bf16.msra.mxu0 %v97
  %124 = vmatprep.subr.bf16.mxu0 0
  %125 = vmatpush1.bf16.msra.mxu0 %v98
  %126 = vmatprep.subr.bf16.mxu0 0
  %127 = vmatpush1.bf16.msra.mxu0 %v99
  %128 = vmatprep.subr.bf16.mxu0 0
  %129 = vmatpush1.bf16.msra.mxu0 %v100
  %130 = vmatprep.subr.bf16.mxu0 0
  %131 = vmatpush1.bf16.msra.mxu0 %v101
  %132 = vmatprep.subr.bf16.mxu0 0
  %133 = vmatpush1.bf16.msra.mxu0 %v102
  %134 = vmatprep.subr.bf16.mxu0 0
  %135 = vmatpush1.bf16.msra.mxu0 %v103
  %136 = vmatprep.subr.bf16.mxu0 0
  %137 = vmatpush1.bf16.msra.mxu0 %v104
  %138 = vmatprep.subr.bf16.mxu0 0
  %139 = vmatpush1.bf16.msra.mxu0 %v105
  %140 = vmatprep.subr.bf16.mxu0 0
  %141 = vmatpush1.bf16.msra.mxu0 0
  %142 = vmatprep.subr.bf16.mxu0 0
  %143 = vmatpush1.bf16.msra.mxu0 0
  %144 = vmatprep.subr.bf16.mxu0 0
  %145 = vmatpush1.bf16.msra.mxu0 0
  %146 = vmatprep.subr.bf16.mxu0 0
  %147 = vmatpush1.bf16.msra.mxu0 0
  %148 = vmatprep.subr.bf16.mxu0 0
  %149 = vmatpush1.bf16.msra.mxu0 0
  %150 = vmatprep.subr.bf16.mxu0 0
  %151 = vmatpush1.bf16.msra.mxu0 0
  %152 = vmatprep.subr.bf16.mxu0 0
  %153 = vmatpush1.bf16.msra.mxu0 0
  %154 = vmatprep.mubr.bf16.mxu0 %v117
  %155 = vmatmul.mubr.bf16.gmra.mrb[0].mxu0 %v55
  %v156 = vpop.f32.mrb[0].mxu0
  %v157 = vadd.f32 0.0, %v156
  %v158 = vpop.f32.mrb[0].mxu0
  %v159 = vpop.f32.mrb[0].mxu0
  %v160 = vadd.f32 0.0, %v159
  %v161 = vpop.f32.mrb[0].mxu0
  %162 = vmatprep.mubr.bf16.mxu0 %v120
  %163 = vmatmul.mubr.bf16.gmra.mrb[0].mxu0 %v57
  %v164 = vpop.f32.mrb[0].mxu0
  %v165 = vadd.f32 0.0, %v164
  %v166 = vpop.f32.mrb[0].mxu0
  %v167 = vpop.f32.mrb[0].mxu0
  %v168 = vadd.f32 0.0, %v167
  %v169 = vpop.f32.mrb[0].mxu0
  %170 = vdwg.mxu0
  %v171 = vld [vmem:[%s2] sm:$0x1]
  %v173 = vlaneseq
  %v174 = vshrl.u32 %v173, 7
  %v175 = vsub.s32 0, %v174
  %v176 = vrot.slane %v171, %v175
  %v178 = vmul.f32 %v157, %v176
  %v179 = vmul.f32 %v160, %v176
  %v180 = vmul.f32 %v165, %v176
  %v181 = vmul.f32 %v168, %v176
  %v182 = vld [vmem:[%s3] sm:$0x1]
  %v184 = vlaneseq
  %v185 = vshrl.u32 %v184, 7
  %v186 = vsub.s32 0, %v185
  %v187 = vrot.slane %v182, %v186
  %v189 = vadd.f32 %v178, %v187
  %v190 = vadd.f32 %v179, %v187
  %v191 = vadd.f32 %v180, %v187
  %v192 = vadd.f32 %v181, %v187
  %v193 = vld [vmem:[%s4] sm:$0xf]
  %v194 = vld [vmem:[%s4 + $0x4] sm:$0xf]
  %v195 = vld [vmem:[%s4 + $0x8] sm:$0xf]
  %v196 = vld [vmem:[%s4 + $0xc] sm:$0xf]
  %v197 = vunpack.c.l.bf16 %v193
  %v198 = vunpack.c.l.bf16 %v194
  %v199 = vunpack.c.l.bf16 %v195
  %v200 = vunpack.c.l.bf16 %v196
  %v201 = vadd.f32 %v189, %v197
  %v202 = vadd.f32 %v190, %v198
  %v203 = vadd.f32 %v191, %v199
  %v204 = vadd.f32 %v192, %v200
  %v205 = vmax.f32 %v201, 0.0
  %v206 = vmax.f32 %v202, 0.0
  %v207 = vmax.f32 %v203, 0.0
  %v208 = vmax.f32 %v204, 0.0
  %v209 = vpack.c.bf16 %v206, %v205
  %v210 = vpack.c.bf16 %v208, %v207
  %v213 = vunpack.c.l.b16 %v209
  %v214 = vunpack.c.h.b16 %v209
  %v215 = vunpack.c.l.b16 %v210
  %v216 = vunpack.c.h.b16 %v210
  %v217 = vpack.c.b16 %v213, %v213
  %v218 = vpack.c.b16 %v214, %v214
  %v219 = vpack.c.b16 %v215, %v215
  %v220 = vpack.c.b16 %v216, %v216
  %vm225 = vcmask 125952
  %226 = vst.msk [vmem:[%s5] sm:$0xf] %vm225, %v217
  %227 = vst.msk [vmem:[%s5 + $0x4] sm:$0xf] %vm225, %v218
  %228 = vst.msk [vmem:[%s5 + $0x8] sm:$0xf] %vm225, %v219
  %229 = vst.msk [vmem:[%s5 + $0xc] sm:$0xf] %vm225, %v220
  // Predicated region
  $region22: #{resnet_features.27} parent=0 // pred_check
    _
  $region23: #{resnet_features.27} parent=0 // pred_check_branch
    %231 = sbr.rel (0) target = $region25
  $region24: #{resnet_features.27} parent=0 // pred_region
    _
  $region25: #{resnet_features.27} parent=0 // pred_fallthru
    _
  // Predicated region
  $region26: #{resnet_features.27} parent=0 // pred_check
    _
  $region27: #{resnet_features.27} parent=0 // pred_check_branch
    %233 = sbr.rel (0) target = $region29
  $region28: #{resnet_features.27} parent=0 // pred_region
    _
  $region29: #{resnet_features.27} parent=0 // pred_fallthru
    _

// kernel: resnet_features.28
$region0: #{resnet_features.28}
  #allocation0 [shape = 'u32[]', space=smem, size = 0x4, offset = 0x4, fixed_abs, tag = 'smem constant byte address 0x4 - core index']
  #allocation1 [shape = 'u32[144,128]{1,0:T(1,128)}', space=vmem, size = 0x12000, scoped, tag = 'internal scratch']
  %s0 = inlined_call_operand.vmem [shape: bf16[32,144], index: 0, kind: input, shape index: {}]
  %s1 = inlined_call_operand.vmem [shape: bf16[144,16], index: 1, kind: input, shape index: {}]
  %s2 = inlined_call_operand.vmem [shape: f32[1,16], index: 2, kind: input, shape index: {}]
  %s3 = inlined_call_operand.vmem [shape: f32[1,16], index: 3, kind: input, shape index: {}]
  %s4 = inlined_call_operand.vmem [shape: bf16[32,16], index: 4, kind: output, shape index: {}]
  %s5 = sld [smem:[#allocation0]]
  $region26: #{resnet_features.28} parent=0
    _
  %s7 = ssub.s32 1, %s5
  %s8 = scalar_select 0, %s7, %s5
  // Predicated region
  $region2: #{resnet_features.28} parent=0 // pred_check
    _
  $region3: #{resnet_features.28} parent=0 // pred_check_branch
    %10 = sbr.rel (0) target = $region5
  $region4: #{resnet_features.28} parent=0 // pred_region
    _
  $region5: #{resnet_features.28} parent=0 // pred_fallthru
    _
  // Predicated region
  $region6: #{resnet_features.28} parent=0 // pred_check
    _
  $region7: #{resnet_features.28} parent=0 // pred_check_branch
    %12 = sbr.rel (0) target = $region9
  $region8: #{resnet_features.28} parent=0 // pred_region
    _
  $region9: #{resnet_features.28} parent=0 // pred_fallthru
    _
  // Predicated region
  $region10: #{resnet_features.28} parent=0 // pred_check
    _
  $region11: #{resnet_features.28} parent=0 // pred_check_branch
    %14 = sbr.rel (0) target = $region13
  $region12: #{resnet_features.28} parent=0 // pred_region
    _
  $region13: #{resnet_features.28} parent=0 // pred_fallthru
    _
  // Predicated region
  $region14: #{resnet_features.28} parent=0 // pred_check
    _
  $region15: #{resnet_features.28} parent=0 // pred_check_branch
    %16 = sbr.rel (0) target = $region17
  $region16: #{resnet_features.28} parent=0 // pred_region
    _
  $region17: #{resnet_features.28} parent=0 // pred_fallthru
    _
  %v18 = vld [vmem:[%s0] sm:$0xff]
  %v19 = vld [vmem:[%s0 + $0x8] sm:$0xff]
  %v20 = vld [vmem:[%s0 + $0x10] sm:$0xff]
  %v21 = vld [vmem:[%s0 + $0x18] sm:$0xff]
  %v22 = vld [vmem:[%s1] sm:$0xf]
  %v23 = vld [vmem:[%s1 + $0x4] sm:$0xf]
  %v24 = vld [vmem:[%s1 + $0x8] sm:$0xf]
  %v25 = vld [vmem:[%s1 + $0xc] sm:$0xf]
  %v26 = vld [vmem:[%s1 + $0x10] sm:$0xf]
  %v27 = vld [vmem:[%s1 + $0x14] sm:$0xf]
  %v28 = vld [vmem:[%s1 + $0x18] sm:$0xf]
  %v29 = vld [vmem:[%s1 + $0x1c] sm:$0xf]
  %v30 = vld [vmem:[%s1 + $0x20] sm:$0xf]
  %v31 = vld [vmem:[%s1 + $0x24] sm:$0xf]
  %v32 = vld [vmem:[%s1 + $0x28] sm:$0xf]
  %v33 = vld [vmem:[%s1 + $0x2c] sm:$0xf]
  %v34 = vld [vmem:[%s1 + $0x30] sm:$0xf]
  %v35 = vld [vmem:[%s1 + $0x34] sm:$0xf]
  %v36 = vld [vmem:[%s1 + $0x38] sm:$0xf]
  %v37 = vld [vmem:[%s1 + $0x3c] sm:$0xf]
  %v38 = vld [vmem:[%s1 + $0x40] sm:$0xf]
  %v39 = vld [vmem:[%s1 + $0x44] sm:$0xf]
  %v44 = vunpack.c.l.b16 %v18
  %v45 = vunpack.c.h.b16 %v18
  %v46 = vunpack.c.l.b16 %v19
  %v47 = vunpack.c.h.b16 %v19
  %v48 = vunpack.c.l.b16 %v20
  %v49 = vunpack.c.h.b16 %v20
  %v50 = vunpack.c.l.b16 %v21
  %v51 = vunpack.c.h.b16 %v21
  %v52 = vpack.c.b16 %v46, %v44
  %v53 = vpack.c.b16 %v47, %v45
  %v54 = vpack.c.b16 %v50, %v48
  %v55 = vpack.c.b16 %v51, %v49
  %v76 = vunpack.c.l.b16 %v22
  %v77 = vunpack.c.l.b16 %v23
  %v78 = vunpack.c.l.b16 %v24
  %v79 = vunpack.c.l.b16 %v25
  %v80 = vunpack.c.l.b16 %v26
  %v81 = vunpack.c.l.b16 %v27
  %v82 = vunpack.c.l.b16 %v28
  %v83 = vunpack.c.l.b16 %v29
  %v84 = vunpack.c.l.b16 %v30
  %v85 = vunpack.c.l.b16 %v31
  %v86 = vunpack.c.l.b16 %v32
  %v87 = vunpack.c.l.b16 %v33
  %v88 = vunpack.c.l.b16 %v34
  %v89 = vunpack.c.l.b16 %v35
  %v90 = vunpack.c.l.b16 %v36
  %v91 = vunpack.c.l.b16 %v37
  %v92 = vunpack.c.l.b16 %v38
  %v93 = vunpack.c.l.b16 %v39
  %v94 = vpack.c.b16 %v77, %v76
  %v95 = vpack.c.b16 %v79, %v78
  %v96 = vpack.c.b16 %v81, %v80
  %v97 = vpack.c.b16 %v83, %v82
  %v98 = vpack.c.b16 %v85, %v84
  %v99 = vpack.c.b16 %v87, %v86
  %v100 = vpack.c.b16 %v89, %v88
  %v101 = vpack.c.b16 %v91, %v90
  %v102 = vpack.c.b16 %v93, %v92
  %vm112 = vcmask 130048
  %v114 = vsel %vm112, %v53, 0
  %v117 = vsel %vm112, %v55, 0
  %119 = vmatprep.subr.bf16.mxu0 0
  %120 = vmatpush1.bf16.msra.mxu0 %v94
  %121 = vmatprep.subr.bf16.mxu0 0
  %122 = vmatpush1.bf16.msra.mxu0 %v95
  %123 = vmatprep.subr.bf16.mxu0 0
  %124 = vmatpush1.bf16.msra.mxu0 %v96
  %125 = vmatprep.subr.bf16.mxu0 0
  %126 = vmatpush1.bf16.msra.mxu0 %v97
  %127 = vmatprep.subr.bf16.mxu0 0
  %128 = vmatpush1.bf16.msra.mxu0 %v98
  %129 = vmatprep.subr.bf16.mxu0 0
  %130 = vmatpush1.bf16.msra.mxu0 %v99
  %131 = vmatprep.subr.bf16.mxu0 0
  %132 = vmatpush1.bf16.msra.mxu0 %v100
  %133 = vmatprep.subr.bf16.mxu0 0
  %134 = vmatpush1.bf16.msra.mxu0 %v101
  %135 = vmatprep.subr.bf16.mxu0 0
  %136 = vmatpush1.bf16.msra.mxu0 %v102
  %137 = vmatprep.subr.bf16.mxu0 0
  %138 = vmatpush1.bf16.msra.mxu0 0
  %139 = vmatprep.subr.bf16.mxu0 0
  %140 = vmatpush1.bf16.msra.mxu0 0
  %141 = vmatprep.subr.bf16.mxu0 0
  %142 = vmatpush1.bf16.msra.mxu0 0
  %143 = vmatprep.subr.bf16.mxu0 0
  %144 = vmatpush1.bf16.msra.mxu0 0
  %145 = vmatprep.subr.bf16.mxu0 0
  %146 = vmatpush1.bf16.msra.mxu0 0
  %147 = vmatprep.subr.bf16.mxu0 0
  %148 = vmatpush1.bf16.msra.mxu0 0
  %149 = vmatprep.subr.bf16.mxu0 0
  %150 = vmatpush1.bf16.msra.mxu0 0
  %151 = vmatprep.mubr.bf16.mxu0 %v114
  %152 = vmatmul.mubr.bf16.gmra.mrb[0].mxu0 %v52
  %v153 = vpop.f32.mrb[0].mxu0
  %v154 = vadd.f32 0.0, %v153
  %v155 = vpop.f32.mrb[0].mxu0
  %v156 = vpop.f32.mrb[0].mxu0
  %v157 = vadd.f32 0.0, %v156
  %v158 = vpop.f32.mrb[0].mxu0
  %159 = vmatprep.mubr.bf16.mxu0 %v117
  %160 = vmatmul.mubr.bf16.gmra.mrb[0].mxu0 %v54
  %v161 = vpop.f32.mrb[0].mxu0
  %v162 = vadd.f32 0.0, %v161
  %v163 = vpop.f32.mrb[0].mxu0
  %v164 = vpop.f32.mrb[0].mxu0
  %v165 = vadd.f32 0.0, %v164
  %v166 = vpop.f32.mrb[0].mxu0
  %167 = vdwg.mxu0
  %v168 = vld [vmem:[%s2] sm:$0x1]
  %v170 = vlaneseq
  %v171 = vshrl.u32 %v170, 7
  %v172 = vsub.s32 0, %v171
  %v173 = vrot.slane %v168, %v172
  %v175 = vmul.f32 %v154, %v173
  %v176 = vmul.f32 %v157, %v173
  %v177 = vmul.f32 %v162, %v173
  %v178 = vmul.f32 %v165, %v173
  %v179 = vld [vmem:[%s3] sm:$0x1]
  %v181 = vlaneseq
  %v182 = vshrl.u32 %v181, 7
  %v183 = vsub.s32 0, %v182
  %v184 = vrot.slane %v179, %v183
  %v186 = vadd.f32 %v175, %v184
  %v187 = vadd.f32 %v176, %v184
  %v188 = vadd.f32 %v177, %v184
  %v189 = vadd.f32 %v178, %v184
  %v190 = vmax.f32 %v186, 0.0
  %v191 = vmax.f32 %v187, 0.0
  %v192 = vmax.f32 %v188, 0.0
  %v193 = vmax.f32 %v189, 0.0
  %v194 = vpack.c.bf16 %v191, %v190
  %v195 = vpack.c.bf16 %v193, %v192
  %v198 = vunpack.c.l.b16 %v194
  %v199 = vunpack.c.h.b16 %v194
  %v200 = vunpack.c.l.b16 %v195
  %v201 = vunpack.c.h.b16 %v195
  %v202 = vpack.c.b16 %v198, %v198
  %v203 = vpack.c.b16 %v199, %v199
  %v204 = vpack.c.b16 %v200, %v200
  %v205 = vpack.c.b16 %v201, %v201
  %vm210 = vcmask 125952
  %211 = vst.msk [vmem:[%s4] sm:$0xf] %vm210, %v202
  %212 = vst.msk [vmem:[%s4 + $0x4] sm:$0xf] %vm210, %v203
  %213 = vst.msk [vmem:[%s4 + $0x8] sm:$0xf] %vm210, %v204
  %214 = vst.msk [vmem:[%s4 + $0xc] sm:$0xf] %vm210, %v205
  // Predicated region
  $region18: #{resnet_features.28} parent=0 // pred_check
    _
  $region19: #{resnet_features.28} parent=0 // pred_check_branch
    %216 = sbr.rel (0) target = $region21
  $region20: #{resnet_features.28} parent=0 // pred_region
    _
  $region21: #{resnet_features.28} parent=0 // pred_fallthru
    _
  // Predicated region
  $region22: #{resnet_features.28} parent=0 // pred_check
    _
  $region23: #{resnet_features.28} parent=0 // pred_check_branch
    %218 = sbr.rel (0) target = $region25
  $region24: #{resnet_features.28} parent=0 // pred_region
    _
  $region25: #{resnet_features.28} parent=0 // pred_fallthru
    _

// kernel: resnet_features.30
$region0: #{resnet_features.30}
  #allocation0 [shape = 'u32[]', space=smem, size = 0x4, offset = 0x4, fixed_abs, tag = 'smem constant byte address 0x4 - core index']
  #allocation1 [shape = 'u32[144,128]{1,0:T(1,128)}', space=vmem, size = 0x12000, scoped, tag = 'internal scratch']
  %s0 = inlined_call_operand.vmem [shape: bf16[8,144], index: 0, kind: input, shape index: {}]
  %s1 = inlined_call_operand.vmem [shape: bf16[144,32], index: 1, kind: input, shape index: {}]
  %s2 = inlined_call_operand.vmem [shape: f32[1,32], index: 2, kind: input, shape index: {}]
  %s3 = inlined_call_operand.vmem [shape: f32[1,32], index: 3, kind: input, shape index: {}]
  %s4 = inlined_call_operand.vmem [shape: bf16[8,32], index: 4, kind: output, shape index: {}]
  %s5 = sld [smem:[#allocation0]]
  $region26: #{resnet_features.30} parent=0
    _
  %s7 = ssub.s32 1, %s5
  %s8 = scalar_select 0, %s7, %s5
  // Predicated region
  $region2: #{resnet_features.30} parent=0 // pred_check
    _
  $region3: #{resnet_features.30} parent=0 // pred_check_branch
    %10 = sbr.rel (0) target = $region5
  $region4: #{resnet_features.30} parent=0 // pred_region
    _
  $region5: #{resnet_features.30} parent=0 // pred_fallthru
    _
  // Predicated region
  $region6: #{resnet_features.30} parent=0 // pred_check
    _
  $region7: #{resnet_features.30} parent=0 // pred_check_branch
    %12 = sbr.rel (0) target = $region9
  $region8: #{resnet_features.30} parent=0 // pred_region
    _
  $region9: #{resnet_features.30} parent=0 // pred_fallthru
    _
  // Predicated region
  $region10: #{resnet_features.30} parent=0 // pred_check
    _
  $region11: #{resnet_features.30} parent=0 // pred_check_branch
    %14 = sbr.rel (0) target = $region13
  $region12: #{resnet_features.30} parent=0 // pred_region
    _
  $region13: #{resnet_features.30} parent=0 // pred_fallthru
    _
  // Predicated region
  $region14: #{resnet_features.30} parent=0 // pred_check
    _
  $region15: #{resnet_features.30} parent=0 // pred_check_branch
    %16 = sbr.rel (0) target = $region17
  $region16: #{resnet_features.30} parent=0 // pred_region
    _
  $region17: #{resnet_features.30} parent=0 // pred_fallthru
    _
  %v18 = vld [vmem:[%s0] sm:$0xff]
  %v19 = vld [vmem:[%s1] sm:$0xf]
  %v20 = vld [vmem:[%s1 + $0x4] sm:$0xf]
  %v21 = vld [vmem:[%s1 + $0x8] sm:$0xf]
  %v22 = vld [vmem:[%s1 + $0xc] sm:$0xf]
  %v23 = vld [vmem:[%s1 + $0x10] sm:$0xf]
  %v24 = vld [vmem:[%s1 + $0x14] sm:$0xf]
  %v25 = vld [vmem:[%s1 + $0x18] sm:$0xf]
  %v26 = vld [vmem:[%s1 + $0x1c] sm:$0xf]
  %v27 = vld [vmem:[%s1 + $0x20] sm:$0xf]
  %v28 = vld [vmem:[%s1 + $0x24] sm:$0xf]
  %v29 = vld [vmem:[%s1 + $0x28] sm:$0xf]
  %v30 = vld [vmem:[%s1 + $0x2c] sm:$0xf]
  %v31 = vld [vmem:[%s1 + $0x30] sm:$0xf]
  %v32 = vld [vmem:[%s1 + $0x34] sm:$0xf]
  %v33 = vld [vmem:[%s1 + $0x38] sm:$0xf]
  %v34 = vld [vmem:[%s1 + $0x3c] sm:$0xf]
  %v35 = vld [vmem:[%s1 + $0x40] sm:$0xf]
  %v36 = vld [vmem:[%s1 + $0x44] sm:$0xf]
  %v38 = vunpack.c.l.b16 %v18
  %v39 = vunpack.c.h.b16 %v18
  %v40 = vpack.c.b16 %v38, %v38
  %v41 = vpack.c.b16 %v39, %v39
  %v61 = vunpack.c.l.b16 %v19
  %v62 = vunpack.c.l.b16 %v20
  %v63 = vunpack.c.l.b16 %v21
  %v64 = vunpack.c.l.b16 %v22
  %v65 = vunpack.c.l.b16 %v23
  %v66 = vunpack.c.l.b16 %v24
  %v67 = vunpack.c.l.b16 %v25
  %v68 = vunpack.c.l.b16 %v26
  %v69 = vunpack.c.l.b16 %v27
  %v70 = vunpack.c.l.b16 %v28
  %v71 = vunpack.c.l.b16 %v29
  %v72 = vunpack.c.l.b16 %v30
  %v73 = vunpack.c.l.b16 %v31
  %v74 = vunpack.c.l.b16 %v32
  %v75 = vunpack.c.l.b16 %v33
  %v76 = vunpack.c.l.b16 %v34
  %v77 = vunpack.c.l.b16 %v35
  %v78 = vunpack.c.l.b16 %v36
  %v79 = vpack.c.b16 %v62, %v61
  %v80 = vpack.c.b16 %v64, %v63
  %v81 = vpack.c.b16 %v66, %v65
  %v82 = vpack.c.b16 %v68, %v67
  %v83 = vpack.c.b16 %v70, %v69
  %v84 = vpack.c.b16 %v72, %v71
  %v85 = vpack.c.b16 %v74, %v73
  %v86 = vpack.c.b16 %v76, %v75
  %v87 = vpack.c.b16 %v78, %v77
  %vm97 = vcmask 130048
  %v99 = vsel %vm97, %v41, 0
  %101 = vmatprep.subr.bf16.mxu0 0
  %102 = vmatpush1.bf16.msra.mxu0 %v79
  %103 = vmatprep.subr.bf16.mxu0 0
  %104 = vmatpush1.bf16.msra.mxu0 %v80
  %105 = vmatprep.subr.bf16.mxu0 0
  %106 = vmatpush1.bf16.msra.mxu0 %v81
  %107 = vmatprep.subr.bf16.mxu0 0
  %108 = vmatpush1.bf16.msra.mxu0 %v82
  %109 = vmatprep.subr.bf16.mxu0 0
  %110 = vmatpush1.bf16.msra.mxu0 %v83
  %111 = vmatprep.subr.bf16.mxu0 0
  %112 = vmatpush1.bf16.msra.mxu0 %v84
  %113 = vmatprep.subr.bf16.mxu0 0
  %114 = vmatpush1.bf16.msra.mxu0 %v85
  %115 = vmatprep.subr.bf16.mxu0 0
  %116 = vmatpush1.bf16.msra.mxu0 %v86
  %117 = vmatprep.subr.bf16.mxu0 0
  %118 = vmatpush1.bf16.msra.mxu0 %v87
  %119 = vmatprep.subr.bf16.mxu0 0
  %120 = vmatpush1.bf16.msra.mxu0 0
  %121 = vmatprep.subr.bf16.mxu0 0
  %122 = vmatpush1.bf16.msra.mxu0 0
  %123 = vmatprep.subr.bf16.mxu0 0
  %124 = vmatpush1.bf16.msra.mxu0 0
  %125 = vmatprep.subr.bf16.mxu0 0
  %126 = vmatpush1.bf16.msra.mxu0 0
  %127 = vmatprep.subr.bf16.mxu0 0
  %128 = vmatpush1.bf16.msra.mxu0 0
  %129 = vmatprep.subr.bf16.mxu0 0
  %130 = vmatpush1.bf16.msra.mxu0 0
  %131 = vmatprep.subr.bf16.mxu0 0
  %132 = vmatpush1.bf16.msra.mxu0 0
  %133 = vmatprep.mubr.bf16.mxu0 %v99
  %134 = vmatmul.mubr.bf16.gmra.mrb[0].mxu0 %v40
  %v135 = vpop.f32.mrb[0].mxu0
  %v136 = vadd.f32 0.0, %v135
  %v137 = vpop.f32.mrb[0].mxu0
  %v138 = vpop.f32.mrb[0].mxu0
  %v139 = vpop.f32.mrb[0].mxu0
  %140 = vdwg.mxu0
  %v141 = vld [vmem:[%s2] sm:$0x1]
  %v143 = vlaneseq
  %v144 = vshrl.u32 %v143, 7
  %v145 = vsub.s32 0, %v144
  %v146 = vrot.slane %v141, %v145
  %v148 = vmul.f32 %v136, %v146
  %v149 = vld [vmem:[%s3] sm:$0x1]
  %v151 = vlaneseq
  %v152 = vshrl.u32 %v151, 7
  %v153 = vsub.s32 0, %v152
  %v154 = vrot.slane %v149, %v153
  %v156 = vadd.f32 %v148, %v154
  %v157 = vmax.f32 %v156, 0.0
  %v158 = vpack.c.bf16 %v157, %v157
  %vm159 = vcmask 257024
  %160 = vst.msk [vmem:[%s4] sm:$0xf] %vm159, %v158
  // Predicated region
  $region18: #{resnet_features.30} parent=0 // pred_check
    _
  $region19: #{resnet_features.30} parent=0 // pred_check_branch
    %162 = sbr.rel (0) target = $region21
  $region20: #{resnet_features.30} parent=0 // pred_region
    _
  $region21: #{resnet_features.30} parent=0 // pred_fallthru
    _
  // Predicated region
  $region22: #{resnet_features.30} parent=0 // pred_check
    _
  $region23: #{resnet_features.30} parent=0 // pred_check_branch
    %164 = sbr.rel (0) target = $region25
  $region24: #{resnet_features.30} parent=0 // pred_region
    _
  $region25: #{resnet_features.30} parent=0 // pred_fallthru
    _

// kernel: resnet_features.31
$region0: #{resnet_features.31}
  #allocation0 [shape = 'u32[]', space=smem, size = 0x4, offset = 0x4, fixed_abs, tag = 'smem constant byte address 0x4 - core index']
  #allocation1 [shape = 'u32[144,128]{1,0:T(1,128)}', space=vmem, size = 0x12000, scoped, tag = 'internal scratch']
  %s0 = inlined_call_operand.vmem [shape: bf16[8,16], index: 0, kind: input, shape index: {}]
  %s1 = inlined_call_operand.vmem [shape: bf16[16,32], index: 1, kind: input, shape index: {}]
  %s2 = inlined_call_operand.vmem [shape: f32[1,32], index: 2, kind: input, shape index: {}]
  %s3 = inlined_call_operand.vmem [shape: f32[1,32], index: 3, kind: input, shape index: {}]
  %s4 = inlined_call_operand.vmem [shape: bf16[8,32], index: 4, kind: output, shape index: {}]
  %s5 = sld [smem:[#allocation0]]
  $region26: #{resnet_features.31} parent=0
    _
  %s7 = ssub.s32 1, %s5
  %s8 = scalar_select 0, %s7, %s5
  // Predicated region
  $region2: #{resnet_features.31} parent=0 // pred_check
    _
  $region3: #{resnet_features.31} parent=0 // pred_check_branch
    %10 = sbr.rel (0) target = $region5
  $region4: #{resnet_features.31} parent=0 // pred_region
    _
  $region5: #{resnet_features.31} parent=0 // pred_fallthru
    _
  // Predicated region
  $region6: #{resnet_features.31} parent=0 // pred_check
    _
  $region7: #{resnet_features.31} parent=0 // pred_check_branch
    %12 = sbr.rel (0) target = $region9
  $region8: #{resnet_features.31} parent=0 // pred_region
    _
  $region9: #{resnet_features.31} parent=0 // pred_fallthru
    _
  // Predicated region
  $region10: #{resnet_features.31} parent=0 // pred_check
    _
  $region11: #{resnet_features.31} parent=0 // pred_check_branch
    %14 = sbr.rel (0) target = $region13
  $region12: #{resnet_features.31} parent=0 // pred_region
    _
  $region13: #{resnet_features.31} parent=0 // pred_fallthru
    _
  // Predicated region
  $region14: #{resnet_features.31} parent=0 // pred_check
    _
  $region15: #{resnet_features.31} parent=0 // pred_check_branch
    %16 = sbr.rel (0) target = $region17
  $region16: #{resnet_features.31} parent=0 // pred_region
    _
  $region17: #{resnet_features.31} parent=0 // pred_fallthru
    _
  %v18 = vld [vmem:[%s0] sm:$0xf]
  %v19 = vld [vmem:[%s1] sm:$0xf]
  %v20 = vld [vmem:[%s1 + $0x4] sm:$0xf]
  %v23 = vunpack.c.l.b16 %v19
  %v24 = vunpack.c.l.b16 %v20
  %v25 = vpack.c.b16 %v24, %v23
  %vm27 = vcmask 130048
  %v29 = vsel %vm27, %v18, 0
  %31 = vmatprep.subr.bf16.mxu0 0
  %32 = vmatpush1.bf16.msra.mxu0 %v25
  %33 = vmatprep.subr.bf16.mxu0 0
  %34 = vmatpush1.bf16.msra.mxu0 0
  %35 = vmatprep.subr.bf16.mxu0 0
  %36 = vmatpush1.bf16.msra.mxu0 0
  %37 = vmatprep.subr.bf16.mxu0 0
  %38 = vmatpush1.bf16.msra.mxu0 0
  %39 = vmatprep.subr.bf16.mxu0 0
  %40 = vmatpush1.bf16.msra.mxu0 0
  %41 = vmatprep.subr.bf16.mxu0 0
  %42 = vmatpush1.bf16.msra.mxu0 0
  %43 = vmatprep.subr.bf16.mxu0 0
  %44 = vmatpush1.bf16.msra.mxu0 0
  %45 = vmatprep.subr.bf16.mxu0 0
  %46 = vmatpush1.bf16.msra.mxu0 0
  %47 = vmatprep.subr.bf16.mxu0 0
  %48 = vmatpush1.bf16.msra.mxu0 0
  %49 = vmatprep.subr.bf16.mxu0 0
  %50 = vmatpush1.bf16.msra.mxu0 0
  %51 = vmatprep.subr.bf16.mxu0 0
  %52 = vmatpush1.bf16.msra.mxu0 0
  %53 = vmatprep.subr.bf16.mxu0 0
  %54 = vmatpush1.bf16.msra.mxu0 0
  %55 = vmatprep.subr.bf16.mxu0 0
  %56 = vmatpush1.bf16.msra.mxu0 0
  %57 = vmatprep.subr.bf16.mxu0 0
  %58 = vmatpush1.bf16.msra.mxu0 0
  %59 = vmatprep.subr.bf16.mxu0 0
  %60 = vmatpush1.bf16.msra.mxu0 0
  %61 = vmatprep.subr.bf16.mxu0 0
  %62 = vmatpush1.bf16.msra.mxu0 0
  %63 = vmatprep.mubr.bf16.mxu0 0
  %64 = vmatmul.mubr.bf16.gmra.mrb[0].mxu0 %v29
  %v65 = vpop.f32.mrb[0].mxu0
  %v66 = vadd.f32 0.0, %v65
  %v67 = vpop.f32.mrb[0].mxu0
  %v68 = vpop.f32.mrb[0].mxu0
  %v69 = vpop.f32.mrb[0].mxu0
  %70 = vdwg.mxu0
  %v71 = vld [vmem:[%s2] sm:$0x1]
  %v73 = vlaneseq
  %v74 = vshrl.u32 %v73, 7
  %v75 = vsub.s32 0, %v74
  %v76 = vrot.slane %v71, %v75
  %v78 = vmul.f32 %v66, %v76
  %v79 = vld [vmem:[%s3] sm:$0x1]
  %v81 = vlaneseq
  %v82 = vshrl.u32 %v81, 7
  %v83 = vsub.s32 0, %v82
  %v84 = vrot.slane %v79, %v83
  %v86 = vadd.f32 %v78, %v84
  %v87 = vpack.c.bf16 %v86, %v86
  %vm88 = vcmask 257024
  %89 = vst.msk [vmem:[%s4] sm:$0xf] %vm88, %v87
  // Predicated region
  $region18: #{resnet_features.31} parent=0 // pred_check
    _
  $region19: #{resnet_features.31} parent=0 // pred_check_branch
    %91 = sbr.rel (0) target = $region21
  $region20: #{resnet_features.31} parent=0 // pred_region
    _
  $region21: #{resnet_features.31} parent=0 // pred_fallthru
    _
  // Predicated region
  $region22: #{resnet_features.31} parent=0 // pred_check
    _
  $region23: #{resnet_features.31} parent=0 // pred_check_branch
    %93 = sbr.rel (0) target = $region25
  $region24: #{resnet_features.31} parent=0 // pred_region
    _
  $region25: #{resnet_features.31} parent=0 // pred_fallthru
    _

// kernel: resnet_features.32
$region0: #{resnet_features.32}
  #allocation0 [shape = 'u32[]', space=smem, size = 0x4, offset = 0x4, fixed_abs, tag = 'smem constant byte address 0x4 - core index']
  #allocation1 [shape = 'u32[144,128]{1,0:T(1,128)}', space=vmem, size = 0x12000, scoped, tag = 'internal scratch']
  %s0 = inlined_call_operand.vmem [shape: bf16[8,288], index: 0, kind: input, shape index: {}]
  %s1 = inlined_call_operand.vmem [shape: bf16[288,32], index: 1, kind: input, shape index: {}]
  %s2 = inlined_call_operand.vmem [shape: f32[1,32], index: 2, kind: input, shape index: {}]
  %s3 = inlined_call_operand.vmem [shape: f32[1,32], index: 3, kind: input, shape index: {}]
  %s4 = inlined_call_operand.vmem [shape: bf16[8,32], index: 4, kind: input, shape index: {}]
  %s5 = inlined_call_operand.vmem [shape: bf16[8,32], index: 5, kind: output, shape index: {}]
  %s6 = sld [smem:[#allocation0]]
  $region30: #{resnet_features.32} parent=0
    _
  %s8 = ssub.s32 1, %s6
  %s9 = scalar_select 0, %s8, %s6
  // Predicated region
  $region2: #{resnet_features.32} parent=0 // pred_check
    _
  $region3: #{resnet_features.32} parent=0 // pred_check_branch
    %11 = sbr.rel (0) target = $region5
  $region4: #{resnet_features.32} parent=0 // pred_region
    _
  $region5: #{resnet_features.32} parent=0 // pred_fallthru
    _
  // Predicated region
  $region6: #{resnet_features.32} parent=0 // pred_check
    _
  $region7: #{resnet_features.32} parent=0 // pred_check_branch
    %13 = sbr.rel (0) target = $region9
  $region8: #{resnet_features.32} parent=0 // pred_region
    _
  $region9: #{resnet_features.32} parent=0 // pred_fallthru
    _
  // Predicated region
  $region10: #{resnet_features.32} parent=0 // pred_check
    _
  $region11: #{resnet_features.32} parent=0 // pred_check_branch
    %15 = sbr.rel (0) target = $region13
  $region12: #{resnet_features.32} parent=0 // pred_region
    _
  $region13: #{resnet_features.32} parent=0 // pred_fallthru
    _
  // Predicated region
  $region14: #{resnet_features.32} parent=0 // pred_check
    _
  $region15: #{resnet_features.32} parent=0 // pred_check_branch
    %17 = sbr.rel (0) target = $region17
  $region16: #{resnet_features.32} parent=0 // pred_region
    _
  $region17: #{resnet_features.32} parent=0 // pred_fallthru
    _
  // Predicated region
  $region18: #{resnet_features.32} parent=0 // pred_check
    _
  $region19: #{resnet_features.32} parent=0 // pred_check_branch
    %19 = sbr.rel (0) target = $region21
  $region20: #{resnet_features.32} parent=0 // pred_region
    _
  $region21: #{resnet_features.32} parent=0 // pred_fallthru
    _
  %v21 = vld [vmem:[%s0] sm:$0xff]
  %v22 = vld [vmem:[%s0 + $0x8] sm:$0xf]
  %v23 = vld [vmem:[%s1] sm:$0xf]
  %v24 = vld [vmem:[%s1 + $0x4] sm:$0xf]
  %v25 = vld [vmem:[%s1 + $0x8] sm:$0xf]
  %v26 = vld [vmem:[%s1 + $0xc] sm:$0xf]
  %v27 = vld [vmem:[%s1 + $0x10] sm:$0xf]
  %v28 = vld [vmem:[%s1 + $0x14] sm:$0xf]
  %v29 = vld [vmem:[%s1 + $0x18] sm:$0xf]
  %v30 = vld [vmem:[%s1 + $0x1c] sm:$0xf]
  %v31 = vld [vmem:[%s1 + $0x20] sm:$0xf]
  %v32 = vld [vmem:[%s1 + $0x24] sm:$0xf]
  %v33 = vld [vmem:[%s1 + $0x28] sm:$0xf]
  %v34 = vld [vmem:[%s1 + $0x2c] sm:$0xf]
  %v35 = vld [vmem:[%s1 + $0x30] sm:$0xf]
  %v36 = vld [vmem:[%s1 + $0x34] sm:$0xf]
  %v37 = vld [vmem:[%s1 + $0x38] sm:$0xf]
  %v38 = vld [vmem:[%s1 + $0x3c] sm:$0xf]
  %v39 = vld [vmem:[%s1 + $0x40] sm:$0xf]
  %v40 = vld [vmem:[%s1 + $0x44] sm:$0xf]
  %v41 = vld [vmem:[%s1 + $0x48] sm:$0xf]
  %v42 = vld [vmem:[%s1 + $0x4c] sm:$0xf]
  %v43 = vld [vmem:[%s1 + $0x50] sm:$0xf]
  %v44 = vld [vmem:[%s1 + $0x54] sm:$0xf]
  %v45 = vld [vmem:[%s1 + $0x58] sm:$0xf]
  %v46 = vld [vmem:[%s1 + $0x5c] sm:$0xf]
  %v47 = vld [vmem:[%s1 + $0x60] sm:$0xf]
  %v48 = vld [vmem:[%s1 + $0x64] sm:$0xf]
  %v49 = vld [vmem:[%s1 + $0x68] sm:$0xf]
  %v50 = vld [vmem:[%s1 + $0x6c] sm:$0xf]
  %v51 = vld [vmem:[%s1 + $0x70] sm:$0xf]
  %v52 = vld [vmem:[%s1 + $0x74] sm:$0xf]
  %v53 = vld [vmem:[%s1 + $0x78] sm:$0xf]
  %v54 = vld [vmem:[%s1 + $0x7c] sm:$0xf]
  %v55 = vld [vmem:[%s1 + $0x80] sm:$0xf]
  %v56 = vld [vmem:[%s1 + $0x84] sm:$0xf]
  %v57 = vld [vmem:[%s1 + $0x88] sm:$0xf]
  %v58 = vld [vmem:[%s1 + $0x8c] sm:$0xf]
  %v61 = vunpack.c.l.b16 %v21
  %v62 = vunpack.c.h.b16 %v21
  %v63 = vunpack.c.l.b16 %v22
  %v64 = vpack.c.b16 %v61, %v61
  %v65 = vpack.c.b16 %v62, %v62
  %v66 = vpack.c.b16 %v63, %v63
  %v105 = vunpack.c.l.b16 %v23
  %v106 = vunpack.c.l.b16 %v24
  %v107 = vunpack.c.l.b16 %v25
  %v108 = vunpack.c.l.b16 %v26
  %v109 = vunpack.c.l.b16 %v27
  %v110 = vunpack.c.l.b16 %v28
  %v111 = vunpack.c.l.b16 %v29
  %v112 = vunpack.c.l.b16 %v30
  %v113 = vunpack.c.l.b16 %v31
  %v114 = vunpack.c.l.b16 %v32
  %v115 = vunpack.c.l.b16 %v33
  %v116 = vunpack.c.l.b16 %v34
  %v117 = vunpack.c.l.b16 %v35
  %v118 = vunpack.c.l.b16 %v36
  %v119 = vunpack.c.l.b16 %v37
  %v120 = vunpack.c.l.b16 %v38
  %v121 = vunpack.c.l.b16 %v39
  %v122 = vunpack.c.l.b16 %v40
  %v123 = vunpack.c.l.b16 %v41
  %v124 = vunpack.c.l.b16 %v42
  %v125 = vunpack.c.l.b16 %v43
  %v126 = vunpack.c.l.b16 %v44
  %v127 = vunpack.c.l.b16 %v45
  %v128 = vunpack.c.l.b16 %v46
  %v129 = vunpack.c.l.b16 %v47
  %v130 = vunpack.c.l.b16 %v48
  %v131 = vunpack.c.l.b16 %v49
  %v132 = vunpack.c.l.b16 %v50
  %v133 = vunpack.c.l.b16 %v51
  %v134 = vunpack.c.l.b16 %v52
  %v135 = vunpack.c.l.b16 %v53
  %v136 = vunpack.c.l.b16 %v54
  %v137 = vunpack.c.l.b16 %v55
  %v138 = vunpack.c.l.b16 %v56
  %v139 = vunpack.c.l.b16 %v57
  %v140 = vunpack.c.l.b16 %v58
  %v141 = vpack.c.b16 %v106, %v105
  %v142 = vpack.c.b16 %v108, %v107
  %v143 = vpack.c.b16 %v110, %v109
  %v144 = vpack.c.b16 %v112, %v111
  %v145 = vpack.c.b16 %v114, %v113
  %v146 = vpack.c.b16 %v116, %v115
  %v147 = vpack.c.b16 %v118, %v117
  %v148 = vpack.c.b16 %v120, %v119
  %v149 = vpack.c.b16 %v122, %v121
  %v150 = vpack.c.b16 %v124, %v123
  %v151 = vpack.c.b16 %v126, %v125
  %v152 = vpack.c.b16 %v128, %v127
  %v153 = vpack.c.b16 %v130, %v129
  %v154 = vpack.c.b16 %v132, %v131
  %v155 = vpack.c.b16 %v134, %v133
  %v156 = vpack.c.b16 %v136, %v135
  %v157 = vpack.c.b16 %v138, %v137
  %v158 = vpack.c.b16 %v140, %v139
  %vm177 = vcmask 261120
  %v179 = vsel %vm177, %v66, 0
  %181 = vmatprep.subr.bf16.mxu0 0
  %182 = vmatpush1.bf16.msra.mxu0 %v141
  %183 = vmatprep.subr.bf16.mxu0 0
  %184 = vmatpush1.bf16.msra.mxu0 %v142
  %185 = vmatprep.subr.bf16.mxu0 0
  %186 = vmatpush1.bf16.msra.mxu0 %v143
  %187 = vmatprep.subr.bf16.mxu0 0
  %188 = vmatpush1.bf16.msra.mxu0 %v144
  %189 = vmatprep.subr.bf16.mxu0 0
  %190 = vmatpush1.bf16.msra.mxu0 %v145
  %191 = vmatprep.subr.bf16.mxu0 0
  %192 = vmatpush1.bf16.msra.mxu0 %v146
  %193 = vmatprep.subr.bf16.mxu0 0
  %194 = vmatpush1.bf16.msra.mxu0 %v147
  %195 = vmatprep.subr.bf16.mxu0 0
  %196 = vmatpush1.bf16.msra.mxu0 %v148
  %197 = vmatprep.subr.bf16.mxu0 0
  %198 = vmatpush1.bf16.msra.mxu0 %v149
  %199 = vmatprep.subr.bf16.mxu0 0
  %200 = vmatpush1.bf16.msra.mxu0 %v150
  %201 = vmatprep.subr.bf16.mxu0 0
  %202 = vmatpush1.bf16.msra.mxu0 %v151
  %203 = vmatprep.subr.bf16.mxu0 0
  %204 = vmatpush1.bf16.msra.mxu0 %v152
  %205 = vmatprep.subr.bf16.mxu0 0
  %206 = vmatpush1.bf16.msra.mxu0 %v153
  %207 = vmatprep.subr.bf16.mxu0 0
  %208 = vmatpush1.bf16.msra.mxu0 %v154
  %209 = vmatprep.subr.bf16.mxu0 0
  %210 = vmatpush1.bf16.msra.mxu0 %v155
  %211 = vmatprep.subr.bf16.mxu0 0
  %212 = vmatpush1.bf16.msra.mxu0 %v156
  %213 = vmatprep.mubr.bf16.mxu0 %v65
  %214 = vmatmul.mubr.bf16.gmra.mrb[0].mxu0 %v64
  %v215 = vpop.f32.mrb[0].mxu0
  %v216 = vadd.f32 0.0, %v215
  %v217 = vpop.f32.mrb[0].mxu0
  %v218 = vpop.f32.mrb[0].mxu0
  %v219 = vpop.f32.mrb[0].mxu0
  %220 = vdwg.mxu0
  %221 = vmatprep.subr.bf16.mxu0 0
  %222 = vmatpush1.bf16.msra.mxu0 %v157
  %223 = vmatprep.subr.bf16.mxu0 0
  %224 = vmatpush1.bf16.msra.mxu0 %v158
  %225 = vmatprep.subr.bf16.mxu0 0
  %226 = vmatpush1.bf16.msra.mxu0 0
  %227 = vmatprep.subr.bf16.mxu0 0
  %228 = vmatpush1.bf16.msra.mxu0 0
  %229 = vmatprep.subr.bf16.mxu0 0
  %230 = vmatpush1.bf16.msra.mxu0 0
  %231 = vmatprep.subr.bf16.mxu0 0
  %232 = vmatpush1.bf16.msra.mxu0 0
  %233 = vmatprep.subr.bf16.mxu0 0
  %234 = vmatpush1.bf16.msra.mxu0 0
  %235 = vmatprep.subr.bf16.mxu0 0
  %236 = vmatpush1.bf16.msra.mxu0 0
  %237 = vmatprep.subr.bf16.mxu0 0
  %238 = vmatpush1.bf16.msra.mxu0 0
  %239 = vmatprep.subr.bf16.mxu0 0
  %240 = vmatpush1.bf16.msra.mxu0 0
  %241 = vmatprep.subr.bf16.mxu0 0
  %242 = vmatpush1.bf16.msra.mxu0 0
  %243 = vmatprep.subr.bf16.mxu0 0
  %244 = vmatpush1.bf16.msra.mxu0 0
  %245 = vmatprep.subr.bf16.mxu0 0
  %246 = vmatpush1.bf16.msra.mxu0 0
  %247 = vmatprep.subr.bf16.mxu0 0
  %248 = vmatpush1.bf16.msra.mxu0 0
  %249 = vmatprep.subr.bf16.mxu0 0
  %250 = vmatpush1.bf16.msra.mxu0 0
  %251 = vmatprep.subr.bf16.mxu0 0
  %252 = vmatpush1.bf16.msra.mxu0 0
  %253 = vmatprep.mubr.bf16.mxu0 0
  %254 = vmatmul.mubr.bf16.gmra.mrb[0].mxu0 %v179
  %v255 = vpop.f32.mrb[0].mxu0
  %v256 = vadd.f32 %v216, %v255
  %v257 = vpop.f32.mrb[0].mxu0
  %v258 = vpop.f32.mrb[0].mxu0
  %v259 = vpop.f32.mrb[0].mxu0
  %260 = vdwg.mxu0
  %v261 = vld [vmem:[%s2] sm:$0x1]
  %v263 = vlaneseq
  %v264 = vshrl.u32 %v263, 7
  %v265 = vsub.s32 0, %v264
  %v266 = vrot.slane %v261, %v265
  %v268 = vmul.f32 %v256, %v266
  %v269 = vld [vmem:[%s3] sm:$0x1]
  %v271 = vlaneseq
  %v272 = vshrl.u32 %v271, 7
  %v273 = vsub.s32 0, %v272
  %v274 = vrot.slane %v269, %v273
  %v276 = vadd.f32 %v268, %v274
  %v277 = vld [vmem:[%s4] sm:$0xf]
  %v278 = vunpack.c.l.bf16 %v277
  %v279 = vadd.f32 %v276, %v278
  %v280 = vmax.f32 %v279, 0.0
  %v281 = vpack.c.bf16 %v280, %v280
  %vm282 = vcmask 257024
  %283 = vst.msk [vmem:[%s5] sm:$0xf] %vm282, %v281
  // Predicated region
  $region22: #{resnet_features.32} parent=0 // pred_check
    _
  $region23: #{resnet_features.32} parent=0 // pred_check_branch
    %285 = sbr.rel (0) target = $region25
  $region24: #{resnet_features.32} parent=0 // pred_region
    _
  $region25: #{resnet_features.32} parent=0 // pred_fallthru
    _
  // Predicated region
  $region26: #{resnet_features.32} parent=0 // pred_check
    _
  $region27: #{resnet_features.32} parent=0 // pred_check_branch
    %287 = sbr.rel (0) target = $region29
  $region28: #{resnet_features.32} parent=0 // pred_region
    _
  $region29: #{resnet_features.32} parent=0 // pred_fallthru
    _

// kernel: resnet_features.33
$region0: #{resnet_features.33}
  #allocation0 [shape = 'u32[]', space=smem, size = 0x4, offset = 0x4, fixed_abs, tag = 'smem constant byte address 0x4 - core index']
  #allocation1 [shape = 'u32[144,128]{1,0:T(1,128)}', space=vmem, size = 0x12000, scoped, tag = 'internal scratch']
  %s0 = inlined_call_operand.vmem [shape: bf16[8,288], index: 0, kind: input, shape index: {}]
  %s1 = inlined_call_operand.vmem [shape: bf16[288,32], index: 1, kind: input, shape index: {}]
  %s2 = inlined_call_operand.vmem [shape: f32[1,32], index: 2, kind: input, shape index: {}]
  %s3 = inlined_call_operand.vmem [shape: f32[1,32], index: 3, kind: input, shape index: {}]
  %s4 = inlined_call_operand.vmem [shape: bf16[8,32], index: 4, kind: output, shape index: {}]
  %s5 = sld [smem:[#allocation0]]
  $region26: #{resnet_features.33} parent=0
    _
  %s7 = ssub.s32 1, %s5
  %s8 = scalar_select 0, %s7, %s5
  // Predicated region
  $region2: #{resnet_features.33} parent=0 // pred_check
    _
  $region3: #{resnet_features.33} parent=0 // pred_check_branch
    %10 = sbr.rel (0) target = $region5
  $region4: #{resnet_features.33} parent=0 // pred_region
    _
  $region5: #{resnet_features.33} parent=0 // pred_fallthru
    _
  // Predicated region
  $region6: #{resnet_features.33} parent=0 // pred_check
    _
  $region7: #{resnet_features.33} parent=0 // pred_check_branch
    %12 = sbr.rel (0) target = $region9
  $region8: #{resnet_features.33} parent=0 // pred_region
    _
  $region9: #{resnet_features.33} parent=0 // pred_fallthru
    _
  // Predicated region
  $region10: #{resnet_features.33} parent=0 // pred_check
    _
  $region11: #{resnet_features.33} parent=0 // pred_check_branch
    %14 = sbr.rel (0) target = $region13
  $region12: #{resnet_features.33} parent=0 // pred_region
    _
  $region13: #{resnet_features.33} parent=0 // pred_fallthru
    _
  // Predicated region
  $region14: #{resnet_features.33} parent=0 // pred_check
    _
  $region15: #{resnet_features.33} parent=0 // pred_check_branch
    %16 = sbr.rel (0) target = $region17
  $region16: #{resnet_features.33} parent=0 // pred_region
    _
  $region17: #{resnet_features.33} parent=0 // pred_fallthru
    _
  %v18 = vld [vmem:[%s0] sm:$0xff]
  %v19 = vld [vmem:[%s0 + $0x8] sm:$0xf]
  %v20 = vld [vmem:[%s1] sm:$0xf]
  %v21 = vld [vmem:[%s1 + $0x4] sm:$0xf]
  %v22 = vld [vmem:[%s1 + $0x8] sm:$0xf]
  %v23 = vld [vmem:[%s1 + $0xc] sm:$0xf]
  %v24 = vld [vmem:[%s1 + $0x10] sm:$0xf]
  %v25 = vld [vmem:[%s1 + $0x14] sm:$0xf]
  %v26 = vld [vmem:[%s1 + $0x18] sm:$0xf]
  %v27 = vld [vmem:[%s1 + $0x1c] sm:$0xf]
  %v28 = vld [vmem:[%s1 + $0x20] sm:$0xf]
  %v29 = vld [vmem:[%s1 + $0x24] sm:$0xf]
  %v30 = vld [vmem:[%s1 + $0x28] sm:$0xf]
  %v31 = vld [vmem:[%s1 + $0x2c] sm:$0xf]
  %v32 = vld [vmem:[%s1 + $0x30] sm:$0xf]
  %v33 = vld [vmem:[%s1 + $0x34] sm:$0xf]
  %v34 = vld [vmem:[%s1 + $0x38] sm:$0xf]
  %v35 = vld [vmem:[%s1 + $0x3c] sm:$0xf]
  %v36 = vld [vmem:[%s1 + $0x40] sm:$0xf]
  %v37 = vld [vmem:[%s1 + $0x44] sm:$0xf]
  %v38 = vld [vmem:[%s1 + $0x48] sm:$0xf]
  %v39 = vld [vmem:[%s1 + $0x4c] sm:$0xf]
  %v40 = vld [vmem:[%s1 + $0x50] sm:$0xf]
  %v41 = vld [vmem:[%s1 + $0x54] sm:$0xf]
  %v42 = vld [vmem:[%s1 + $0x58] sm:$0xf]
  %v43 = vld [vmem:[%s1 + $0x5c] sm:$0xf]
  %v44 = vld [vmem:[%s1 + $0x60] sm:$0xf]
  %v45 = vld [vmem:[%s1 + $0x64] sm:$0xf]
  %v46 = vld [vmem:[%s1 + $0x68] sm:$0xf]
  %v47 = vld [vmem:[%s1 + $0x6c] sm:$0xf]
  %v48 = vld [vmem:[%s1 + $0x70] sm:$0xf]
  %v49 = vld [vmem:[%s1 + $0x74] sm:$0xf]
  %v50 = vld [vmem:[%s1 + $0x78] sm:$0xf]
  %v51 = vld [vmem:[%s1 + $0x7c] sm:$0xf]
  %v52 = vld [vmem:[%s1 + $0x80] sm:$0xf]
  %v53 = vld [vmem:[%s1 + $0x84] sm:$0xf]
  %v54 = vld [vmem:[%s1 + $0x88] sm:$0xf]
  %v55 = vld [vmem:[%s1 + $0x8c] sm:$0xf]
  %v58 = vunpack.c.l.b16 %v18
  %v59 = vunpack.c.h.b16 %v18
  %v60 = vunpack.c.l.b16 %v19
  %v61 = vpack.c.b16 %v58, %v58
  %v62 = vpack.c.b16 %v59, %v59
  %v63 = vpack.c.b16 %v60, %v60
  %v102 = vunpack.c.l.b16 %v20
  %v103 = vunpack.c.l.b16 %v21
  %v104 = vunpack.c.l.b16 %v22
  %v105 = vunpack.c.l.b16 %v23
  %v106 = vunpack.c.l.b16 %v24
  %v107 = vunpack.c.l.b16 %v25
  %v108 = vunpack.c.l.b16 %v26
  %v109 = vunpack.c.l.b16 %v27
  %v110 = vunpack.c.l.b16 %v28
  %v111 = vunpack.c.l.b16 %v29
  %v112 = vunpack.c.l.b16 %v30
  %v113 = vunpack.c.l.b16 %v31
  %v114 = vunpack.c.l.b16 %v32
  %v115 = vunpack.c.l.b16 %v33
  %v116 = vunpack.c.l.b16 %v34
  %v117 = vunpack.c.l.b16 %v35
  %v118 = vunpack.c.l.b16 %v36
  %v119 = vunpack.c.l.b16 %v37
  %v120 = vunpack.c.l.b16 %v38
  %v121 = vunpack.c.l.b16 %v39
  %v122 = vunpack.c.l.b16 %v40
  %v123 = vunpack.c.l.b16 %v41
  %v124 = vunpack.c.l.b16 %v42
  %v125 = vunpack.c.l.b16 %v43
  %v126 = vunpack.c.l.b16 %v44
  %v127 = vunpack.c.l.b16 %v45
  %v128 = vunpack.c.l.b16 %v46
  %v129 = vunpack.c.l.b16 %v47
  %v130 = vunpack.c.l.b16 %v48
  %v131 = vunpack.c.l.b16 %v49
  %v132 = vunpack.c.l.b16 %v50
  %v133 = vunpack.c.l.b16 %v51
  %v134 = vunpack.c.l.b16 %v52
  %v135 = vunpack.c.l.b16 %v53
  %v136 = vunpack.c.l.b16 %v54
  %v137 = vunpack.c.l.b16 %v55
  %v138 = vpack.c.b16 %v103, %v102
  %v139 = vpack.c.b16 %v105, %v104
  %v140 = vpack.c.b16 %v107, %v106
  %v141 = vpack.c.b16 %v109, %v108
  %v142 = vpack.c.b16 %v111, %v110
  %v143 = vpack.c.b16 %v113, %v112
  %v144 = vpack.c.b16 %v115, %v114
  %v145 = vpack.c.b16 %v117, %v116
  %v146 = vpack.c.b16 %v119, %v118
  %v147 = vpack.c.b16 %v121, %v120
  %v148 = vpack.c.b16 %v123, %v122
  %v149 = vpack.c.b16 %v125, %v124
  %v150 = vpack.c.b16 %v127, %v126
  %v151 = vpack.c.b16 %v129, %v128
  %v152 = vpack.c.b16 %v131, %v130
  %v153 = vpack.c.b16 %v133, %v132
  %v154 = vpack.c.b16 %v135, %v134
  %v155 = vpack.c.b16 %v137, %v136
  %vm174 = vcmask 261120
  %v176 = vsel %vm174, %v63, 0
  %178 = vmatprep.subr.bf16.mxu0 0
  %179 = vmatpush1.bf16.msra.mxu0 %v138
  %180 = vmatprep.subr.bf16.mxu0 0
  %181 = vmatpush1.bf16.msra.mxu0 %v139
  %182 = vmatprep.subr.bf16.mxu0 0
  %183 = vmatpush1.bf16.msra.mxu0 %v140
  %184 = vmatprep.subr.bf16.mxu0 0
  %185 = vmatpush1.bf16.msra.mxu0 %v141
  %186 = vmatprep.subr.bf16.mxu0 0
  %187 = vmatpush1.bf16.msra.mxu0 %v142
  %188 = vmatprep.subr.bf16.mxu0 0
  %189 = vmatpush1.bf16.msra.mxu0 %v143
  %190 = vmatprep.subr.bf16.mxu0 0
  %191 = vmatpush1.bf16.msra.mxu0 %v144
  %192 = vmatprep.subr.bf16.mxu0 0
  %193 = vmatpush1.bf16.msra.mxu0 %v145
  %194 = vmatprep.subr.bf16.mxu0 0
  %195 = vmatpush1.bf16.msra.mxu0 %v146
  %196 = vmatprep.subr.bf16.mxu0 0
  %197 = vmatpush1.bf16.msra.mxu0 %v147
  %198 = vmatprep.subr.bf16.mxu0 0
  %199 = vmatpush1.bf16.msra.mxu0 %v148
  %200 = vmatprep.subr.bf16.mxu0 0
  %201 = vmatpush1.bf16.msra.mxu0 %v149
  %202 = vmatprep.subr.bf16.mxu0 0
  %203 = vmatpush1.bf16.msra.mxu0 %v150
  %204 = vmatprep.subr.bf16.mxu0 0
  %205 = vmatpush1.bf16.msra.mxu0 %v151
  %206 = vmatprep.subr.bf16.mxu0 0
  %207 = vmatpush1.bf16.msra.mxu0 %v152
  %208 = vmatprep.subr.bf16.mxu0 0
  %209 = vmatpush1.bf16.msra.mxu0 %v153
  %210 = vmatprep.mubr.bf16.mxu0 %v62
  %211 = vmatmul.mubr.bf16.gmra.mrb[0].mxu0 %v61
  %v212 = vpop.f32.mrb[0].mxu0
  %v213 = vadd.f32 0.0, %v212
  %v214 = vpop.f32.mrb[0].mxu0
  %v215 = vpop.f32.mrb[0].mxu0
  %v216 = vpop.f32.mrb[0].mxu0
  %217 = vdwg.mxu0
  %218 = vmatprep.subr.bf16.mxu0 0
  %219 = vmatpush1.bf16.msra.mxu0 %v154
  %220 = vmatprep.subr.bf16.mxu0 0
  %221 = vmatpush1.bf16.msra.mxu0 %v155
  %222 = vmatprep.subr.bf16.mxu0 0
  %223 = vmatpush1.bf16.msra.mxu0 0
  %224 = vmatprep.subr.bf16.mxu0 0
  %225 = vmatpush1.bf16.msra.mxu0 0
  %226 = vmatprep.subr.bf16.mxu0 0
  %227 = vmatpush1.bf16.msra.mxu0 0
  %228 = vmatprep.subr.bf16.mxu0 0
  %229 = vmatpush1.bf16.msra.mxu0 0
  %230 = vmatprep.subr.bf16.mxu0 0
  %231 = vmatpush1.bf16.msra.mxu0 0
  %232 = vmatprep.subr.bf16.mxu0 0
  %233 = vmatpush1.bf16.msra.mxu0 0
  %234 = vmatprep.subr.bf16.mxu0 0
  %235 = vmatpush1.bf16.msra.mxu0 0
  %236 = vmatprep.subr.bf16.mxu0 0
  %237 = vmatpush1.bf16.msra.mxu0 0
  %238 = vmatprep.subr.bf16.mxu0 0
  %239 = vmatpush1.bf16.msra.mxu0 0
  %240 = vmatprep.subr.bf16.mxu0 0
  %241 = vmatpush1.bf16.msra.mxu0 0
  %242 = vmatprep.subr.bf16.mxu0 0
  %243 = vmatpush1.bf16.msra.mxu0 0
  %244 = vmatprep.subr.bf16.mxu0 0
  %245 = vmatpush1.bf16.msra.mxu0 0
  %246 = vmatprep.subr.bf16.mxu0 0
  %247 = vmatpush1.bf16.msra.mxu0 0
  %248 = vmatprep.subr.bf16.mxu0 0
  %249 = vmatpush1.bf16.msra.mxu0 0
  %250 = vmatprep.mubr.bf16.mxu0 0
  %251 = vmatmul.mubr.bf16.gmra.mrb[0].mxu0 %v176
  %v252 = vpop.f32.mrb[0].mxu0
  %v253 = vadd.f32 %v213, %v252
  %v254 = vpop.f32.mrb[0].mxu0
  %v255 = vpop.f32.mrb[0].mxu0
  %v256 = vpop.f32.mrb[0].mxu0
  %257 = vdwg.mxu0
  %v258 = vld [vmem:[%s2] sm:$0x1]
  %v260 = vlaneseq
  %v261 = vshrl.u32 %v260, 7
  %v262 = vsub.s32 0, %v261
  %v263 = vrot.slane %v258, %v262
  %v265 = vmul.f32 %v253, %v263
  %v266 = vld [vmem:[%s3] sm:$0x1]
  %v268 = vlaneseq
  %v269 = vshrl.u32 %v268, 7
  %v270 = vsub.s32 0, %v269
  %v271 = vrot.slane %v266, %v270
  %v273 = vadd.f32 %v265, %v271
  %v274 = vmax.f32 %v273, 0.0
  %v275 = vpack.c.bf16 %v274, %v274
  %vm276 = vcmask 257024
  %277 = vst.msk [vmem:[%s4] sm:$0xf] %vm276, %v275
  // Predicated region
  $region18: #{resnet_features.33} parent=0 // pred_check
    _
  $region19: #{resnet_features.33} parent=0 // pred_check_branch
    %279 = sbr.rel (0) target = $region21
  $region20: #{resnet_features.33} parent=0 // pred_region
    _
  $region21: #{resnet_features.33} parent=0 // pred_fallthru
    _
  // Predicated region
  $region22: #{resnet_features.33} parent=0 // pred_check
    _
  $region23: #{resnet_features.33} parent=0 // pred_check_branch
    %281 = sbr.rel (0) target = $region25
  $region24: #{resnet_features.33} parent=0 // pred_region
    _
  $region25: #{resnet_features.33} parent=0 // pred_fallthru
    _

// kernel: resnet_features.35
$region0: #{resnet_features.35}
  #allocation0 [shape = 'u32[]', space=smem, size = 0x4, offset = 0x4, fixed_abs, tag = 'smem constant byte address 0x4 - core index']
  #allocation1 [shape = 'u32[144,128]{1,0:T(1,128)}', space=vmem, size = 0x12000, scoped, tag = 'internal scratch']
  %s0 = inlined_call_operand.vmem [shape: bf16[8,288], index: 0, kind: input, shape index: {}]
  %s1 = inlined_call_operand.vmem [shape: bf16[288,64], index: 1, kind: input, shape index: {}]
  %s2 = inlined_call_operand.vmem [shape: f32[1,64], index: 2, kind: input, shape index: {}]
  %s3 = inlined_call_operand.vmem [shape: f32[1,64], index: 3, kind: input, shape index: {}]
  %s4 = inlined_call_operand.vmem [shape: bf16[8,64], index: 4, kind: output, shape index: {}]
  %s5 = sld [smem:[#allocation0]]
  $region26: #{resnet_features.35} parent=0
    _
  %s7 = ssub.s32 1, %s5
  %s8 = scalar_select 0, %s7, %s5
  // Predicated region
  $region2: #{resnet_features.35} parent=0 // pred_check
    _
  $region3: #{resnet_features.35} parent=0 // pred_check_branch
    %10 = sbr.rel (0) target = $region5
  $region4: #{resnet_features.35} parent=0 // pred_region
    _
  $region5: #{resnet_features.35} parent=0 // pred_fallthru
    _
  // Predicated region
  $region6: #{resnet_features.35} parent=0 // pred_check
    _
  $region7: #{resnet_features.35} parent=0 // pred_check_branch
    %12 = sbr.rel (0) target = $region9
  $region8: #{resnet_features.35} parent=0 // pred_region
    _
  $region9: #{resnet_features.35} parent=0 // pred_fallthru
    _
  // Predicated region
  $region10: #{resnet_features.35} parent=0 // pred_check
    _
  $region11: #{resnet_features.35} parent=0 // pred_check_branch
    %14 = sbr.rel (0) target = $region13
  $region12: #{resnet_features.35} parent=0 // pred_region
    _
  $region13: #{resnet_features.35} parent=0 // pred_fallthru
    _
  // Predicated region
  $region14: #{resnet_features.35} parent=0 // pred_check
    _
  $region15: #{resnet_features.35} parent=0 // pred_check_branch
    %16 = sbr.rel (0) target = $region17
  $region16: #{resnet_features.35} parent=0 // pred_region
    _
  $region17: #{resnet_features.35} parent=0 // pred_fallthru
    _
  %v18 = vld [vmem:[%s0] sm:$0xff]
  %v19 = vld [vmem:[%s0 + $0x8] sm:$0xf]
  %v20 = vld [vmem:[%s1] sm:$0xf]
  %v21 = vld [vmem:[%s1 + $0x4] sm:$0xf]
  %v22 = vld [vmem:[%s1 + $0x8] sm:$0xf]
  %v23 = vld [vmem:[%s1 + $0xc] sm:$0xf]
  %v24 = vld [vmem:[%s1 + $0x10] sm:$0xf]
  %v25 = vld [vmem:[%s1 + $0x14] sm:$0xf]
  %v26 = vld [vmem:[%s1 + $0x18] sm:$0xf]
  %v27 = vld [vmem:[%s1 + $0x1c] sm:$0xf]
  %v28 = vld [vmem:[%s1 + $0x20] sm:$0xf]
  %v29 = vld [vmem:[%s1 + $0x24] sm:$0xf]
  %v30 = vld [vmem:[%s1 + $0x28] sm:$0xf]
  %v31 = vld [vmem:[%s1 + $0x2c] sm:$0xf]
  %v32 = vld [vmem:[%s1 + $0x30] sm:$0xf]
  %v33 = vld [vmem:[%s1 + $0x34] sm:$0xf]
  %v34 = vld [vmem:[%s1 + $0x38] sm:$0xf]
  %v35 = vld [vmem:[%s1 + $0x3c] sm:$0xf]
  %v36 = vld [vmem:[%s1 + $0x40] sm:$0xf]
  %v37 = vld [vmem:[%s1 + $0x44] sm:$0xf]
  %v38 = vld [vmem:[%s1 + $0x48] sm:$0xf]
  %v39 = vld [vmem:[%s1 + $0x4c] sm:$0xf]
  %v40 = vld [vmem:[%s1 + $0x50] sm:$0xf]
  %v41 = vld [vmem:[%s1 + $0x54] sm:$0xf]
  %v42 = vld [vmem:[%s1 + $0x58] sm:$0xf]
  %v43 = vld [vmem:[%s1 + $0x5c] sm:$0xf]
  %v44 = vld [vmem:[%s1 + $0x60] sm:$0xf]
  %v45 = vld [vmem:[%s1 + $0x64] sm:$0xf]
  %v46 = vld [vmem:[%s1 + $0x68] sm:$0xf]
  %v47 = vld [vmem:[%s1 + $0x6c] sm:$0xf]
  %v48 = vld [vmem:[%s1 + $0x70] sm:$0xf]
  %v49 = vld [vmem:[%s1 + $0x74] sm:$0xf]
  %v50 = vld [vmem:[%s1 + $0x78] sm:$0xf]
  %v51 = vld [vmem:[%s1 + $0x7c] sm:$0xf]
  %v52 = vld [vmem:[%s1 + $0x80] sm:$0xf]
  %v53 = vld [vmem:[%s1 + $0x84] sm:$0xf]
  %v54 = vld [vmem:[%s1 + $0x88] sm:$0xf]
  %v55 = vld [vmem:[%s1 + $0x8c] sm:$0xf]
  %v58 = vunpack.c.l.b16 %v18
  %v59 = vunpack.c.h.b16 %v18
  %v60 = vunpack.c.l.b16 %v19
  %v61 = vpack.c.b16 %v58, %v58
  %v62 = vpack.c.b16 %v59, %v59
  %v63 = vpack.c.b16 %v60, %v60
  %v102 = vunpack.c.l.b16 %v20
  %v103 = vunpack.c.l.b16 %v21
  %v104 = vunpack.c.l.b16 %v22
  %v105 = vunpack.c.l.b16 %v23
  %v106 = vunpack.c.l.b16 %v24
  %v107 = vunpack.c.l.b16 %v25
  %v108 = vunpack.c.l.b16 %v26
  %v109 = vunpack.c.l.b16 %v27
  %v110 = vunpack.c.l.b16 %v28
  %v111 = vunpack.c.l.b16 %v29
  %v112 = vunpack.c.l.b16 %v30
  %v113 = vunpack.c.l.b16 %v31
  %v114 = vunpack.c.l.b16 %v32
  %v115 = vunpack.c.l.b16 %v33
  %v116 = vunpack.c.l.b16 %v34
  %v117 = vunpack.c.l.b16 %v35
  %v118 = vunpack.c.l.b16 %v36
  %v119 = vunpack.c.l.b16 %v37
  %v120 = vunpack.c.l.b16 %v38
  %v121 = vunpack.c.l.b16 %v39
  %v122 = vunpack.c.l.b16 %v40
  %v123 = vunpack.c.l.b16 %v41
  %v124 = vunpack.c.l.b16 %v42
  %v125 = vunpack.c.l.b16 %v43
  %v126 = vunpack.c.l.b16 %v44
  %v127 = vunpack.c.l.b16 %v45
  %v128 = vunpack.c.l.b16 %v46
  %v129 = vunpack.c.l.b16 %v47
  %v130 = vunpack.c.l.b16 %v48
  %v131 = vunpack.c.l.b16 %v49
  %v132 = vunpack.c.l.b16 %v50
  %v133 = vunpack.c.l.b16 %v51
  %v134 = vunpack.c.l.b16 %v52
  %v135 = vunpack.c.l.b16 %v53
  %v136 = vunpack.c.l.b16 %v54
  %v137 = vunpack.c.l.b16 %v55
  %v138 = vpack.c.b16 %v103, %v102
  %v139 = vpack.c.b16 %v105, %v104
  %v140 = vpack.c.b16 %v107, %v106
  %v141 = vpack.c.b16 %v109, %v108
  %v142 = vpack.c.b16 %v111, %v110
  %v143 = vpack.c.b16 %v113, %v112
  %v144 = vpack.c.b16 %v115, %v114
  %v145 = vpack.c.b16 %v117, %v116
  %v146 = vpack.c.b16 %v119, %v118
  %v147 = vpack.c.b16 %v121, %v120
  %v148 = vpack.c.b16 %v123, %v122
  %v149 = vpack.c.b16 %v125, %v124
  %v150 = vpack.c.b16 %v127, %v126
  %v151 = vpack.c.b16 %v129, %v128
  %v152 = vpack.c.b16 %v131, %v130
  %v153 = vpack.c.b16 %v133, %v132
  %v154 = vpack.c.b16 %v135, %v134
  %v155 = vpack.c.b16 %v137, %v136
  %vm174 = vcmask 261120
  %v176 = vsel %vm174, %v63, 0
  %178 = vmatprep.subr.bf16.mxu0 0
  %179 = vmatpush1.bf16.msra.mxu0 %v138
  %180 = vmatprep.subr.bf16.mxu0 0
  %181 = vmatpush1.bf16.msra.mxu0 %v139
  %182 = vmatprep.subr.bf16.mxu0 0
  %183 = vmatpush1.bf16.msra.mxu0 %v140
  %184 = vmatprep.subr.bf16.mxu0 0
  %185 = vmatpush1.bf16.msra.mxu0 %v141
  %186 = vmatprep.subr.bf16.mxu0 0
  %187 = vmatpush1.bf16.msra.mxu0 %v142
  %188 = vmatprep.subr.bf16.mxu0 0
  %189 = vmatpush1.bf16.msra.mxu0 %v143
  %190 = vmatprep.subr.bf16.mxu0 0
  %191 = vmatpush1.bf16.msra.mxu0 %v144
  %192 = vmatprep.subr.bf16.mxu0 0
  %193 = vmatpush1.bf16.msra.mxu0 %v145
  %194 = vmatprep.subr.bf16.mxu0 0
  %195 = vmatpush1.bf16.msra.mxu0 %v146
  %196 = vmatprep.subr.bf16.mxu0 0
  %197 = vmatpush1.bf16.msra.mxu0 %v147
  %198 = vmatprep.subr.bf16.mxu0 0
  %199 = vmatpush1.bf16.msra.mxu0 %v148
  %200 = vmatprep.subr.bf16.mxu0 0
  %201 = vmatpush1.bf16.msra.mxu0 %v149
  %202 = vmatprep.subr.bf16.mxu0 0
  %203 = vmatpush1.bf16.msra.mxu0 %v150
  %204 = vmatprep.subr.bf16.mxu0 0
  %205 = vmatpush1.bf16.msra.mxu0 %v151
  %206 = vmatprep.subr.bf16.mxu0 0
  %207 = vmatpush1.bf16.msra.mxu0 %v152
  %208 = vmatprep.subr.bf16.mxu0 0
  %209 = vmatpush1.bf16.msra.mxu0 %v153
  %210 = vmatprep.mubr.bf16.mxu0 %v62
  %211 = vmatmul.mubr.bf16.gmra.mrb[0].mxu0 %v61
  %v212 = vpop.f32.mrb[0].mxu0
  %v213 = vadd.f32 0.0, %v212
  %v214 = vpop.f32.mrb[0].mxu0
  %v215 = vpop.f32.mrb[0].mxu0
  %v216 = vpop.f32.mrb[0].mxu0
  %217 = vdwg.mxu0
  %218 = vmatprep.subr.bf16.mxu0 0
  %219 = vmatpush1.bf16.msra.mxu0 %v154
  %220 = vmatprep.subr.bf16.mxu0 0
  %221 = vmatpush1.bf16.msra.mxu0 %v155
  %222 = vmatprep.subr.bf16.mxu0 0
  %223 = vmatpush1.bf16.msra.mxu0 0
  %224 = vmatprep.subr.bf16.mxu0 0
  %225 = vmatpush1.bf16.msra.mxu0 0
  %226 = vmatprep.subr.bf16.mxu0 0
  %227 = vmatpush1.bf16.msra.mxu0 0
  %228 = vmatprep.subr.bf16.mxu0 0
  %229 = vmatpush1.bf16.msra.mxu0 0
  %230 = vmatprep.subr.bf16.mxu0 0
  %231 = vmatpush1.bf16.msra.mxu0 0
  %232 = vmatprep.subr.bf16.mxu0 0
  %233 = vmatpush1.bf16.msra.mxu0 0
  %234 = vmatprep.subr.bf16.mxu0 0
  %235 = vmatpush1.bf16.msra.mxu0 0
  %236 = vmatprep.subr.bf16.mxu0 0
  %237 = vmatpush1.bf16.msra.mxu0 0
  %238 = vmatprep.subr.bf16.mxu0 0
  %239 = vmatpush1.bf16.msra.mxu0 0
  %240 = vmatprep.subr.bf16.mxu0 0
  %241 = vmatpush1.bf16.msra.mxu0 0
  %242 = vmatprep.subr.bf16.mxu0 0
  %243 = vmatpush1.bf16.msra.mxu0 0
  %244 = vmatprep.subr.bf16.mxu0 0
  %245 = vmatpush1.bf16.msra.mxu0 0
  %246 = vmatprep.subr.bf16.mxu0 0
  %247 = vmatpush1.bf16.msra.mxu0 0
  %248 = vmatprep.subr.bf16.mxu0 0
  %249 = vmatpush1.bf16.msra.mxu0 0
  %250 = vmatprep.mubr.bf16.mxu0 0
  %251 = vmatmul.mubr.bf16.gmra.mrb[0].mxu0 %v176
  %v252 = vpop.f32.mrb[0].mxu0
  %v253 = vadd.f32 %v213, %v252
  %v254 = vpop.f32.mrb[0].mxu0
  %v255 = vpop.f32.mrb[0].mxu0
  %v256 = vpop.f32.mrb[0].mxu0
  %257 = vdwg.mxu0
  %v258 = vld [vmem:[%s2] sm:$0x1]
  %v260 = vlaneseq
  %v261 = vshrl.u32 %v260, 7
  %v262 = vsub.s32 0, %v261
  %v263 = vrot.slane %v258, %v262
  %v265 = vmul.f32 %v253, %v263
  %v266 = vld [vmem:[%s3] sm:$0x1]
  %v268 = vlaneseq
  %v269 = vshrl.u32 %v268, 7
  %v270 = vsub.s32 0, %v269
  %v271 = vrot.slane %v266, %v270
  %v273 = vadd.f32 %v265, %v271
  %v274 = vmax.f32 %v273, 0.0
  %v275 = vpack.c.bf16 %v274, %v274
  %vm276 = vcmask 519168
  %277 = vst.msk [vmem:[%s4] sm:$0xf] %vm276, %v275
  // Predicated region
  $region18: #{resnet_features.35} parent=0 // pred_check
    _
  $region19: #{resnet_features.35} parent=0 // pred_check_branch
    %279 = sbr.rel (0) target = $region21
  $region20: #{resnet_features.35} parent=0 // pred_region
    _
  $region21: #{resnet_features.35} parent=0 // pred_fallthru
    _
  // Predicated region
  $region22: #{resnet_features.35} parent=0 // pred_check
    _
  $region23: #{resnet_features.35} parent=0 // pred_check_branch
    %281 = sbr.rel (0) target = $region25
  $region24: #{resnet_features.35} parent=0 // pred_region
    _
  $region25: #{resnet_features.35} parent=0 // pred_fallthru
    _

// kernel: resnet_features.36
$region0: #{resnet_features.36}
  #allocation0 [shape = 'u32[]', space=smem, size = 0x4, offset = 0x4, fixed_abs, tag = 'smem constant byte address 0x4 - core index']
  #allocation1 [shape = 'u32[144,128]{1,0:T(1,128)}', space=vmem, size = 0x12000, scoped, tag = 'internal scratch']
  %s0 = inlined_call_operand.vmem [shape: bf16[8,32], index: 0, kind: input, shape index: {}]
  %s1 = inlined_call_operand.vmem [shape: bf16[32,64], index: 1, kind: input, shape index: {}]
  %s2 = inlined_call_operand.vmem [shape: f32[1,64], index: 2, kind: input, shape index: {}]
  %s3 = inlined_call_operand.vmem [shape: f32[1,64], index: 3, kind: input, shape index: {}]
  %s4 = inlined_call_operand.vmem [shape: bf16[8,64], index: 4, kind: output, shape index: {}]
  %s5 = sld [smem:[#allocation0]]
  $region26: #{resnet_features.36} parent=0
    _
  %s7 = ssub.s32 1, %s5
  %s8 = scalar_select 0, %s7, %s5
  // Predicated region
  $region2: #{resnet_features.36} parent=0 // pred_check
    _
  $region3: #{resnet_features.36} parent=0 // pred_check_branch
    %10 = sbr.rel (0) target = $region5
  $region4: #{resnet_features.36} parent=0 // pred_region
    _
  $region5: #{resnet_features.36} parent=0 // pred_fallthru
    _
  // Predicated region
  $region6: #{resnet_features.36} parent=0 // pred_check
    _
  $region7: #{resnet_features.36} parent=0 // pred_check_branch
    %12 = sbr.rel (0) target = $region9
  $region8: #{resnet_features.36} parent=0 // pred_region
    _
  $region9: #{resnet_features.36} parent=0 // pred_fallthru
    _
  // Predicated region
  $region10: #{resnet_features.36} parent=0 // pred_check
    _
  $region11: #{resnet_features.36} parent=0 // pred_check_branch
    %14 = sbr.rel (0) target = $region13
  $region12: #{resnet_features.36} parent=0 // pred_region
    _
  $region13: #{resnet_features.36} parent=0 // pred_fallthru
    _
  // Predicated region
  $region14: #{resnet_features.36} parent=0 // pred_check
    _
  $region15: #{resnet_features.36} parent=0 // pred_check_branch
    %16 = sbr.rel (0) target = $region17
  $region16: #{resnet_features.36} parent=0 // pred_region
    _
  $region17: #{resnet_features.36} parent=0 // pred_fallthru
    _
  %v18 = vld [vmem:[%s0] sm:$0xf]
  %v19 = vld [vmem:[%s1] sm:$0xf]
  %v20 = vld [vmem:[%s1 + $0x4] sm:$0xf]
  %v21 = vld [vmem:[%s1 + $0x8] sm:$0xf]
  %v22 = vld [vmem:[%s1 + $0xc] sm:$0xf]
  %v27 = vunpack.c.l.b16 %v19
  %v28 = vunpack.c.l.b16 %v20
  %v29 = vunpack.c.l.b16 %v21
  %v30 = vunpack.c.l.b16 %v22
  %v31 = vpack.c.b16 %v28, %v27
  %v32 = vpack.c.b16 %v30, %v29
  %vm35 = vcmask 261120
  %v37 = vsel %vm35, %v18, 0
  %39 = vmatprep.subr.bf16.mxu0 0
  %40 = vmatpush1.bf16.msra.mxu0 %v31
  %41 = vmatprep.subr.bf16.mxu0 0
  %42 = vmatpush1.bf16.msra.mxu0 %v32
  %43 = vmatprep.subr.bf16.mxu0 0
  %44 = vmatpush1.bf16.msra.mxu0 0
  %45 = vmatprep.subr.bf16.mxu0 0
  %46 = vmatpush1.bf16.msra.mxu0 0
  %47 = vmatprep.subr.bf16.mxu0 0
  %48 = vmatpush1.bf16.msra.mxu0 0
  %49 = vmatprep.subr.bf16.mxu0 0
  %50 = vmatpush1.bf16.msra.mxu0 0
  %51 = vmatprep.subr.bf16.mxu0 0
  %52 = vmatpush1.bf16.msra.mxu0 0
  %53 = vmatprep.subr.bf16.mxu0 0
  %54 = vmatpush1.bf16.msra.mxu0 0
  %55 = vmatprep.subr.bf16.mxu0 0
  %56 = vmatpush1.bf16.msra.mxu0 0
  %57 = vmatprep.subr.bf16.mxu0 0
  %58 = vmatpush1.bf16.msra.mxu0 0
  %59 = vmatprep.subr.bf16.mxu0 0
  %60 = vmatpush1.bf16.msra.mxu0 0
  %61 = vmatprep.subr.bf16.mxu0 0
  %62 = vmatpush1.bf16.msra.mxu0 0
  %63 = vmatprep.subr.bf16.mxu0 0
  %64 = vmatpush1.bf16.msra.mxu0 0
  %65 = vmatprep.subr.bf16.mxu0 0
  %66 = vmatpush1.bf16.msra.mxu0 0
  %67 = vmatprep.subr.bf16.mxu0 0
  %68 = vmatpush1.bf16.msra.mxu0 0
  %69 = vmatprep.subr.bf16.mxu0 0
  %70 = vmatpush1.bf16.msra.mxu0 0
  %71 = vmatprep.mubr.bf16.mxu0 0
  %72 = vmatmul.mubr.bf16.gmra.mrb[0].mxu0 %v37
  %v73 = vpop.f32.mrb[0].mxu0
  %v74 = vadd.f32 0.0, %v73
  %v75 = vpop.f32.mrb[0].mxu0
  %v76 = vpop.f32.mrb[0].mxu0
  %v77 = vpop.f32.mrb[0].mxu0
  %78 = vdwg.mxu0
  %v79 = vld [vmem:[%s2] sm:$0x1]
  %v81 = vlaneseq
  %v82 = vshrl.u32 %v81, 7
  %v83 = vsub.s32 0, %v82
  %v84 = vrot.slane %v79, %v83
  %v86 = vmul.f32 %v74, %v84
  %v87 = vld [vmem:[%s3] sm:$0x1]
  %v89 = vlaneseq
  %v90 = vshrl.u32 %v89, 7
  %v91 = vsub.s32 0, %v90
  %v92 = vrot.slane %v87, %v91
  %v94 = vadd.f32 %v86, %v92
  %v95 = vpack.c.bf16 %v94, %v94
  %vm96 = vcmask 519168
  %97 = vst.msk [vmem:[%s4] sm:$0xf] %vm96, %v95
  // Predicated region
  $region18: #{resnet_features.36} parent=0 // pred_check
    _
  $region19: #{resnet_features.36} parent=0 // pred_check_branch
    %99 = sbr.rel (0) target = $region21
  $region20: #{resnet_features.36} parent=0 // pred_region
    _
  $region21: #{resnet_features.36} parent=0 // pred_fallthru
    _
  // Predicated region
  $region22: #{resnet_features.36} parent=0 // pred_check
    _
  $region23: #{resnet_features.36} parent=0 // pred_check_branch
    %101 = sbr.rel (0) target = $region25
  $region24: #{resnet_features.36} parent=0 // pred_region
    _
  $region25: #{resnet_features.36} parent=0 // pred_fallthru
    _

// kernel: resnet_features.37
$region0: #{resnet_features.37}
  #allocation0 [shape = 'u32[]', space=smem, size = 0x4, offset = 0x4, fixed_abs, tag = 'smem constant byte address 0x4 - core index']
  #allocation1 [shape = 'u32[144,128]{1,0:T(1,128)}', space=vmem, size = 0x12000, scoped, tag = 'internal scratch']
  %s0 = inlined_call_operand.vmem [shape: bf16[8,576], index: 0, kind: input, shape index: {}]
  %s1 = inlined_call_operand.vmem [shape: bf16[576,64], index: 1, kind: input, shape index: {}]
  %s2 = inlined_call_operand.vmem [shape: f32[1,64], index: 2, kind: input, shape index: {}]
  %s3 = inlined_call_operand.vmem [shape: f32[1,64], index: 3, kind: input, shape index: {}]
  %s4 = inlined_call_operand.vmem [shape: bf16[8,64], index: 4, kind: input, shape index: {}]
  %s5 = inlined_call_operand.vmem [shape: bf16[8,64], index: 5, kind: output, shape index: {}]
  %s6 = sld [smem:[#allocation0]]
  $region30: #{resnet_features.37} parent=0
    _
  %s8 = ssub.s32 1, %s6
  %s9 = scalar_select 0, %s8, %s6
  // Predicated region
  $region2: #{resnet_features.37} parent=0 // pred_check
    _
  $region3: #{resnet_features.37} parent=0 // pred_check_branch
    %11 = sbr.rel (0) target = $region5
  $region4: #{resnet_features.37} parent=0 // pred_region
    _
  $region5: #{resnet_features.37} parent=0 // pred_fallthru
    _
  // Predicated region
  $region6: #{resnet_features.37} parent=0 // pred_check
    _
  $region7: #{resnet_features.37} parent=0 // pred_check_branch
    %13 = sbr.rel (0) target = $region9
  $region8: #{resnet_features.37} parent=0 // pred_region
    _
  $region9: #{resnet_features.37} parent=0 // pred_fallthru
    _
  // Predicated region
  $region10: #{resnet_features.37} parent=0 // pred_check
    _
  $region11: #{resnet_features.37} parent=0 // pred_check_branch
    %15 = sbr.rel (0) target = $region13
  $region12: #{resnet_features.37} parent=0 // pred_region
    _
  $region13: #{resnet_features.37} parent=0 // pred_fallthru
    _
  // Predicated region
  $region14: #{resnet_features.37} parent=0 // pred_check
    _
  $region15: #{resnet_features.37} parent=0 // pred_check_branch
    %17 = sbr.rel (0) target = $region17
  $region16: #{resnet_features.37} parent=0 // pred_region
    _
  $region17: #{resnet_features.37} parent=0 // pred_fallthru
    _
  // Predicated region
  $region18: #{resnet_features.37} parent=0 // pred_check
    _
  $region19: #{resnet_features.37} parent=0 // pred_check_branch
    %19 = sbr.rel (0) target = $region21
  $region20: #{resnet_features.37} parent=0 // pred_region
    _
  $region21: #{resnet_features.37} parent=0 // pred_fallthru
    _
  %v21 = vld [vmem:[%s0] sm:$0xff]
  %v22 = vld [vmem:[%s0 + $0x8] sm:$0xff]
  %v23 = vld [vmem:[%s0 + $0x10] sm:$0xf]
  %v24 = vld [vmem:[%s1] sm:$0xf]
  %v25 = vld [vmem:[%s1 + $0x4] sm:$0xf]
  %v26 = vld [vmem:[%s1 + $0x8] sm:$0xf]
  %v27 = vld [vmem:[%s1 + $0xc] sm:$0xf]
  %v28 = vld [vmem:[%s1 + $0x10] sm:$0xf]
  %v29 = vld [vmem:[%s1 + $0x14] sm:$0xf]
  %v30 = vld [vmem:[%s1 + $0x18] sm:$0xf]
  %v31 = vld [vmem:[%s1 + $0x1c] sm:$0xf]
  %v32 = vld [vmem:[%s1 + $0x20] sm:$0xf]
  %v33 = vld [vmem:[%s1 + $0x24] sm:$0xf]
  %v34 = vld [vmem:[%s1 + $0x28] sm:$0xf]
  %v35 = vld [vmem:[%s1 + $0x2c] sm:$0xf]
  %v36 = vld [vmem:[%s1 + $0x30] sm:$0xf]
  %v37 = vld [vmem:[%s1 + $0x34] sm:$0xf]
  %v38 = vld [vmem:[%s1 + $0x38] sm:$0xf]
  %v39 = vld [vmem:[%s1 + $0x3c] sm:$0xf]
  %v40 = vld [vmem:[%s1 + $0x40] sm:$0xf]
  %v41 = vld [vmem:[%s1 + $0x44] sm:$0xf]
  %v42 = vld [vmem:[%s1 + $0x48] sm:$0xf]
  %v43 = vld [vmem:[%s1 + $0x4c] sm:$0xf]
  %v44 = vld [vmem:[%s1 + $0x50] sm:$0xf]
  %v45 = vld [vmem:[%s1 + $0x54] sm:$0xf]
  %v46 = vld [vmem:[%s1 + $0x58] sm:$0xf]
  %v47 = vld [vmem:[%s1 + $0x5c] sm:$0xf]
  %v48 = vld [vmem:[%s1 + $0x60] sm:$0xf]
  %v49 = vld [vmem:[%s1 + $0x64] sm:$0xf]
  %v50 = vld [vmem:[%s1 + $0x68] sm:$0xf]
  %v51 = vld [vmem:[%s1 + $0x6c] sm:$0xf]
  %v52 = vld [vmem:[%s1 + $0x70] sm:$0xf]
  %v53 = vld [vmem:[%s1 + $0x74] sm:$0xf]
  %v54 = vld [vmem:[%s1 + $0x78] sm:$0xf]
  %v55 = vld [vmem:[%s1 + $0x7c] sm:$0xf]
  %v56 = vld [vmem:[%s1 + $0x80] sm:$0xf]
  %v57 = vld [vmem:[%s1 + $0x84] sm:$0xf]
  %v58 = vld [vmem:[%s1 + $0x88] sm:$0xf]
  %v59 = vld [vmem:[%s1 + $0x8c] sm:$0xf]
  %v60 = vld [vmem:[%s1 + $0x90] sm:$0xf]
  %v61 = vld [vmem:[%s1 + $0x94] sm:$0xf]
  %v62 = vld [vmem:[%s1 + $0x98] sm:$0xf]
  %v63 = vld [vmem:[%s1 + $0x9c] sm:$0xf]
  %v64 = vld [vmem:[%s1 + $0xa0] sm:$0xf]
  %v65 = vld [vmem:[%s1 + $0xa4] sm:$0xf]
  %v66 = vld [vmem:[%s1 + $0xa8] sm:$0xf]
  %v67 = vld [vmem:[%s1 + $0xac] sm:$0xf]
  %v68 = vld [vmem:[%s1 + $0xb0] sm:$0xf]
  %v69 = vld [vmem:[%s1 + $0xb4] sm:$0xf]
  %v70 = vld [vmem:[%s1 + $0xb8] sm:$0xf]
  %v71 = vld [vmem:[%s1 + $0xbc] sm:$0xf]
  %v72 = vld [vmem:[%s1 + $0xc0] sm:$0xf]
  %v73 = vld [vmem:[%s1 + $0xc4] sm:$0xf]
  %v74 = vld [vmem:[%s1 + $0xc8] sm:$0xf]
  %v75 = vld [vmem:[%s1 + $0xcc] sm:$0xf]
  %v76 = vld [vmem:[%s1 + $0xd0] sm:$0xf]
  %v77 = vld [vmem:[%s1 + $0xd4] sm:$0xf]
  %v78 = vld [vmem:[%s1 + $0xd8] sm:$0xf]
  %v79 = vld [vmem:[%s1 + $0xdc] sm:$0xf]
  %v80 = vld [vmem:[%s1 + $0xe0] sm:$0xf]
  %v81 = vld [vmem:[%s1 + $0xe4] sm:$0xf]
  %v82 = vld [vmem:[%s1 + $0xe8] sm:$0xf]
  %v83 = vld [vmem:[%s1 + $0xec] sm:$0xf]
  %v84 = vld [vmem:[%s1 + $0xf0] sm:$0xf]
  %v85 = vld [vmem:[%s1 + $0xf4] sm:$0xf]
  %v86 = vld [vmem:[%s1 + $0xf8] sm:$0xf]
  %v87 = vld [vmem:[%s1 + $0xfc] sm:$0xf]
  %v88 = vld [vmem:[%s1 + $0x100] sm:$0xf]
  %v89 = vld [vmem:[%s1 + $0x104] sm:$0xf]
  %v90 = vld [vmem:[%s1 + $0x108] sm:$0xf]
  %v91 = vld [vmem:[%s1 + $0x10c] sm:$0xf]
  %v92 = vld [vmem:[%s1 + $0x110] sm:$0xf]
  %v93 = vld [vmem:[%s1 + $0x114] sm:$0xf]
  %v94 = vld [vmem:[%s1 + $0x118] sm:$0xf]
  %v95 = vld [vmem:[%s1 + $0x11c] sm:$0xf]
  %v99 = vunpack.c.l.b16 %v21
  %v100 = vunpack.c.h.b16 %v21
  %v101 = vunpack.c.l.b16 %v22
  %v102 = vunpack.c.h.b16 %v22
  %v103 = vunpack.c.l.b16 %v23
  %v104 = vpack.c.b16 %v99, %v99
  %v105 = vpack.c.b16 %v100, %v100
  %v106 = vpack.c.b16 %v101, %v101
  %v107 = vpack.c.b16 %v102, %v102
  %v108 = vpack.c.b16 %v103, %v103
  %v185 = vunpack.c.l.b16 %v24
  %v186 = vunpack.c.l.b16 %v25
  %v187 = vunpack.c.l.b16 %v26
  %v188 = vunpack.c.l.b16 %v27
  %v189 = vunpack.c.l.b16 %v28
  %v190 = vunpack.c.l.b16 %v29
  %v191 = vunpack.c.l.b16 %v30
  %v192 = vunpack.c.l.b16 %v31
  %v193 = vunpack.c.l.b16 %v32
  %v194 = vunpack.c.l.b16 %v33
  %v195 = vunpack.c.l.b16 %v34
  %v196 = vunpack.c.l.b16 %v35
  %v197 = vunpack.c.l.b16 %v36
  %v198 = vunpack.c.l.b16 %v37
  %v199 = vunpack.c.l.b16 %v38
  %v200 = vunpack.c.l.b16 %v39
  %v201 = vunpack.c.l.b16 %v40
  %v202 = vunpack.c.l.b16 %v41
  %v203 = vunpack.c.l.b16 %v42
  %v204 = vunpack.c.l.b16 %v43
  %v205 = vunpack.c.l.b16 %v44
  %v206 = vunpack.c.l.b16 %v45
  %v207 = vunpack.c.l.b16 %v46
  %v208 = vunpack.c.l.b16 %v47
  %v209 = vunpack.c.l.b16 %v48
  %v210 = vunpack.c.l.b16 %v49
  %v211 = vunpack.c.l.b16 %v50
  %v212 = vunpack.c.l.b16 %v51
  %v213 = vunpack.c.l.b16 %v52
  %v214 = vunpack.c.l.b16 %v53
  %v215 = vunpack.c.l.b16 %v54
  %v216 = vunpack.c.l.b16 %v55
  %v217 = vunpack.c.l.b16 %v56
  %v218 = vunpack.c.l.b16 %v57
  %v219 = vunpack.c.l.b16 %v58
  %v220 = vunpack.c.l.b16 %v59
  %v221 = vunpack.c.l.b16 %v60
  %v222 = vunpack.c.l.b16 %v61
  %v223 = vunpack.c.l.b16 %v62
  %v224 = vunpack.c.l.b16 %v63
  %v225 = vunpack.c.l.b16 %v64
  %v226 = vunpack.c.l.b16 %v65
  %v227 = vunpack.c.l.b16 %v66
  %v228 = vunpack.c.l.b16 %v67
  %v229 = vunpack.c.l.b16 %v68
  %v230 = vunpack.c.l.b16 %v69
  %v231 = vunpack.c.l.b16 %v70
  %v232 = vunpack.c.l.b16 %v71
  %v233 = vunpack.c.l.b16 %v72
  %v234 = vunpack.c.l.b16 %v73
  %v235 = vunpack.c.l.b16 %v74
  %v236 = vunpack.c.l.b16 %v75
  %v237 = vunpack.c.l.b16 %v76
  %v238 = vunpack.c.l.b16 %v77
  %v239 = vunpack.c.l.b16 %v78
  %v240 = vunpack.c.l.b16 %v79
  %v241 = vunpack.c.l.b16 %v80
  %v242 = vunpack.c.l.b16 %v81
  %v243 = vunpack.c.l.b16 %v82
  %v244 = vunpack.c.l.b16 %v83
  %v245 = vunpack.c.l.b16 %v84
  %v246 = vunpack.c.l.b16 %v85
  %v247 = vunpack.c.l.b16 %v86
  %v248 = vunpack.c.l.b16 %v87
  %v249 = vunpack.c.l.b16 %v88
  %v250 = vunpack.c.l.b16 %v89
  %v251 = vunpack.c.l.b16 %v90
  %v252 = vunpack.c.l.b16 %v91
  %v253 = vunpack.c.l.b16 %v92
  %v254 = vunpack.c.l.b16 %v93
  %v255 = vunpack.c.l.b16 %v94
  %v256 = vunpack.c.l.b16 %v95
  %v257 = vpack.c.b16 %v186, %v185
  %v258 = vpack.c.b16 %v188, %v187
  %v259 = vpack.c.b16 %v190, %v189
  %v260 = vpack.c.b16 %v192, %v191
  %v261 = vpack.c.b16 %v194, %v193
  %v262 = vpack.c.b16 %v196, %v195
  %v263 = vpack.c.b16 %v198, %v197
  %v264 = vpack.c.b16 %v200, %v199
  %v265 = vpack.c.b16 %v202, %v201
  %v266 = vpack.c.b16 %v204, %v203
  %v267 = vpack.c.b16 %v206, %v205
  %v268 = vpack.c.b16 %v208, %v207
  %v269 = vpack.c.b16 %v210, %v209
  %v270 = vpack.c.b16 %v212, %v211
  %v271 = vpack.c.b16 %v214, %v213
  %v272 = vpack.c.b16 %v216, %v215
  %v273 = vpack.c.b16 %v218, %v217
  %v274 = vpack.c.b16 %v220, %v219
  %v275 = vpack.c.b16 %v222, %v221
  %v276 = vpack.c.b16 %v224, %v223
  %v277 = vpack.c.b16 %v226, %v225
  %v278 = vpack.c.b16 %v228, %v227
  %v279 = vpack.c.b16 %v230, %v229
  %v280 = vpack.c.b16 %v232, %v231
  %v281 = vpack.c.b16 %v234, %v233
  %v282 = vpack.c.b16 %v236, %v235
  %v283 = vpack.c.b16 %v238, %v237
  %v284 = vpack.c.b16 %v240, %v239
  %v285 = vpack.c.b16 %v242, %v241
  %v286 = vpack.c.b16 %v244, %v243
  %v287 = vpack.c.b16 %v246, %v245
  %v288 = vpack.c.b16 %v248, %v247
  %v289 = vpack.c.b16 %v250, %v249
  %v290 = vpack.c.b16 %v252, %v251
  %v291 = vpack.c.b16 %v254, %v253
  %v292 = vpack.c.b16 %v256, %v255
  %vm329 = vcmask 523264
  %v331 = vsel %vm329, %v108, 0
  %333 = vmatprep.subr.bf16.mxu0 0
  %334 = vmatpush1.bf16.msra.mxu0 %v257
  %335 = vmatprep.subr.bf16.mxu0 0
  %336 = vmatpush1.bf16.msra.mxu0 %v258
  %337 = vmatprep.subr.bf16.mxu0 0
  %338 = vmatpush1.bf16.msra.mxu0 %v259
  %339 = vmatprep.subr.bf16.mxu0 0
  %340 = vmatpush1.bf16.msra.mxu0 %v260
  %341 = vmatprep.subr.bf16.mxu0 0
  %342 = vmatpush1.bf16.msra.mxu0 %v261
  %343 = vmatprep.subr.bf16.mxu0 0
  %344 = vmatpush1.bf16.msra.mxu0 %v262
  %345 = vmatprep.subr.bf16.mxu0 0
  %346 = vmatpush1.bf16.msra.mxu0 %v263
  %347 = vmatprep.subr.bf16.mxu0 0
  %348 = vmatpush1.bf16.msra.mxu0 %v264
  %349 = vmatprep.subr.bf16.mxu0 0
  %350 = vmatpush1.bf16.msra.mxu0 %v265
  %351 = vmatprep.subr.bf16.mxu0 0
  %352 = vmatpush1.bf16.msra.mxu0 %v266
  %353 = vmatprep.subr.bf16.mxu0 0
  %354 = vmatpush1.bf16.msra.mxu0 %v267
  %355 = vmatprep.subr.bf16.mxu0 0
  %356 = vmatpush1.bf16.msra.mxu0 %v268
  %357 = vmatprep.subr.bf16.mxu0 0
  %358 = vmatpush1.bf16.msra.mxu0 %v269
  %359 = vmatprep.subr.bf16.mxu0 0
  %360 = vmatpush1.bf16.msra.mxu0 %v270
  %361 = vmatprep.subr.bf16.mxu0 0
  %362 = vmatpush1.bf16.msra.mxu0 %v271
  %363 = vmatprep.subr.bf16.mxu0 0
  %364 = vmatpush1.bf16.msra.mxu0 %v272
  %365 = vmatprep.mubr.bf16.mxu0 %v105
  %366 = vmatmul.mubr.bf16.gmra.mrb[0].mxu0 %v104
  %v367 = vpop.f32.mrb[0].mxu0
  %v368 = vadd.f32 0.0, %v367
  %v369 = vpop.f32.mrb[0].mxu0
  %v370 = vpop.f32.mrb[0].mxu0
  %v371 = vpop.f32.mrb[0].mxu0
  %372 = vdwg.mxu0
  %373 = vmatprep.subr.bf16.mxu0 0
  %374 = vmatpush1.bf16.msra.mxu0 %v273
  %375 = vmatprep.subr.bf16.mxu0 0
  %376 = vmatpush1.bf16.msra.mxu0 %v274
  %377 = vmatprep.subr.bf16.mxu0 0
  %378 = vmatpush1.bf16.msra.mxu0 %v275
  %379 = vmatprep.subr.bf16.mxu0 0
  %380 = vmatpush1.bf16.msra.mxu0 %v276
  %381 = vmatprep.subr.bf16.mxu0 0
  %382 = vmatpush1.bf16.msra.mxu0 %v277
  %383 = vmatprep.subr.bf16.mxu0 0
  %384 = vmatpush1.bf16.msra.mxu0 %v278
  %385 = vmatprep.subr.bf16.mxu0 0
  %386 = vmatpush1.bf16.msra.mxu0 %v279
  %387 = vmatprep.subr.bf16.mxu0 0
  %388 = vmatpush1.bf16.msra.mxu0 %v280
  %389 = vmatprep.subr.bf16.mxu0 0
  %390 = vmatpush1.bf16.msra.mxu0 %v281
  %391 = vmatprep.subr.bf16.mxu0 0
  %392 = vmatpush1.bf16.msra.mxu0 %v282
  %393 = vmatprep.subr.bf16.mxu0 0
  %394 = vmatpush1.bf16.msra.mxu0 %v283
  %395 = vmatprep.subr.bf16.mxu0 0
  %396 = vmatpush1.bf16.msra.mxu0 %v284
  %397 = vmatprep.subr.bf16.mxu0 0
  %398 = vmatpush1.bf16.msra.mxu0 %v285
  %399 = vmatprep.subr.bf16.mxu0 0
  %400 = vmatpush1.bf16.msra.mxu0 %v286
  %401 = vmatprep.subr.bf16.mxu0 0
  %402 = vmatpush1.bf16.msra.mxu0 %v287
  %403 = vmatprep.subr.bf16.mxu0 0
  %404 = vmatpush1.bf16.msra.mxu0 %v288
  %405 = vmatprep.mubr.bf16.mxu0 %v107
  %406 = vmatmul.mubr.bf16.gmra.mrb[0].mxu0 %v106
  %v407 = vpop.f32.mrb[0].mxu0
  %v408 = vadd.f32 %v368, %v407
  %v409 = vpop.f32.mrb[0].mxu0
  %v410 = vpop.f32.mrb[0].mxu0
  %v411 = vpop.f32.mrb[0].mxu0
  %412 = vdwg.mxu0
  %413 = vmatprep.subr.bf16.mxu0 0
  %414 = vmatpush1.bf16.msra.mxu0 %v289
  %415 = vmatprep.subr.bf16.mxu0 0
  %416 = vmatpush1.bf16.msra.mxu0 %v290
  %417 = vmatprep.subr.bf16.mxu0 0
  %418 = vmatpush1.bf16.msra.mxu0 %v291
  %419 = vmatprep.subr.bf16.mxu0 0
  %420 = vmatpush1.bf16.msra.mxu0 %v292
  %421 = vmatprep.subr.bf16.mxu0 0
  %422 = vmatpush1.bf16.msra.mxu0 0
  %423 = vmatprep.subr.bf16.mxu0 0
  %424 = vmatpush1.bf16.msra.mxu0 0
  %425 = vmatprep.subr.bf16.mxu0 0
  %426 = vmatpush1.bf16.msra.mxu0 0
  %427 = vmatprep.subr.bf16.mxu0 0
  %428 = vmatpush1.bf16.msra.mxu0 0
  %429 = vmatprep.subr.bf16.mxu0 0
  %430 = vmatpush1.bf16.msra.mxu0 0
  %431 = vmatprep.subr.bf16.mxu0 0
  %432 = vmatpush1.bf16.msra.mxu0 0
  %433 = vmatprep.subr.bf16.mxu0 0
  %434 = vmatpush1.bf16.msra.mxu0 0
  %435 = vmatprep.subr.bf16.mxu0 0
  %436 = vmatpush1.bf16.msra.mxu0 0
  %437 = vmatprep.subr.bf16.mxu0 0
  %438 = vmatpush1.bf16.msra.mxu0 0
  %439 = vmatprep.subr.bf16.mxu0 0
  %440 = vmatpush1.bf16.msra.mxu0 0
  %441 = vmatprep.subr.bf16.mxu0 0
  %442 = vmatpush1.bf16.msra.mxu0 0
  %443 = vmatprep.subr.bf16.mxu0 0
  %444 = vmatpush1.bf16.msra.mxu0 0
  %445 = vmatprep.mubr.bf16.mxu0 0
  %446 = vmatmul.mubr.bf16.gmra.mrb[0].mxu0 %v331
  %v447 = vpop.f32.mrb[0].mxu0
  %v448 = vadd.f32 %v408, %v447
  %v449 = vpop.f32.mrb[0].mxu0
  %v450 = vpop.f32.mrb[0].mxu0
  %v451 = vpop.f32.mrb[0].mxu0
  %452 = vdwg.mxu0
  %v453 = vld [vmem:[%s2] sm:$0x1]
  %v455 = vlaneseq
  %v456 = vshrl.u32 %v455, 7
  %v457 = vsub.s32 0, %v456
  %v458 = vrot.slane %v453, %v457
  %v460 = vmul.f32 %v448, %v458
  %v461 = vld [vmem:[%s3] sm:$0x1]
  %v463 = vlaneseq
  %v464 = vshrl.u32 %v463, 7
  %v465 = vsub.s32 0, %v464
  %v466 = vrot.slane %v461, %v465
  %v468 = vadd.f32 %v460, %v466
  %v469 = vld [vmem:[%s4] sm:$0xf]
  %v470 = vunpack.c.l.bf16 %v469
  %v471 = vadd.f32 %v468, %v470
  %v472 = vmax.f32 %v471, 0.0
  %v473 = vpack.c.bf16 %v472, %v472
  %vm474 = vcmask 519168
  %475 = vst.msk [vmem:[%s5] sm:$0xf] %vm474, %v473
  // Predicated region
  $region22: #{resnet_features.37} parent=0 // pred_check
    _
  $region23: #{resnet_features.37} parent=0 // pred_check_branch
    %477 = sbr.rel (0) target = $region25
  $region24: #{resnet_features.37} parent=0 // pred_region
    _
  $region25: #{resnet_features.37} parent=0 // pred_fallthru
    _
  // Predicated region
  $region26: #{resnet_features.37} parent=0 // pred_check
    _
  $region27: #{resnet_features.37} parent=0 // pred_check_branch
    %479 = sbr.rel (0) target = $region29
  $region28: #{resnet_features.37} parent=0 // pred_region
    _
  $region29: #{resnet_features.37} parent=0 // pred_fallthru
    _

// kernel: resnet_features.38
$region0: #{resnet_features.38}
  #allocation0 [shape = 'u32[]', space=smem, size = 0x4, offset = 0x4, fixed_abs, tag = 'smem constant byte address 0x4 - core index']
  #allocation1 [shape = 'u32[144,128]{1,0:T(1,128)}', space=vmem, size = 0x12000, scoped, tag = 'internal scratch']
  %s0 = inlined_call_operand.vmem [shape: bf16[8,576], index: 0, kind: input, shape index: {}]
  %s1 = inlined_call_operand.vmem [shape: bf16[576,64], index: 1, kind: input, shape index: {}]
  %s2 = inlined_call_operand.vmem [shape: f32[1,64], index: 2, kind: input, shape index: {}]
  %s3 = inlined_call_operand.vmem [shape: f32[1,64], index: 3, kind: input, shape index: {}]
  %s4 = inlined_call_operand.vmem [shape: bf16[8,64], index: 4, kind: output, shape index: {}]
  %s5 = sld [smem:[#allocation0]]
  $region26: #{resnet_features.38} parent=0
    _
  %s7 = ssub.s32 1, %s5
  %s8 = scalar_select 0, %s7, %s5
  // Predicated region
  $region2: #{resnet_features.38} parent=0 // pred_check
    _
  $region3: #{resnet_features.38} parent=0 // pred_check_branch
    %10 = sbr.rel (0) target = $region5
  $region4: #{resnet_features.38} parent=0 // pred_region
    _
  $region5: #{resnet_features.38} parent=0 // pred_fallthru
    _
  // Predicated region
  $region6: #{resnet_features.38} parent=0 // pred_check
    _
  $region7: #{resnet_features.38} parent=0 // pred_check_branch
    %12 = sbr.rel (0) target = $region9
  $region8: #{resnet_features.38} parent=0 // pred_region
    _
  $region9: #{resnet_features.38} parent=0 // pred_fallthru
    _
  // Predicated region
  $region10: #{resnet_features.38} parent=0 // pred_check
    _
  $region11: #{resnet_features.38} parent=0 // pred_check_branch
    %14 = sbr.rel (0) target = $region13
  $region12: #{resnet_features.38} parent=0 // pred_region
    _
  $region13: #{resnet_features.38} parent=0 // pred_fallthru
    _
  // Predicated region
  $region14: #{resnet_features.38} parent=0 // pred_check
    _
  $region15: #{resnet_features.38} parent=0 // pred_check_branch
    %16 = sbr.rel (0) target = $region17
  $region16: #{resnet_features.38} parent=0 // pred_region
    _
  $region17: #{resnet_features.38} parent=0 // pred_fallthru
    _
  %v18 = vld [vmem:[%s0] sm:$0xff]
  %v19 = vld [vmem:[%s0 + $0x8] sm:$0xff]
  %v20 = vld [vmem:[%s0 + $0x10] sm:$0xf]
  %v21 = vld [vmem:[%s1] sm:$0xf]
  %v22 = vld [vmem:[%s1 + $0x4] sm:$0xf]
  %v23 = vld [vmem:[%s1 + $0x8] sm:$0xf]
  %v24 = vld [vmem:[%s1 + $0xc] sm:$0xf]
  %v25 = vld [vmem:[%s1 + $0x10] sm:$0xf]
  %v26 = vld [vmem:[%s1 + $0x14] sm:$0xf]
  %v27 = vld [vmem:[%s1 + $0x18] sm:$0xf]
  %v28 = vld [vmem:[%s1 + $0x1c] sm:$0xf]
  %v29 = vld [vmem:[%s1 + $0x20] sm:$0xf]
  %v30 = vld [vmem:[%s1 + $0x24] sm:$0xf]
  %v31 = vld [vmem:[%s1 + $0x28] sm:$0xf]
  %v32 = vld [vmem:[%s1 + $0x2c] sm:$0xf]
  %v33 = vld [vmem:[%s1 + $0x30] sm:$0xf]
  %v34 = vld [vmem:[%s1 + $0x34] sm:$0xf]
  %v35 = vld [vmem:[%s1 + $0x38] sm:$0xf]
  %v36 = vld [vmem:[%s1 + $0x3c] sm:$0xf]
  %v37 = vld [vmem:[%s1 + $0x40] sm:$0xf]
  %v38 = vld [vmem:[%s1 + $0x44] sm:$0xf]
  %v39 = vld [vmem:[%s1 + $0x48] sm:$0xf]
  %v40 = vld [vmem:[%s1 + $0x4c] sm:$0xf]
  %v41 = vld [vmem:[%s1 + $0x50] sm:$0xf]
  %v42 = vld [vmem:[%s1 + $0x54] sm:$0xf]
  %v43 = vld [vmem:[%s1 + $0x58] sm:$0xf]
  %v44 = vld [vmem:[%s1 + $0x5c] sm:$0xf]
  %v45 = vld [vmem:[%s1 + $0x60] sm:$0xf]
  %v46 = vld [vmem:[%s1 + $0x64] sm:$0xf]
  %v47 = vld [vmem:[%s1 + $0x68] sm:$0xf]
  %v48 = vld [vmem:[%s1 + $0x6c] sm:$0xf]
  %v49 = vld [vmem:[%s1 + $0x70] sm:$0xf]
  %v50 = vld [vmem:[%s1 + $0x74] sm:$0xf]
  %v51 = vld [vmem:[%s1 + $0x78] sm:$0xf]
  %v52 = vld [vmem:[%s1 + $0x7c] sm:$0xf]
  %v53 = vld [vmem:[%s1 + $0x80] sm:$0xf]
  %v54 = vld [vmem:[%s1 + $0x84] sm:$0xf]
  %v55 = vld [vmem:[%s1 + $0x88] sm:$0xf]
  %v56 = vld [vmem:[%s1 + $0x8c] sm:$0xf]
  %v57 = vld [vmem:[%s1 + $0x90] sm:$0xf]
  %v58 = vld [vmem:[%s1 + $0x94] sm:$0xf]
  %v59 = vld [vmem:[%s1 + $0x98] sm:$0xf]
  %v60 = vld [vmem:[%s1 + $0x9c] sm:$0xf]
  %v61 = vld [vmem:[%s1 + $0xa0] sm:$0xf]
  %v62 = vld [vmem:[%s1 + $0xa4] sm:$0xf]
  %v63 = vld [vmem:[%s1 + $0xa8] sm:$0xf]
  %v64 = vld [vmem:[%s1 + $0xac] sm:$0xf]
  %v65 = vld [vmem:[%s1 + $0xb0] sm:$0xf]
  %v66 = vld [vmem:[%s1 + $0xb4] sm:$0xf]
  %v67 = vld [vmem:[%s1 + $0xb8] sm:$0xf]
  %v68 = vld [vmem:[%s1 + $0xbc] sm:$0xf]
  %v69 = vld [vmem:[%s1 + $0xc0] sm:$0xf]
  %v70 = vld [vmem:[%s1 + $0xc4] sm:$0xf]
  %v71 = vld [vmem:[%s1 + $0xc8] sm:$0xf]
  %v72 = vld [vmem:[%s1 + $0xcc] sm:$0xf]
  %v73 = vld [vmem:[%s1 + $0xd0] sm:$0xf]
  %v74 = vld [vmem:[%s1 + $0xd4] sm:$0xf]
  %v75 = vld [vmem:[%s1 + $0xd8] sm:$0xf]
  %v76 = vld [vmem:[%s1 + $0xdc] sm:$0xf]
  %v77 = vld [vmem:[%s1 + $0xe0] sm:$0xf]
  %v78 = vld [vmem:[%s1 + $0xe4] sm:$0xf]
  %v79 = vld [vmem:[%s1 + $0xe8] sm:$0xf]
  %v80 = vld [vmem:[%s1 + $0xec] sm:$0xf]
  %v81 = vld [vmem:[%s1 + $0xf0] sm:$0xf]
  %v82 = vld [vmem:[%s1 + $0xf4] sm:$0xf]
  %v83 = vld [vmem:[%s1 + $0xf8] sm:$0xf]
  %v84 = vld [vmem:[%s1 + $0xfc] sm:$0xf]
  %v85 = vld [vmem:[%s1 + $0x100] sm:$0xf]
  %v86 = vld [vmem:[%s1 + $0x104] sm:$0xf]
  %v87 = vld [vmem:[%s1 + $0x108] sm:$0xf]
  %v88 = vld [vmem:[%s1 + $0x10c] sm:$0xf]
  %v89 = vld [vmem:[%s1 + $0x110] sm:$0xf]
  %v90 = vld [vmem:[%s1 + $0x114] sm:$0xf]
  %v91 = vld [vmem:[%s1 + $0x118] sm:$0xf]
  %v92 = vld [vmem:[%s1 + $0x11c] sm:$0xf]
  %v96 = vunpack.c.l.b16 %v18
  %v97 = vunpack.c.h.b16 %v18
  %v98 = vunpack.c.l.b16 %v19
  %v99 = vunpack.c.h.b16 %v19
  %v100 = vunpack.c.l.b16 %v20
  %v101 = vpack.c.b16 %v96, %v96
  %v102 = vpack.c.b16 %v97, %v97
  %v103 = vpack.c.b16 %v98, %v98
  %v104 = vpack.c.b16 %v99, %v99
  %v105 = vpack.c.b16 %v100, %v100
  %v182 = vunpack.c.l.b16 %v21
  %v183 = vunpack.c.l.b16 %v22
  %v184 = vunpack.c.l.b16 %v23
  %v185 = vunpack.c.l.b16 %v24
  %v186 = vunpack.c.l.b16 %v25
  %v187 = vunpack.c.l.b16 %v26
  %v188 = vunpack.c.l.b16 %v27
  %v189 = vunpack.c.l.b16 %v28
  %v190 = vunpack.c.l.b16 %v29
  %v191 = vunpack.c.l.b16 %v30
  %v192 = vunpack.c.l.b16 %v31
  %v193 = vunpack.c.l.b16 %v32
  %v194 = vunpack.c.l.b16 %v33
  %v195 = vunpack.c.l.b16 %v34
  %v196 = vunpack.c.l.b16 %v35
  %v197 = vunpack.c.l.b16 %v36
  %v198 = vunpack.c.l.b16 %v37
  %v199 = vunpack.c.l.b16 %v38
  %v200 = vunpack.c.l.b16 %v39
  %v201 = vunpack.c.l.b16 %v40
  %v202 = vunpack.c.l.b16 %v41
  %v203 = vunpack.c.l.b16 %v42
  %v204 = vunpack.c.l.b16 %v43
  %v205 = vunpack.c.l.b16 %v44
  %v206 = vunpack.c.l.b16 %v45
  %v207 = vunpack.c.l.b16 %v46
  %v208 = vunpack.c.l.b16 %v47
  %v209 = vunpack.c.l.b16 %v48
  %v210 = vunpack.c.l.b16 %v49
  %v211 = vunpack.c.l.b16 %v50
  %v212 = vunpack.c.l.b16 %v51
  %v213 = vunpack.c.l.b16 %v52
  %v214 = vunpack.c.l.b16 %v53
  %v215 = vunpack.c.l.b16 %v54
  %v216 = vunpack.c.l.b16 %v55
  %v217 = vunpack.c.l.b16 %v56
  %v218 = vunpack.c.l.b16 %v57
  %v219 = vunpack.c.l.b16 %v58
  %v220 = vunpack.c.l.b16 %v59
  %v221 = vunpack.c.l.b16 %v60
  %v222 = vunpack.c.l.b16 %v61
  %v223 = vunpack.c.l.b16 %v62
  %v224 = vunpack.c.l.b16 %v63
  %v225 = vunpack.c.l.b16 %v64
  %v226 = vunpack.c.l.b16 %v65
  %v227 = vunpack.c.l.b16 %v66
  %v228 = vunpack.c.l.b16 %v67
  %v229 = vunpack.c.l.b16 %v68
  %v230 = vunpack.c.l.b16 %v69
  %v231 = vunpack.c.l.b16 %v70
  %v232 = vunpack.c.l.b16 %v71
  %v233 = vunpack.c.l.b16 %v72
  %v234 = vunpack.c.l.b16 %v73
  %v235 = vunpack.c.l.b16 %v74
  %v236 = vunpack.c.l.b16 %v75
  %v237 = vunpack.c.l.b16 %v76
  %v238 = vunpack.c.l.b16 %v77
  %v239 = vunpack.c.l.b16 %v78
  %v240 = vunpack.c.l.b16 %v79
  %v241 = vunpack.c.l.b16 %v80
  %v242 = vunpack.c.l.b16 %v81
  %v243 = vunpack.c.l.b16 %v82
  %v244 = vunpack.c.l.b16 %v83
  %v245 = vunpack.c.l.b16 %v84
  %v246 = vunpack.c.l.b16 %v85
  %v247 = vunpack.c.l.b16 %v86
  %v248 = vunpack.c.l.b16 %v87
  %v249 = vunpack.c.l.b16 %v88
  %v250 = vunpack.c.l.b16 %v89
  %v251 = vunpack.c.l.b16 %v90
  %v252 = vunpack.c.l.b16 %v91
  %v253 = vunpack.c.l.b16 %v92
  %v254 = vpack.c.b16 %v183, %v182
  %v255 = vpack.c.b16 %v185, %v184
  %v256 = vpack.c.b16 %v187, %v186
  %v257 = vpack.c.b16 %v189, %v188
  %v258 = vpack.c.b16 %v191, %v190
  %v259 = vpack.c.b16 %v193, %v192
  %v260 = vpack.c.b16 %v195, %v194
  %v261 = vpack.c.b16 %v197, %v196
  %v262 = vpack.c.b16 %v199, %v198
  %v263 = vpack.c.b16 %v201, %v200
  %v264 = vpack.c.b16 %v203, %v202
  %v265 = vpack.c.b16 %v205, %v204
  %v266 = vpack.c.b16 %v207, %v206
  %v267 = vpack.c.b16 %v209, %v208
  %v268 = vpack.c.b16 %v211, %v210
  %v269 = vpack.c.b16 %v213, %v212
  %v270 = vpack.c.b16 %v215, %v214
  %v271 = vpack.c.b16 %v217, %v216
  %v272 = vpack.c.b16 %v219, %v218
  %v273 = vpack.c.b16 %v221, %v220
  %v274 = vpack.c.b16 %v223, %v222
  %v275 = vpack.c.b16 %v225, %v224
  %v276 = vpack.c.b16 %v227, %v226
  %v277 = vpack.c.b16 %v229, %v228
  %v278 = vpack.c.b16 %v231, %v230
  %v279 = vpack.c.b16 %v233, %v232
  %v280 = vpack.c.b16 %v235, %v234
  %v281 = vpack.c.b16 %v237, %v236
  %v282 = vpack.c.b16 %v239, %v238
  %v283 = vpack.c.b16 %v241, %v240
  %v284 = vpack.c.b16 %v243, %v242
  %v285 = vpack.c.b16 %v245, %v244
  %v286 = vpack.c.b16 %v247, %v246
  %v287 = vpack.c.b16 %v249, %v248
  %v288 = vpack.c.b16 %v251, %v250
  %v289 = vpack.c.b16 %v253, %v252
  %vm326 = vcmask 523264
  %v328 = vsel %vm326, %v105, 0
  %330 = vmatprep.subr.bf16.mxu0 0
  %331 = vmatpush1.bf16.msra.mxu0 %v254
  %332 = vmatprep.subr.bf16.mxu0 0
  %333 = vmatpush1.bf16.msra.mxu0 %v255
  %334 = vmatprep.subr.bf16.mxu0 0
  %335 = vmatpush1.bf16.msra.mxu0 %v256
  %336 = vmatprep.subr.bf16.mxu0 0
  %337 = vmatpush1.bf16.msra.mxu0 %v257
  %338 = vmatprep.subr.bf16.mxu0 0
  %339 = vmatpush1.bf16.msra.mxu0 %v258
  %340 = vmatprep.subr.bf16.mxu0 0
  %341 = vmatpush1.bf16.msra.mxu0 %v259
  %342 = vmatprep.subr.bf16.mxu0 0
  %343 = vmatpush1.bf16.msra.mxu0 %v260
  %344 = vmatprep.subr.bf16.mxu0 0
  %345 = vmatpush1.bf16.msra.mxu0 %v261
  %346 = vmatprep.subr.bf16.mxu0 0
  %347 = vmatpush1.bf16.msra.mxu0 %v262
  %348 = vmatprep.subr.bf16.mxu0 0
  %349 = vmatpush1.bf16.msra.mxu0 %v263
  %350 = vmatprep.subr.bf16.mxu0 0
  %351 = vmatpush1.bf16.msra.mxu0 %v264
  %352 = vmatprep.subr.bf16.mxu0 0
  %353 = vmatpush1.bf16.msra.mxu0 %v265
  %354 = vmatprep.subr.bf16.mxu0 0
  %355 = vmatpush1.bf16.msra.mxu0 %v266
  %356 = vmatprep.subr.bf16.mxu0 0
  %357 = vmatpush1.bf16.msra.mxu0 %v267
  %358 = vmatprep.subr.bf16.mxu0 0
  %359 = vmatpush1.bf16.msra.mxu0 %v268
  %360 = vmatprep.subr.bf16.mxu0 0
  %361 = vmatpush1.bf16.msra.mxu0 %v269
  %362 = vmatprep.mubr.bf16.mxu0 %v102
  %363 = vmatmul.mubr.bf16.gmra.mrb[0].mxu0 %v101
  %v364 = vpop.f32.mrb[0].mxu0
  %v365 = vadd.f32 0.0, %v364
  %v366 = vpop.f32.mrb[0].mxu0
  %v367 = vpop.f32.mrb[0].mxu0
  %v368 = vpop.f32.mrb[0].mxu0
  %369 = vdwg.mxu0
  %370 = vmatprep.subr.bf16.mxu0 0
  %371 = vmatpush1.bf16.msra.mxu0 %v270
  %372 = vmatprep.subr.bf16.mxu0 0
  %373 = vmatpush1.bf16.msra.mxu0 %v271
  %374 = vmatprep.subr.bf16.mxu0 0
  %375 = vmatpush1.bf16.msra.mxu0 %v272
  %376 = vmatprep.subr.bf16.mxu0 0
  %377 = vmatpush1.bf16.msra.mxu0 %v273
  %378 = vmatprep.subr.bf16.mxu0 0
  %379 = vmatpush1.bf16.msra.mxu0 %v274
  %380 = vmatprep.subr.bf16.mxu0 0
  %381 = vmatpush1.bf16.msra.mxu0 %v275
  %382 = vmatprep.subr.bf16.mxu0 0
  %383 = vmatpush1.bf16.msra.mxu0 %v276
  %384 = vmatprep.subr.bf16.mxu0 0
  %385 = vmatpush1.bf16.msra.mxu0 %v277
  %386 = vmatprep.subr.bf16.mxu0 0
  %387 = vmatpush1.bf16.msra.mxu0 %v278
  %388 = vmatprep.subr.bf16.mxu0 0
  %389 = vmatpush1.bf16.msra.mxu0 %v279
  %390 = vmatprep.subr.bf16.mxu0 0
  %391 = vmatpush1.bf16.msra.mxu0 %v280
  %392 = vmatprep.subr.bf16.mxu0 0
  %393 = vmatpush1.bf16.msra.mxu0 %v281
  %394 = vmatprep.subr.bf16.mxu0 0
  %395 = vmatpush1.bf16.msra.mxu0 %v282
  %396 = vmatprep.subr.bf16.mxu0 0
  %397 = vmatpush1.bf16.msra.mxu0 %v283
  %398 = vmatprep.subr.bf16.mxu0 0
  %399 = vmatpush1.bf16.msra.mxu0 %v284
  %400 = vmatprep.subr.bf16.mxu0 0
  %401 = vmatpush1.bf16.msra.mxu0 %v285
  %402 = vmatprep.mubr.bf16.mxu0 %v104
  %403 = vmatmul.mubr.bf16.gmra.mrb[0].mxu0 %v103
  %v404 = vpop.f32.mrb[0].mxu0
  %v405 = vadd.f32 %v365, %v404
  %v406 = vpop.f32.mrb[0].mxu0
  %v407 = vpop.f32.mrb[0].mxu0
  %v408 = vpop.f32.mrb[0].mxu0
  %409 = vdwg.mxu0
  %410 = vmatprep.subr.bf16.mxu0 0
  %411 = vmatpush1.bf16.msra.mxu0 %v286
  %412 = vmatprep.subr.bf16.mxu0 0
  %413 = vmatpush1.bf16.msra.mxu0 %v287
  %414 = vmatprep.subr.bf16.mxu0 0
  %415 = vmatpush1.bf16.msra.mxu0 %v288
  %416 = vmatprep.subr.bf16.mxu0 0
  %417 = vmatpush1.bf16.msra.mxu0 %v289
  %418 = vmatprep.subr.bf16.mxu0 0
  %419 = vmatpush1.bf16.msra.mxu0 0
  %420 = vmatprep.subr.bf16.mxu0 0
  %421 = vmatpush1.bf16.msra.mxu0 0
  %422 = vmatprep.subr.bf16.mxu0 0
  %423 = vmatpush1.bf16.msra.mxu0 0
  %424 = vmatprep.subr.bf16.mxu0 0
  %425 = vmatpush1.bf16.msra.mxu0 0
  %426 = vmatprep.subr.bf16.mxu0 0
  %427 = vmatpush1.bf16.msra.mxu0 0
  %428 = vmatprep.subr.bf16.mxu0 0
  %429 = vmatpush1.bf16.msra.mxu0 0
  %430 = vmatprep.subr.bf16.mxu0 0
  %431 = vmatpush1.bf16.msra.mxu0 0
  %432 = vmatprep.subr.bf16.mxu0 0
  %433 = vmatpush1.bf16.msra.mxu0 0
  %434 = vmatprep.subr.bf16.mxu0 0
  %435 = vmatpush1.bf16.msra.mxu0 0
  %436 = vmatprep.subr.bf16.mxu0 0
  %437 = vmatpush1.bf16.msra.mxu0 0
  %438 = vmatprep.subr.bf16.mxu0 0
  %439 = vmatpush1.bf16.msra.mxu0 0
  %440 = vmatprep.subr.bf16.mxu0 0
  %441 = vmatpush1.bf16.msra.mxu0 0
  %442 = vmatprep.mubr.bf16.mxu0 0
  %443 = vmatmul.mubr.bf16.gmra.mrb[0].mxu0 %v328
  %v444 = vpop.f32.mrb[0].mxu0
  %v445 = vadd.f32 %v405, %v444
  %v446 = vpop.f32.mrb[0].mxu0
  %v447 = vpop.f32.mrb[0].mxu0
  %v448 = vpop.f32.mrb[0].mxu0
  %449 = vdwg.mxu0
  %v450 = vld [vmem:[%s2] sm:$0x1]
  %v452 = vlaneseq
  %v453 = vshrl.u32 %v452, 7
  %v454 = vsub.s32 0, %v453
  %v455 = vrot.slane %v450, %v454
  %v457 = vmul.f32 %v445, %v455
  %v458 = vld [vmem:[%s3] sm:$0x1]
  %v460 = vlaneseq
  %v461 = vshrl.u32 %v460, 7
  %v462 = vsub.s32 0, %v461
  %v463 = vrot.slane %v458, %v462
  %v465 = vadd.f32 %v457, %v463
  %v466 = vmax.f32 %v465, 0.0
  %v467 = vpack.c.bf16 %v466, %v466
  %vm468 = vcmask 519168
  %469 = vst.msk [vmem:[%s4] sm:$0xf] %vm468, %v467
  // Predicated region
  $region18: #{resnet_features.38} parent=0 // pred_check
    _
  $region19: #{resnet_features.38} parent=0 // pred_check_branch
    %471 = sbr.rel (0) target = $region21
  $region20: #{resnet_features.38} parent=0 // pred_region
    _
  $region21: #{resnet_features.38} parent=0 // pred_fallthru
    _
  // Predicated region
  $region22: #{resnet_features.38} parent=0 // pred_check
    _
  $region23: #{resnet_features.38} parent=0 // pred_check_branch
    %473 = sbr.rel (0) target = $region25
  $region24: #{resnet_features.38} parent=0 // pred_region
    _
  $region25: #{resnet_features.38} parent=0 // pred_fallthru
    _

</llo_original>
